<compile_context>
chip_gen: v7x
topology: tpu7x:2x2x1
jax: 0.10.0
libtpu: 0.0.40
codegen_flags: <defaults>
</compile_context>

<pallas_src>
import functools

import jax
import jax.numpy as jnp
from jax.experimental import pallas as pl
from jax.experimental.pallas import tpu as pltpu

LANE = 128


def _round_up(x, m):
    return (x + m - 1) // m * m


def _pick_batch_tile(B):
    # Prefer (a) an even grid extent (keeps both v7x TensorCores busy under
    # dimension_semantics=("parallel",)) and (b) as many batch rows per step as
    # possible (amortizes ~0.35us/step overhead, sublane-dense output stores).
    for bt in (8, 4, 2, 1):
        if B % bt == 0 and (B // bt) % 2 == 0:
            return bt
    for bt in (8, 4, 2, 1):
        if B % bt == 0:
            return bt
    return 1


# ----------------------------------------------------------------------------
# Fused kernel: whole TCN forward for one tile of Bt batch elements
# ----------------------------------------------------------------------------
def _tcn_fused_kernel(x_ref, conv_w_ref, proj_w_ref, bias_ref, o_ref, xbuf_ref,
                      *, plan, K, Lb, Bt, pad_front, lin_w_idx, lin_b_idx):
    """
    x_ref      : (Bt*Lb, C_in)      rf-window rows, raw (unpadded) channels
    conv_w_ref : (n_conv, K*Cp, Cp) bf16; row-block j multiplies x[t - j*dil]
    proj_w_ref : (n_proj, Cp, Cp)   bf16; 1x1 downsample weights + final Linear
    bias_ref   : (n_bias, Cp)       f32; one row per bias
    o_ref      : (1, Bt, Cp)        relu(Linear(last timestep)), lane-padded
    xbuf_ref   : (Bt*Lb, Cp) f32    scratch (channel-pad staging / head gather)
    """
    rows = Bt * Lb
    c_in = x_ref.shape[1]

    # --- channel-pad the raw (rows, c_in) window to lane-dense (rows, Cp) ----
    xbuf_ref[...] = jnp.zeros_like(xbuf_ref)
    xbuf_ref[:, 0:c_in] = x_ref[...].astype(xbuf_ref.dtype)
    x = xbuf_ref[...]                                       # (rows, Cp) f32

    # Per-row time index *within its batch element* (narrow (rows,1) iota; no
    # full-width int32 plane — keeps vreg pressure down).
    t = jax.lax.broadcasted_iota(jnp.int32, (rows, 1), 0)
    if Bt > 1:
        t = t % Lb

    def fused_conv(h, w_idx, b_idx, taps):
        # One MXU matmul with a K*Cp-deep contraction instead of K separate
        # (rows,Cp)x(Cp,Cp) dots.  Shifted taps come from pltpu.roll (XLU slot)
        # and are zeroed with the hoisted causal masks; roll wrap-around across
        # batch boundaries is covered by the same masks.
        parts = [h]
        for shift, mask in taps:
            if mask is None:                    # tap reaches past the window
                parts.append(jnp.zeros_like(h))
            else:
                parts.append(jnp.where(mask, pltpu.roll(h, shift=shift, axis=0),
                                       0.0))
        lhs = parts[0] if len(parts) == 1 else jnp.concatenate(parts, axis=1)
        acc = jnp.dot(lhs.astype(jnp.bfloat16), conv_w_ref[w_idx],
                      preferred_element_type=jnp.float32)
        return acc + bias_ref[b_idx][None, :]

    for dil, w1i, b1i, w2i, b2i, dwi, dbi in plan:
        # Hoisted causal masks: both convs of a block share the dilation.
        taps = []
        for k in range(1, K):
            shift = k * dil
            mask = (t >= pad_front + shift) if (pad_front + shift) < Lb else None
            taps.append((shift, mask))

        if dwi >= 0:
            res = (jnp.dot(x.astype(jnp.bfloat16), proj_w_ref[dwi],
                           preferred_element_type=jnp.float32)
                   + bias_ref[dbi][None, :])
        else:
            res = x

        h = jnp.maximum(fused_conv(x, w1i, b1i, taps), 0.0)
        # TODO(synk): nn.Dropout is identity at inference; no RNG masking emitted.
        h = jnp.maximum(fused_conv(h, w2i, b2i, taps), 0.0)
        x = jnp.maximum(h + res, 0.0)

    # --- head: relu(Linear(x[:, :, -1])) -------------------------------------
    # Stage final activations in the scratch and pick each batch element's last
    # row.  Rows near the window start are approximations and must never be
    # consumed here (window >= receptive field guarantees the last row is exact).
    xbuf_ref[...] = x
    if Bt == 1:
        last = xbuf_ref[Lb - 1:Lb, :]                        # (1, Cp)
    else:
        last = xbuf_ref[pl.ds(Lb - 1, Bt, stride=Lb), :]     # (Bt, Cp)
    y = jnp.dot(last.astype(jnp.bfloat16), proj_w_ref[lin_w_idx],
                preferred_element_type=jnp.float32)
    y = jnp.maximum(y + bias_ref[lin_b_idx][None, :], 0.0)
    o_ref[...] = y.reshape(o_ref.shape).astype(o_ref.dtype)


# ----------------------------------------------------------------------------
# Parameter packing: consolidate into 3 arrays, pad channels to 128 lanes once
# ----------------------------------------------------------------------------
def pack_params(params, num_inputs, num_outputs, num_channels, kernel_size):
    K = int(kernel_size)
    Cp = _round_up(max([num_inputs, num_outputs] + list(num_channels)), LANE)

    def conv_mat(w_kio):
        # (K, cin, cout) -> (K*Cp, Cp).  Tap order REVERSED so that row-block j
        # multiplies x[t - j*dil] (PyTorch/XLA conv puts the current sample
        # under tap index K-1).
        w = jnp.pad(w_kio[::-1], ((0, 0), (0, Cp - w_kio.shape[1]),
                                  (0, Cp - w_kio.shape[2])))
        return w.reshape(K * Cp, Cp)

    def pad_vec(b):
        return jnp.pad(b, (0, Cp - b.shape[0]))

    def pad_mat(m):
        return jnp.pad(m, ((0, Cp - m.shape[0]), (0, Cp - m.shape[1])))

    conv_ws, proj_ws, biases, plan = [], [], [], []
    for i, p in enumerate(params["blocks"]):
        w1i = len(conv_ws); conv_ws.append(conv_mat(p["w1"]))
        w2i = len(conv_ws); conv_ws.append(conv_mat(p["w2"]))
        b1i = len(biases); biases.append(pad_vec(p["b1"]))
        b2i = len(biases); biases.append(pad_vec(p["b2"]))
        if p["dw"] is not None:
            dwi = len(proj_ws); proj_ws.append(pad_mat(p["dw"][0]))
            dbi = len(biases); biases.append(pad_vec(p["db"]))
        else:
            dwi, dbi = -1, -1
        plan.append((2 ** i, w1i, b1i, w2i, b2i, dwi, dbi))
    lin_w_idx = len(proj_ws); proj_ws.append(pad_mat(params["lin_w"]))
    lin_b_idx = len(biases); biases.append(pad_vec(params["lin_b"]))

    return dict(
        conv_w=jnp.stack(conv_ws).astype(jnp.bfloat16),   # (n_conv, K*Cp, Cp)
        proj_w=jnp.stack(proj_ws).astype(jnp.bfloat16),   # (n_proj, Cp, Cp)
        bias=jnp.stack(biases).astype(jnp.float32),       # (n_bias, Cp)
        plan=tuple(plan), Cp=Cp, K=K, num_outputs=num_outputs,
        lin_w_idx=lin_w_idx, lin_b_idx=lin_b_idx)


# ----------------------------------------------------------------------------
# Forward wrapper
# ----------------------------------------------------------------------------
def tcn_forward(x_bcl, packed):
    Cp, K, plan = packed["Cp"], packed["K"], packed["plan"]
    conv_w, proj_w, bias = packed["conv_w"], packed["proj_w"], packed["bias"]
    B, C_in, L = x_bcl.shape

    # Only x[:, :, -1] feeds the head -> slice the receptive-field suffix BEFORE
    # any layout change; channels stay unpadded on the wrapper side.
    rf = 1 + sum(2 * (K - 1) * dil for (dil, *_rest) in plan)
    Lb = min(_round_up(L, 8), _round_up(rf, 8))
    if Lb <= L:
        x_win = x_bcl[:, :, L - Lb:]
        pad_front = 0
    else:                                                   # short sequences
        pad_front = Lb - L
        x_win = jnp.pad(x_bcl, ((0, 0), (0, 0), (pad_front, 0)))
    x_win = jnp.transpose(x_win, (0, 2, 1))                 # (B, Lb, C_in)

    Bt = _pick_batch_tile(B)
    G = B // Bt
    rows = Bt * Lb
    x2d = x_win.reshape(B * Lb, C_in)

    kernel = functools.partial(
        _tcn_fused_kernel, plan=plan, K=K, Lb=Lb, Bt=Bt, pad_front=pad_front,
        lin_w_idx=packed["lin_w_idx"], lin_b_idx=packed["lin_b_idx"])

    w_bytes = sum(int(a.size) * a.dtype.itemsize for a in (conv_w, proj_w, bias))
    act_bytes = rows * Cp * 4
    vmem_limit = int(min(64 << 20,
                         max(32 << 20,
                             2 * w_bytes + (K + 8) * act_bytes + (4 << 20))))

    def run(single_buffer_weights):
        # Grid-invariant weights do not need double buffering (key on v7x's
        # 64 MiB VMEM for realistic channel counts).
        wkw = ({"pipeline_mode": pl.Buffered(1)} if single_buffer_weights else {})
        in_specs = [
            pl.BlockSpec((rows, C_in), lambda b: (b, 0)),
            pl.BlockSpec(conv_w.shape, lambda b: (0, 0, 0), **wkw),
            pl.BlockSpec(proj_w.shape, lambda b: (0, 0, 0), **wkw),
            pl.BlockSpec(bias.shape, lambda b: (0, 0), **wkw),
        ]
        return pl.pallas_call(
            kernel,
            out_shape=jax.ShapeDtypeStruct((G, Bt, Cp), jnp.float32),
            grid=(G,),
            in_specs=in_specs,
            out_specs=pl.BlockSpec((1, Bt, Cp), lambda b: (b, 0, 0)),
            scratch_shapes=[pltpu.VMEM((rows, Cp), jnp.float32)],
            compiler_params=pltpu.CompilerParams(
                dimension_semantics=("parallel",),
                vmem_limit_bytes=vmem_limit),
        )(x2d, conv_w, proj_w, bias)

    try:
        out = run(True)
    except Exception:   # pl.Buffered(1)/pipeline_mode unsupported -> default buffering
        out = run(False)

    return out.reshape(B, Cp)[:, :packed["num_outputs"]]


# ----------------------------------------------------------------------------
# Deterministic parameter init (weight_norm reproduced explicitly)
# ----------------------------------------------------------------------------
def init_tcn_params(key, num_inputs, num_outputs, num_channels, kernel_size):
    def wn_weight(kv, kg, cout, cin, K):
        v = jax.random.normal(kv, (cout, cin, K), jnp.float32) * 0.1
        g = jax.random.uniform(kg, (cout,), jnp.float32, 0.5, 1.5)
        norm = jnp.sqrt(jnp.sum(v * v, axis=(1, 2), keepdims=True))
        w = g[:, None, None] * v / norm            # (Cout, Cin, K), dim=0 weight_norm
        return jnp.transpose(w, (2, 1, 0))         # -> (K, Cin, Cout)

    blocks = []
    n_in = num_inputs
    for n_out in num_channels:
        key, k1, k2, k3, k4, k5, k6, k7, k8 = jax.random.split(key, 9)
        w1 = wn_weight(k1, k2, n_out, n_in, kernel_size)
        b1 = jax.random.normal(k3, (n_out,), jnp.float32) * 0.1
        w2 = wn_weight(k4, k5, n_out, n_out, kernel_size)
        b2 = jax.random.normal(k6, (n_out,), jnp.float32) * 0.1
        if n_in != n_out:
            dw = jax.random.normal(k7, (1, n_in, n_out), jnp.float32) * 0.1
            db = jax.random.normal(k8, (n_out,), jnp.float32) * 0.1
        else:
            dw, db = None, None
        blocks.append(dict(w1=w1, b1=b1, w2=w2, b2=b2, dw=dw, db=db))
        n_in = n_out

    key, kl1, kl2 = jax.random.split(key, 3)
    lin_w = jax.random.normal(kl1, (num_channels[-1], num_outputs), jnp.float32) * 0.1
    lin_b = jax.random.normal(kl2, (num_outputs,), jnp.float32) * 0.1
    return dict(blocks=blocks, lin_w=lin_w, lin_b=lin_b)


def quantize_params_bf16(params):
    # Kernel keeps bf16 weight operands; round the shared parameters once so the
    # f32 reference uses identical weight values (only activation rounding and
    # accumulation order differ).
    q = lambda a: None if a is None else a.astype(jnp.bfloat16).astype(jnp.float32)
    blocks = [{k: q(v) for k, v in p.items()} for p in params["blocks"]]
    return dict(blocks=blocks, lin_w=q(params["lin_w"]), lin_b=q(params["lin_b"]))


# ----------------------------------------------------------------------------
# Pure-JAX reference (for correctness check)
# ----------------------------------------------------------------------------
def _ref_conv(x_bcl, w_oik, b, dilation):
    pad = (w_oik.shape[-1] - 1) * dilation
    y = jax.lax.conv_general_dilated(
        x_bcl, w_oik, window_strides=(1,), padding=[(pad, 0)],
        rhs_dilation=(dilation,), dimension_numbers=("NCH", "OIH", "NCH"),
        precision=jax.lax.Precision.HIGHEST)
    return y + b[None, :, None]


def tcn_reference(x_bcl, params):
    x = x_bcl
    for i, p in enumerate(params["blocks"]):
        d = 2 ** i
        if p["dw"] is None:
            res = x
        else:
            res = _ref_conv(x, jnp.transpose(p["dw"], (2, 1, 0)), p["db"], 1)
        out = jnp.maximum(_ref_conv(x, jnp.transpose(p["w1"], (2, 1, 0)), p["b1"], d), 0.0)
        out = jnp.maximum(_ref_conv(out, jnp.transpose(p["w2"], (2, 1, 0)), p["b2"], d), 0.0)
        x = jnp.maximum(out + res, 0.0)
    last = x[:, :, -1]
    y = jnp.dot(last, params["lin_w"], precision=jax.lax.Precision.HIGHEST) + params["lin_b"]
    return jnp.maximum(y, 0.0)


# ----------------------------------------------------------------------------
if __name__ == "__main__":
    key = jax.random.PRNGKey(0)
    kx, kp = jax.random.split(key)

    B, C_in, L = 2, 4, 16
    num_channels = [8, 16]
    num_outputs = 3
    kernel_size = 3

    x = jax.random.normal(kx, (B, C_in, L), jnp.float32)     # NCL, like PyTorch
    params = init_tcn_params(kp, C_in, num_outputs, num_channels, kernel_size)
    params = quantize_params_bf16(params)
    packed = pack_params(params, C_in, num_outputs, num_channels, kernel_size)

    y = jax.block_until_ready(tcn_forward(x, packed))
    y_ref = tcn_reference(x, params)

    assert y.shape == (B, num_outputs), y.shape
    assert jnp.allclose(y, y_ref, rtol=2e-2, atol=2e-2), (y, y_ref)

    print("KERNEL_OK")
</pallas_src>

<mosaic_0001>
module attributes {stable_mosaic.version = 11 : i64} {
  func.func @_tcn_fused_kernel(%arg0: i32, %arg1: memref<16x4xf32, #tpu.memory_space<vmem>>, %arg2: memref<4x384x128xbf16, #tpu.memory_space<vmem>>, %arg3: memref<3x128x128xbf16, #tpu.memory_space<vmem>>, %arg4: memref<7x128xf32, #tpu.memory_space<vmem>>, %arg5: memref<1x1x128xf32, #tpu.memory_space<vmem>>, %arg6: memref<16x128xf32, #tpu.memory_space<vmem>>) attributes {dimension_semantics = [#tpu.dimension_semantics<parallel>], iteration_bounds = array<i64: 2>, scalar_prefetch = 0 : i64, scratch_operands = 1 : i64, tpu.core_type = #tpu.core_type<tc>, window_params = [{transform_indices = @transform_0, window_bounds = array<i64: 16, 4>}, {pipeline_mode = #tpu.pipeline_mode<synchronous>, transform_indices = @transform_1, window_bounds = array<i64: 4, 384, 128>}, {pipeline_mode = #tpu.pipeline_mode<synchronous>, transform_indices = @transform_2, window_bounds = array<i64: 3, 128, 128>}, {pipeline_mode = #tpu.pipeline_mode<synchronous>, transform_indices = @transform_3, window_bounds = array<i64: 7, 128>}, {transform_indices = @transform_4, window_bounds = array<i64: 1, 1, 128>}]} {
    %cst = arith.constant 0.000000e+00 : f32
    %0 = vector.broadcast %cst : f32 to vector<16x128xf32>
    %c0 = arith.constant 0 : index
    %c0_0 = arith.constant 0 : index
    %1 = vector.load %arg6[%c0, %c0_0] : memref<16x128xf32, #tpu.memory_space<vmem>>, vector<16x128xf32>
    tpu.vector_store %arg6[%c0, %c0_0], %0 {strides = array<i32>} : memref<16x128xf32, #tpu.memory_space<vmem>>, vector<16x128xf32>,
    %c0_1 = arith.constant 0 : index
    %c0_2 = arith.constant 0 : index
    %2 = vector.load %arg1[%c0_1, %c0_2] : memref<16x4xf32, #tpu.memory_space<vmem>>, vector<16x4xf32>
    %c0_3 = arith.constant 0 : index
    %c0_4 = arith.constant 0 : index
    %3 = vector.load %arg6[%c0_3, %c0_4] : memref<16x128xf32, #tpu.memory_space<vmem>>, vector<16x4xf32>
    tpu.vector_store %arg6[%c0_3, %c0_4], %2 {strides = array<i32>} : memref<16x128xf32, #tpu.memory_space<vmem>>, vector<16x4xf32>,
    %c0_5 = arith.constant 0 : index
    %c0_6 = arith.constant 0 : index
    %4 = vector.load %arg6[%c0_5, %c0_6] : memref<16x128xf32, #tpu.memory_space<vmem>>, vector<16x128xf32>
    %5 = tpu.iota {dimensions = array<i32: 0>} : vector<16x1xi32>
    %c1_i32 = arith.constant 1 : i32
    %6 = vector.broadcast %c1_i32 : i32 to vector<16x1xi32>
    %7 = arith.cmpi sge, %5, %6 : vector<16x1xi32>
    %c2_i32 = arith.constant 2 : i32
    %8 = vector.broadcast %c2_i32 : i32 to vector<16x1xi32>
    %9 = arith.cmpi sge, %5, %8 : vector<16x1xi32>
    %10 = arith.truncf %4 : vector<16x128xf32> to vector<16x128xbf16>
    %c0_7 = arith.constant 0 : index
    %c0_8 = arith.constant 0 : index
    %c0_9 = arith.constant 0 : index
    %11 = vector.load %arg3[%c0_7, %c0_8, %c0_9] : memref<3x128x128xbf16, #tpu.memory_space<vmem>>, vector<1x128x128xbf16>
    %12 = vector.shape_cast %11 : vector<1x128x128xbf16> to vector<128x128xbf16>
    %cst_10 = arith.constant dense<0.000000e+00> : vector<16x128xf32>
    %13 = tpu.matmul %10, %12, %cst_10 {dimension_numbers = #tpu.dot_dimension_numbers<[1], [0], [0], [1], [0, 0, 1, 1], [], []>} : vector<16x128xbf16>, vector<128x128xbf16>, vector<16x128xf32> -> vector<16x128xf32>
    %c2 = arith.constant 2 : index
    %c0_11 = arith.constant 0 : index
    %14 = vector.load %arg4[%c2, %c0_11] : memref<7x128xf32, #tpu.memory_space<vmem>>, vector<1x128xf32>
    %15 = vector.shape_cast %14 : vector<1x128xf32> to vector<128xf32>
    %16 = vector.shape_cast %15 : vector<128xf32> to vector<1x128xf32>
    %17 = vector.broadcast %16 : vector<1x128xf32> to vector<16x128xf32>
    %18 = arith.addf %13, %17 : vector<16x128xf32>
    %c1_i32_12 = arith.constant 1 : i32
    %19 = tpu.dynamic_rotate %4 by %c1_i32_12 dim 0 : vector<16x128xf32>, i32 -> vector<16x128xf32>
    %cst_13 = arith.constant 0.000000e+00 : f32
    %20 = vector.shape_cast %7 : vector<16x1xi1> to vector<16x1xi1>
    %21 = vector.broadcast %20 : vector<16x1xi1> to vector<16x128xi1>
    %22 = vector.broadcast %cst_13 : f32 to vector<16x128xf32>
    %23 = arith.select %21, %19, %22 : vector<16x128xi1>, vector<16x128xf32>
    %c2_i32_14 = arith.constant 2 : i32
    %24 = tpu.dynamic_rotate %4 by %c2_i32_14 dim 0 : vector<16x128xf32>, i32 -> vector<16x128xf32>
    %cst_15 = arith.constant 0.000000e+00 : f32
    %25 = vector.shape_cast %9 : vector<16x1xi1> to vector<16x1xi1>
    %26 = vector.broadcast %25 : vector<16x1xi1> to vector<16x128xi1>
    %27 = vector.broadcast %cst_15 : f32 to vector<16x128xf32>
    %28 = arith.select %26, %24, %27 : vector<16x128xi1>, vector<16x128xf32>
    %29 = tpu.concatenate %4, %23, %28 in 1 : vector<16x128xf32>, vector<16x128xf32>, vector<16x128xf32> -> vector<16x384xf32>
    %30 = arith.truncf %29 : vector<16x384xf32> to vector<16x384xbf16>
    %c0_16 = arith.constant 0 : index
    %c0_17 = arith.constant 0 : index
    %c0_18 = arith.constant 0 : index
    %31 = vector.load %arg2[%c0_16, %c0_17, %c0_18] : memref<4x384x128xbf16, #tpu.memory_space<vmem>>, vector<1x384x128xbf16>
    %32 = vector.shape_cast %31 : vector<1x384x128xbf16> to vector<384x128xbf16>
    %cst_19 = arith.constant dense<0.000000e+00> : vector<16x128xf32>
    %33 = tpu.matmul %30, %32, %cst_19 {dimension_numbers = #tpu.dot_dimension_numbers<[1], [0], [0], [1], [0, 0, 1, 1], [], []>} : vector<16x384xbf16>, vector<384x128xbf16>, vector<16x128xf32> -> vector<16x128xf32>
    %c0_20 = arith.constant 0 : index
    %c0_21 = arith.constant 0 : index
    %34 = vector.load %arg4[%c0_20, %c0_21] : memref<7x128xf32, #tpu.memory_space<vmem>>, vector<1x128xf32>
    %35 = vector.shape_cast %34 : vector<1x128xf32> to vector<128xf32>
    %36 = vector.shape_cast %35 : vector<128xf32> to vector<1x128xf32>
    %37 = vector.broadcast %36 : vector<1x128xf32> to vector<16x128xf32>
    %38 = arith.addf %33, %37 : vector<16x128xf32>
    %cst_22 = arith.constant 0.000000e+00 : f32
    %39 = vector.broadcast %cst_22 : f32 to vector<16x128xf32>
    %40 = arith.maximumf %38, %39 : vector<16x128xf32>
    %c1_i32_23 = arith.constant 1 : i32
    %41 = tpu.dynamic_rotate %40 by %c1_i32_23 dim 0 : vector<16x128xf32>, i32 -> vector<16x128xf32>
    %cst_24 = arith.constant 0.000000e+00 : f32
    %42 = vector.shape_cast %7 : vector<16x1xi1> to vector<16x1xi1>
    %43 = vector.broadcast %42 : vector<16x1xi1> to vector<16x128xi1>
    %44 = vector.broadcast %cst_24 : f32 to vector<16x128xf32>
    %45 = arith.select %43, %41, %44 : vector<16x128xi1>, vector<16x128xf32>
    %c2_i32_25 = arith.constant 2 : i32
    %46 = tpu.dynamic_rotate %40 by %c2_i32_25 dim 0 : vector<16x128xf32>, i32 -> vector<16x128xf32>
    %cst_26 = arith.constant 0.000000e+00 : f32
    %47 = vector.shape_cast %9 : vector<16x1xi1> to vector<16x1xi1>
    %48 = vector.broadcast %47 : vector<16x1xi1> to vector<16x128xi1>
    %49 = vector.broadcast %cst_26 : f32 to vector<16x128xf32>
    %50 = arith.select %48, %46, %49 : vector<16x128xi1>, vector<16x128xf32>
    %51 = tpu.concatenate %40, %45, %50 in 1 : vector<16x128xf32>, vector<16x128xf32>, vector<16x128xf32> -> vector<16x384xf32>
    %52 = arith.truncf %51 : vector<16x384xf32> to vector<16x384xbf16>
    %c1 = arith.constant 1 : index
    %c0_27 = arith.constant 0 : index
    %c0_28 = arith.constant 0 : index
    %53 = vector.load %arg2[%c1, %c0_27, %c0_28] : memref<4x384x128xbf16, #tpu.memory_space<vmem>>, vector<1x384x128xbf16>
    %54 = vector.shape_cast %53 : vector<1x384x128xbf16> to vector<384x128xbf16>
    %cst_29 = arith.constant dense<0.000000e+00> : vector<16x128xf32>
    %55 = tpu.matmul %52, %54, %cst_29 {dimension_numbers = #tpu.dot_dimension_numbers<[1], [0], [0], [1], [0, 0, 1, 1], [], []>} : vector<16x384xbf16>, vector<384x128xbf16>, vector<16x128xf32> -> vector<16x128xf32>
    %c1_30 = arith.constant 1 : index
    %c0_31 = arith.constant 0 : index
    %56 = vector.load %arg4[%c1_30, %c0_31] : memref<7x128xf32, #tpu.memory_space<vmem>>, vector<1x128xf32>
    %57 = vector.shape_cast %56 : vector<1x128xf32> to vector<128xf32>
    %58 = vector.shape_cast %57 : vector<128xf32> to vector<1x128xf32>
    %59 = vector.broadcast %58 : vector<1x128xf32> to vector<16x128xf32>
    %60 = arith.addf %55, %59 : vector<16x128xf32>
    %cst_32 = arith.constant 0.000000e+00 : f32
    %61 = vector.broadcast %cst_32 : f32 to vector<16x128xf32>
    %62 = arith.maximumf %60, %61 : vector<16x128xf32>
    %63 = arith.addf %62, %18 : vector<16x128xf32>
    %cst_33 = arith.constant 0.000000e+00 : f32
    %64 = vector.broadcast %cst_33 : f32 to vector<16x128xf32>
    %65 = arith.maximumf %63, %64 : vector<16x128xf32>
    %c2_i32_34 = arith.constant 2 : i32
    %66 = vector.broadcast %c2_i32_34 : i32 to vector<16x1xi32>
    %67 = arith.cmpi sge, %5, %66 : vector<16x1xi32>
    %c4_i32 = arith.constant 4 : i32
    %68 = vector.broadcast %c4_i32 : i32 to vector<16x1xi32>
    %69 = arith.cmpi sge, %5, %68 : vector<16x1xi32>
    %70 = arith.truncf %65 : vector<16x128xf32> to vector<16x128xbf16>
    %c1_35 = arith.constant 1 : index
    %c0_36 = arith.constant 0 : index
    %c0_37 = arith.constant 0 : index
    %71 = vector.load %arg3[%c1_35, %c0_36, %c0_37] : memref<3x128x128xbf16, #tpu.memory_space<vmem>>, vector<1x128x128xbf16>
    %72 = vector.shape_cast %71 : vector<1x128x128xbf16> to vector<128x128xbf16>
    %cst_38 = arith.constant dense<0.000000e+00> : vector<16x128xf32>
    %73 = tpu.matmul %70, %72, %cst_38 {dimension_numbers = #tpu.dot_dimension_numbers<[1], [0], [0], [1], [0, 0, 1, 1], [], []>} : vector<16x128xbf16>, vector<128x128xbf16>, vector<16x128xf32> -> vector<16x128xf32>
    %c5 = arith.constant 5 : index
    %c0_39 = arith.constant 0 : index
    %74 = vector.load %arg4[%c5, %c0_39] : memref<7x128xf32, #tpu.memory_space<vmem>>, vector<1x128xf32>
    %75 = vector.shape_cast %74 : vector<1x128xf32> to vector<128xf32>
    %76 = vector.shape_cast %75 : vector<128xf32> to vector<1x128xf32>
    %77 = vector.broadcast %76 : vector<1x128xf32> to vector<16x128xf32>
    %78 = arith.addf %73, %77 : vector<16x128xf32>
    %c2_i32_40 = arith.constant 2 : i32
    %79 = tpu.dynamic_rotate %65 by %c2_i32_40 dim 0 : vector<16x128xf32>, i32 -> vector<16x128xf32>
    %cst_41 = arith.constant 0.000000e+00 : f32
    %80 = vector.shape_cast %67 : vector<16x1xi1> to vector<16x1xi1>
    %81 = vector.broadcast %80 : vector<16x1xi1> to vector<16x128xi1>
    %82 = vector.broadcast %cst_41 : f32 to vector<16x128xf32>
    %83 = arith.select %81, %79, %82 : vector<16x128xi1>, vector<16x128xf32>
    %c4_i32_42 = arith.constant 4 : i32
    %84 = tpu.dynamic_rotate %65 by %c4_i32_42 dim 0 : vector<16x128xf32>, i32 -> vector<16x128xf32>
    %cst_43 = arith.constant 0.000000e+00 : f32
    %85 = vector.shape_cast %69 : vector<16x1xi1> to vector<16x1xi1>
    %86 = vector.broadcast %85 : vector<16x1xi1> to vector<16x128xi1>
    %87 = vector.broadcast %cst_43 : f32 to vector<16x128xf32>
    %88 = arith.select %86, %84, %87 : vector<16x128xi1>, vector<16x128xf32>
    %89 = tpu.concatenate %65, %83, %88 in 1 : vector<16x128xf32>, vector<16x128xf32>, vector<16x128xf32> -> vector<16x384xf32>
    %90 = arith.truncf %89 : vector<16x384xf32> to vector<16x384xbf16>
    %c2_44 = arith.constant 2 : index
    %c0_45 = arith.constant 0 : index
    %c0_46 = arith.constant 0 : index
    %91 = vector.load %arg2[%c2_44, %c0_45, %c0_46] : memref<4x384x128xbf16, #tpu.memory_space<vmem>>, vector<1x384x128xbf16>
    %92 = vector.shape_cast %91 : vector<1x384x128xbf16> to vector<384x128xbf16>
    %cst_47 = arith.constant dense<0.000000e+00> : vector<16x128xf32>
    %93 = tpu.matmul %90, %92, %cst_47 {dimension_numbers = #tpu.dot_dimension_numbers<[1], [0], [0], [1], [0, 0, 1, 1], [], []>} : vector<16x384xbf16>, vector<384x128xbf16>, vector<16x128xf32> -> vector<16x128xf32>
    %c3 = arith.constant 3 : index
    %c0_48 = arith.constant 0 : index
    %94 = vector.load %arg4[%c3, %c0_48] : memref<7x128xf32, #tpu.memory_space<vmem>>, vector<1x128xf32>
    %95 = vector.shape_cast %94 : vector<1x128xf32> to vector<128xf32>
    %96 = vector.shape_cast %95 : vector<128xf32> to vector<1x128xf32>
    %97 = vector.broadcast %96 : vector<1x128xf32> to vector<16x128xf32>
    %98 = arith.addf %93, %97 : vector<16x128xf32>
    %cst_49 = arith.constant 0.000000e+00 : f32
    %99 = vector.broadcast %cst_49 : f32 to vector<16x128xf32>
    %100 = arith.maximumf %98, %99 : vector<16x128xf32>
    %c2_i32_50 = arith.constant 2 : i32
    %101 = tpu.dynamic_rotate %100 by %c2_i32_50 dim 0 : vector<16x128xf32>, i32 -> vector<16x128xf32>
    %cst_51 = arith.constant 0.000000e+00 : f32
    %102 = vector.shape_cast %67 : vector<16x1xi1> to vector<16x1xi1>
    %103 = vector.broadcast %102 : vector<16x1xi1> to vector<16x128xi1>
    %104 = vector.broadcast %cst_51 : f32 to vector<16x128xf32>
    %105 = arith.select %103, %101, %104 : vector<16x128xi1>, vector<16x128xf32>
    %c4_i32_52 = arith.constant 4 : i32
    %106 = tpu.dynamic_rotate %100 by %c4_i32_52 dim 0 : vector<16x128xf32>, i32 -> vector<16x128xf32>
    %cst_53 = arith.constant 0.000000e+00 : f32
    %107 = vector.shape_cast %69 : vector<16x1xi1> to vector<16x1xi1>
    %108 = vector.broadcast %107 : vector<16x1xi1> to vector<16x128xi1>
    %109 = vector.broadcast %cst_53 : f32 to vector<16x128xf32>
    %110 = arith.select %108, %106, %109 : vector<16x128xi1>, vector<16x128xf32>
    %111 = tpu.concatenate %100, %105, %110 in 1 : vector<16x128xf32>, vector<16x128xf32>, vector<16x128xf32> -> vector<16x384xf32>
    %112 = arith.truncf %111 : vector<16x384xf32> to vector<16x384xbf16>
    %c3_54 = arith.constant 3 : index
    %c0_55 = arith.constant 0 : index
    %c0_56 = arith.constant 0 : index
    %113 = vector.load %arg2[%c3_54, %c0_55, %c0_56] : memref<4x384x128xbf16, #tpu.memory_space<vmem>>, vector<1x384x128xbf16>
    %114 = vector.shape_cast %113 : vector<1x384x128xbf16> to vector<384x128xbf16>
    %cst_57 = arith.constant dense<0.000000e+00> : vector<16x128xf32>
    %115 = tpu.matmul %112, %114, %cst_57 {dimension_numbers = #tpu.dot_dimension_numbers<[1], [0], [0], [1], [0, 0, 1, 1], [], []>} : vector<16x384xbf16>, vector<384x128xbf16>, vector<16x128xf32> -> vector<16x128xf32>
    %c4 = arith.constant 4 : index
    %c0_58 = arith.constant 0 : index
    %116 = vector.load %arg4[%c4, %c0_58] : memref<7x128xf32, #tpu.memory_space<vmem>>, vector<1x128xf32>
    %117 = vector.shape_cast %116 : vector<1x128xf32> to vector<128xf32>
    %118 = vector.shape_cast %117 : vector<128xf32> to vector<1x128xf32>
    %119 = vector.broadcast %118 : vector<1x128xf32> to vector<16x128xf32>
    %120 = arith.addf %115, %119 : vector<16x128xf32>
    %cst_59 = arith.constant 0.000000e+00 : f32
    %121 = vector.broadcast %cst_59 : f32 to vector<16x128xf32>
    %122 = arith.maximumf %120, %121 : vector<16x128xf32>
    %123 = arith.addf %122, %78 : vector<16x128xf32>
    %cst_60 = arith.constant 0.000000e+00 : f32
    %124 = vector.broadcast %cst_60 : f32 to vector<16x128xf32>
    %125 = arith.maximumf %123, %124 : vector<16x128xf32>
    %c0_61 = arith.constant 0 : index
    %c0_62 = arith.constant 0 : index
    %126 = vector.load %arg6[%c0_61, %c0_62] : memref<16x128xf32, #tpu.memory_space<vmem>>, vector<16x128xf32>
    tpu.vector_store %arg6[%c0_61, %c0_62], %125 {strides = array<i32>} : memref<16x128xf32, #tpu.memory_space<vmem>>, vector<16x128xf32>,
    %c15 = arith.constant 15 : index
    %c0_63 = arith.constant 0 : index
    %127 = vector.load %arg6[%c15, %c0_63] : memref<16x128xf32, #tpu.memory_space<vmem>>, vector<1x128xf32>
    %128 = arith.truncf %127 : vector<1x128xf32> to vector<1x128xbf16>
    %c2_64 = arith.constant 2 : index
    %c0_65 = arith.constant 0 : index
    %c0_66 = arith.constant 0 : index
    %129 = vector.load %arg3[%c2_64, %c0_65, %c0_66] : memref<3x128x128xbf16, #tpu.memory_space<vmem>>, vector<1x128x128xbf16>
    %130 = vector.shape_cast %129 : vector<1x128x128xbf16> to vector<128x128xbf16>
    %cst_67 = arith.constant dense<0.000000e+00> : vector<1x128xf32>
    %131 = tpu.matmul %128, %130, %cst_67 {dimension_numbers = #tpu.dot_dimension_numbers<[1], [0], [0], [1], [0, 0, 1, 1], [], []>} : vector<1x128xbf16>, vector<128x128xbf16>, vector<1x128xf32> -> vector<1x128xf32>
    %c6 = arith.constant 6 : index
    %c0_68 = arith.constant 0 : index
    %132 = vector.load %arg4[%c6, %c0_68] : memref<7x128xf32, #tpu.memory_space<vmem>>, vector<1x128xf32>
    %133 = vector.shape_cast %132 : vector<1x128xf32> to vector<128xf32>
    %134 = vector.shape_cast %133 : vector<128xf32> to vector<1x128xf32>
    %135 = arith.addf %131, %134 : vector<1x128xf32>
    %cst_69 = arith.constant 0.000000e+00 : f32
    %136 = vector.broadcast %cst_69 : f32 to vector<1x128xf32>
    %137 = arith.maximumf %135, %136 : vector<1x128xf32>
    %138 = vector.shape_cast %137 : vector<1x128xf32> to vector<1x1x128xf32>
    %c0_70 = arith.constant 0 : index
    %c0_71 = arith.constant 0 : index
    %c0_72 = arith.constant 0 : index
    %139 = vector.load %arg5[%c0_70, %c0_71, %c0_72] : memref<1x1x128xf32, #tpu.memory_space<vmem>>, vector<1x1x128xf32>
    tpu.vector_store %arg5[%c0_70, %c0_71, %c0_72], %138 {strides = array<i32>} : memref<1x1x128xf32, #tpu.memory_space<vmem>>, vector<1x1x128xf32>,
    return
  }
  func.func @transform_0(%arg0: i32) -> (i32, i32) {
    %c0_i32 = arith.constant 0 : i32
    %c0_i32_0 = arith.constant 0 : i32
    return %arg0, %c0_i32 : i32, i32
  }
  func.func @transform_1(%arg0: i32) -> (i32, i32, i32) {
    %c0_i32 = arith.constant 0 : i32
    %c0_i32_0 = arith.constant 0 : i32
    %c0_i32_1 = arith.constant 0 : i32
    %c0_i32_2 = arith.constant 0 : i32
    return %c0_i32, %c0_i32_0, %c0_i32_1 : i32, i32, i32
  }
  func.func @transform_2(%arg0: i32) -> (i32, i32, i32) {
    %c0_i32 = arith.constant 0 : i32
    %c0_i32_0 = arith.constant 0 : i32
    %c0_i32_1 = arith.constant 0 : i32
    %c0_i32_2 = arith.constant 0 : i32
    return %c0_i32, %c0_i32_0, %c0_i32_1 : i32, i32, i32
  }
  func.func @transform_3(%arg0: i32) -> (i32, i32) {
    %c0_i32 = arith.constant 0 : i32
    %c0_i32_0 = arith.constant 0 : i32
    %c0_i32_1 = arith.constant 0 : i32
    return %c0_i32, %c0_i32_0 : i32, i32
  }
  func.func @transform_4(%arg0: i32) -> (i32, i32, i32) {
    %c0_i32 = arith.constant 0 : i32
    %c0_i32_0 = arith.constant 0 : i32
    %c0_i32_1 = arith.constant 0 : i32
    return %arg0, %c0_i32, %c0_i32_0 : i32, i32, i32
  }
}

module attributes {stable_mosaic.version = 11 : i64} {
  func.func @_tcn_fused_kernel(%arg0: i32, %arg1: memref<16x4xf32, #tpu.memory_space<vmem>>, %arg2: memref<4x384x128xbf16, #tpu.memory_space<vmem>>, %arg3: memref<3x128x128xbf16, #tpu.memory_space<vmem>>, %arg4: memref<7x128xf32, #tpu.memory_space<vmem>>, %arg5: memref<1x1x128xf32, #tpu.memory_space<vmem>>, %arg6: memref<16x128xf32, #tpu.memory_space<vmem>>) attributes {dimension_semantics = [#tpu.dimension_semantics<parallel>], iteration_bounds = array<i64: 2>, scalar_prefetch = 0 : i64, scratch_operands = 1 : i64, tpu.core_type = #tpu.core_type<tc>, window_params = [{transform_indices = @transform_0, window_bounds = array<i64: 16, 4>}, {pipeline_mode = #tpu.pipeline_mode<synchronous>, transform_indices = @transform_1, window_bounds = array<i64: 4, 384, 128>}, {pipeline_mode = #tpu.pipeline_mode<synchronous>, transform_indices = @transform_2, window_bounds = array<i64: 3, 128, 128>}, {pipeline_mode = #tpu.pipeline_mode<synchronous>, transform_indices = @transform_3, window_bounds = array<i64: 7, 128>}, {transform_indices = @transform_4, window_bounds = array<i64: 1, 1, 128>}]} {
    %cst = arith.constant 0.000000e+00 : f32
    %0 = vector.broadcast %cst : f32 to vector<16x128xf32>
    %c0 = arith.constant 0 : index
    %c0_0 = arith.constant 0 : index
    %1 = vector.load %arg6[%c0, %c0_0] : memref<16x128xf32, #tpu.memory_space<vmem>>, vector<16x128xf32>
    tpu.vector_store %arg6[%c0, %c0_0], %0 {strides = array<i32>} : memref<16x128xf32, #tpu.memory_space<vmem>>, vector<16x128xf32>,
    %c0_1 = arith.constant 0 : index
    %c0_2 = arith.constant 0 : index
    %2 = vector.load %arg1[%c0_1, %c0_2] : memref<16x4xf32, #tpu.memory_space<vmem>>, vector<16x4xf32>
    %c0_3 = arith.constant 0 : index
    %c0_4 = arith.constant 0 : index
    %3 = vector.load %arg6[%c0_3, %c0_4] : memref<16x128xf32, #tpu.memory_space<vmem>>, vector<16x4xf32>
    tpu.vector_store %arg6[%c0_3, %c0_4], %2 {strides = array<i32>} : memref<16x128xf32, #tpu.memory_space<vmem>>, vector<16x4xf32>,
    %c0_5 = arith.constant 0 : index
    %c0_6 = arith.constant 0 : index
    %4 = vector.load %arg6[%c0_5, %c0_6] : memref<16x128xf32, #tpu.memory_space<vmem>>, vector<16x128xf32>
    %5 = tpu.iota {dimensions = array<i32: 0>} : vector<16x1xi32>
    %c1_i32 = arith.constant 1 : i32
    %6 = vector.broadcast %c1_i32 : i32 to vector<16x1xi32>
    %7 = arith.cmpi sge, %5, %6 : vector<16x1xi32>
    %c2_i32 = arith.constant 2 : i32
    %8 = vector.broadcast %c2_i32 : i32 to vector<16x1xi32>
    %9 = arith.cmpi sge, %5, %8 : vector<16x1xi32>
    %10 = arith.truncf %4 : vector<16x128xf32> to vector<16x128xbf16>
    %c0_7 = arith.constant 0 : index
    %c0_8 = arith.constant 0 : index
    %c0_9 = arith.constant 0 : index
    %11 = vector.load %arg3[%c0_7, %c0_8, %c0_9] : memref<3x128x128xbf16, #tpu.memory_space<vmem>>, vector<1x128x128xbf16>
    %12 = vector.shape_cast %11 : vector<1x128x128xbf16> to vector<128x128xbf16>
    %cst_10 = arith.constant dense<0.000000e+00> : vector<16x128xf32>
    %13 = tpu.matmul %10, %12, %cst_10 {dimension_numbers = #tpu.dot_dimension_numbers<[1], [0], [0], [1], [0, 0, 1, 1], [], []>} : vector<16x128xbf16>, vector<128x128xbf16>, vector<16x128xf32> -> vector<16x128xf32>
    %c2 = arith.constant 2 : index
    %c0_11 = arith.constant 0 : index
    %14 = vector.load %arg4[%c2, %c0_11] : memref<7x128xf32, #tpu.memory_space<vmem>>, vector<1x128xf32>
    %15 = vector.shape_cast %14 : vector<1x128xf32> to vector<128xf32>
    %16 = vector.shape_cast %15 : vector<128xf32> to vector<1x128xf32>
    %17 = vector.broadcast %16 : vector<1x128xf32> to vector<16x128xf32>
    %18 = arith.addf %13, %17 : vector<16x128xf32>
    %c1_i32_12 = arith.constant 1 : i32
    %19 = tpu.dynamic_rotate %4 by %c1_i32_12 dim 0 : vector<16x128xf32>, i32 -> vector<16x128xf32>
    %cst_13 = arith.constant 0.000000e+00 : f32
    %20 = vector.shape_cast %7 : vector<16x1xi1> to vector<16x1xi1>
    %21 = vector.broadcast %20 : vector<16x1xi1> to vector<16x128xi1>
    %22 = vector.broadcast %cst_13 : f32 to vector<16x128xf32>
    %23 = arith.select %21, %19, %22 : vector<16x128xi1>, vector<16x128xf32>
    %c2_i32_14 = arith.constant 2 : i32
    %24 = tpu.dynamic_rotate %4 by %c2_i32_14 dim 0 : vector<16x128xf32>, i32 -> vector<16x128xf32>
    %cst_15 = arith.constant 0.000000e+00 : f32
    %25 = vector.shape_cast %9 : vector<16x1xi1> to vector<16x1xi1>
    %26 = vector.broadcast %25 : vector<16x1xi1> to vector<16x128xi1>
    %27 = vector.broadcast %cst_15 : f32 to vector<16x128xf32>
    %28 = arith.select %26, %24, %27 : vector<16x128xi1>, vector<16x128xf32>
    %29 = tpu.concatenate %4, %23, %28 in 1 : vector<16x128xf32>, vector<16x128xf32>, vector<16x128xf32> -> vector<16x384xf32>
    %30 = arith.truncf %29 : vector<16x384xf32> to vector<16x384xbf16>
    %c0_16 = arith.constant 0 : index
    %c0_17 = arith.constant 0 : index
    %c0_18 = arith.constant 0 : index
    %31 = vector.load %arg2[%c0_16, %c0_17, %c0_18] : memref<4x384x128xbf16, #tpu.memory_space<vmem>>, vector<1x384x128xbf16>
    %32 = vector.shape_cast %31 : vector<1x384x128xbf16> to vector<384x128xbf16>
    %cst_19 = arith.constant dense<0.000000e+00> : vector<16x128xf32>
    %33 = tpu.matmul %30, %32, %cst_19 {dimension_numbers = #tpu.dot_dimension_numbers<[1], [0], [0], [1], [0, 0, 1, 1], [], []>} : vector<16x384xbf16>, vector<384x128xbf16>, vector<16x128xf32> -> vector<16x128xf32>
    %c0_20 = arith.constant 0 : index
    %c0_21 = arith.constant 0 : index
    %34 = vector.load %arg4[%c0_20, %c0_21] : memref<7x128xf32, #tpu.memory_space<vmem>>, vector<1x128xf32>
    %35 = vector.shape_cast %34 : vector<1x128xf32> to vector<128xf32>
    %36 = vector.shape_cast %35 : vector<128xf32> to vector<1x128xf32>
    %37 = vector.broadcast %36 : vector<1x128xf32> to vector<16x128xf32>
    %38 = arith.addf %33, %37 : vector<16x128xf32>
    %cst_22 = arith.constant 0.000000e+00 : f32
    %39 = vector.broadcast %cst_22 : f32 to vector<16x128xf32>
    %40 = arith.maximumf %38, %39 : vector<16x128xf32>
    %c1_i32_23 = arith.constant 1 : i32
    %41 = tpu.dynamic_rotate %40 by %c1_i32_23 dim 0 : vector<16x128xf32>, i32 -> vector<16x128xf32>
    %cst_24 = arith.constant 0.000000e+00 : f32
    %42 = vector.shape_cast %7 : vector<16x1xi1> to vector<16x1xi1>
    %43 = vector.broadcast %42 : vector<16x1xi1> to vector<16x128xi1>
    %44 = vector.broadcast %cst_24 : f32 to vector<16x128xf32>
    %45 = arith.select %43, %41, %44 : vector<16x128xi1>, vector<16x128xf32>
    %c2_i32_25 = arith.constant 2 : i32
    %46 = tpu.dynamic_rotate %40 by %c2_i32_25 dim 0 : vector<16x128xf32>, i32 -> vector<16x128xf32>
    %cst_26 = arith.constant 0.000000e+00 : f32
    %47 = vector.shape_cast %9 : vector<16x1xi1> to vector<16x1xi1>
    %48 = vector.broadcast %47 : vector<16x1xi1> to vector<16x128xi1>
    %49 = vector.broadcast %cst_26 : f32 to vector<16x128xf32>
    %50 = arith.select %48, %46, %49 : vector<16x128xi1>, vector<16x128xf32>
    %51 = tpu.concatenate %40, %45, %50 in 1 : vector<16x128xf32>, vector<16x128xf32>, vector<16x128xf32> -> vector<16x384xf32>
    %52 = arith.truncf %51 : vector<16x384xf32> to vector<16x384xbf16>
    %c1 = arith.constant 1 : index
    %c0_27 = arith.constant 0 : index
    %c0_28 = arith.constant 0 : index
    %53 = vector.load %arg2[%c1, %c0_27, %c0_28] : memref<4x384x128xbf16, #tpu.memory_space<vmem>>, vector<1x384x128xbf16>
    %54 = vector.shape_cast %53 : vector<1x384x128xbf16> to vector<384x128xbf16>
    %cst_29 = arith.constant dense<0.000000e+00> : vector<16x128xf32>
    %55 = tpu.matmul %52, %54, %cst_29 {dimension_numbers = #tpu.dot_dimension_numbers<[1], [0], [0], [1], [0, 0, 1, 1], [], []>} : vector<16x384xbf16>, vector<384x128xbf16>, vector<16x128xf32> -> vector<16x128xf32>
    %c1_30 = arith.constant 1 : index
    %c0_31 = arith.constant 0 : index
    %56 = vector.load %arg4[%c1_30, %c0_31] : memref<7x128xf32, #tpu.memory_space<vmem>>, vector<1x128xf32>
    %57 = vector.shape_cast %56 : vector<1x128xf32> to vector<128xf32>
    %58 = vector.shape_cast %57 : vector<128xf32> to vector<1x128xf32>
    %59 = vector.broadcast %58 : vector<1x128xf32> to vector<16x128xf32>
    %60 = arith.addf %55, %59 : vector<16x128xf32>
    %cst_32 = arith.constant 0.000000e+00 : f32
    %61 = vector.broadcast %cst_32 : f32 to vector<16x128xf32>
    %62 = arith.maximumf %60, %61 : vector<16x128xf32>
    %63 = arith.addf %62, %18 : vector<16x128xf32>
    %cst_33 = arith.constant 0.000000e+00 : f32
    %64 = vector.broadcast %cst_33 : f32 to vector<16x128xf32>
    %65 = arith.maximumf %63, %64 : vector<16x128xf32>
    %c2_i32_34 = arith.constant 2 : i32
    %66 = vector.broadcast %c2_i32_34 : i32 to vector<16x1xi32>
    %67 = arith.cmpi sge, %5, %66 : vector<16x1xi32>
    %c4_i32 = arith.constant 4 : i32
    %68 = vector.broadcast %c4_i32 : i32 to vector<16x1xi32>
    %69 = arith.cmpi sge, %5, %68 : vector<16x1xi32>
    %70 = arith.truncf %65 : vector<16x128xf32> to vector<16x128xbf16>
    %c1_35 = arith.constant 1 : index
    %c0_36 = arith.constant 0 : index
    %c0_37 = arith.constant 0 : index
    %71 = vector.load %arg3[%c1_35, %c0_36, %c0_37] : memref<3x128x128xbf16, #tpu.memory_space<vmem>>, vector<1x128x128xbf16>
    %72 = vector.shape_cast %71 : vector<1x128x128xbf16> to vector<128x128xbf16>
    %cst_38 = arith.constant dense<0.000000e+00> : vector<16x128xf32>
    %73 = tpu.matmul %70, %72, %cst_38 {dimension_numbers = #tpu.dot_dimension_numbers<[1], [0], [0], [1], [0, 0, 1, 1], [], []>} : vector<16x128xbf16>, vector<128x128xbf16>, vector<16x128xf32> -> vector<16x128xf32>
    %c5 = arith.constant 5 : index
    %c0_39 = arith.constant 0 : index
    %74 = vector.load %arg4[%c5, %c0_39] : memref<7x128xf32, #tpu.memory_space<vmem>>, vector<1x128xf32>
    %75 = vector.shape_cast %74 : vector<1x128xf32> to vector<128xf32>
    %76 = vector.shape_cast %75 : vector<128xf32> to vector<1x128xf32>
    %77 = vector.broadcast %76 : vector<1x128xf32> to vector<16x128xf32>
    %78 = arith.addf %73, %77 : vector<16x128xf32>
    %c2_i32_40 = arith.constant 2 : i32
    %79 = tpu.dynamic_rotate %65 by %c2_i32_40 dim 0 : vector<16x128xf32>, i32 -> vector<16x128xf32>
    %cst_41 = arith.constant 0.000000e+00 : f32
    %80 = vector.shape_cast %67 : vector<16x1xi1> to vector<16x1xi1>
    %81 = vector.broadcast %80 : vector<16x1xi1> to vector<16x128xi1>
    %82 = vector.broadcast %cst_41 : f32 to vector<16x128xf32>
    %83 = arith.select %81, %79, %82 : vector<16x128xi1>, vector<16x128xf32>
    %c4_i32_42 = arith.constant 4 : i32
    %84 = tpu.dynamic_rotate %65 by %c4_i32_42 dim 0 : vector<16x128xf32>, i32 -> vector<16x128xf32>
    %cst_43 = arith.constant 0.000000e+00 : f32
    %85 = vector.shape_cast %69 : vector<16x1xi1> to vector<16x1xi1>
    %86 = vector.broadcast %85 : vector<16x1xi1> to vector<16x128xi1>
    %87 = vector.broadcast %cst_43 : f32 to vector<16x128xf32>
    %88 = arith.select %86, %84, %87 : vector<16x128xi1>, vector<16x128xf32>
    %89 = tpu.concatenate %65, %83, %88 in 1 : vector<16x128xf32>, vector<16x128xf32>, vector<16x128xf32> -> vector<16x384xf32>
    %90 = arith.truncf %89 : vector<16x384xf32> to vector<16x384xbf16>
    %c2_44 = arith.constant 2 : index
    %c0_45 = arith.constant 0 : index
    %c0_46 = arith.constant 0 : index
    %91 = vector.load %arg2[%c2_44, %c0_45, %c0_46] : memref<4x384x128xbf16, #tpu.memory_space<vmem>>, vector<1x384x128xbf16>
    %92 = vector.shape_cast %91 : vector<1x384x128xbf16> to vector<384x128xbf16>
    %cst_47 = arith.constant dense<0.000000e+00> : vector<16x128xf32>
    %93 = tpu.matmul %90, %92, %cst_47 {dimension_numbers = #tpu.dot_dimension_numbers<[1], [0], [0], [1], [0, 0, 1, 1], [], []>} : vector<16x384xbf16>, vector<384x128xbf16>, vector<16x128xf32> -> vector<16x128xf32>
    %c3 = arith.constant 3 : index
    %c0_48 = arith.constant 0 : index
    %94 = vector.load %arg4[%c3, %c0_48] : memref<7x128xf32, #tpu.memory_space<vmem>>, vector<1x128xf32>
    %95 = vector.shape_cast %94 : vector<1x128xf32> to vector<128xf32>
    %96 = vector.shape_cast %95 : vector<128xf32> to vector<1x128xf32>
    %97 = vector.broadcast %96 : vector<1x128xf32> to vector<16x128xf32>
    %98 = arith.addf %93, %97 : vector<16x128xf32>
    %cst_49 = arith.constant 0.000000e+00 : f32
    %99 = vector.broadcast %cst_49 : f32 to vector<16x128xf32>
    %100 = arith.maximumf %98, %99 : vector<16x128xf32>
    %c2_i32_50 = arith.constant 2 : i32
    %101 = tpu.dynamic_rotate %100 by %c2_i32_50 dim 0 : vector<16x128xf32>, i32 -> vector<16x128xf32>
    %cst_51 = arith.constant 0.000000e+00 : f32
    %102 = vector.shape_cast %67 : vector<16x1xi1> to vector<16x1xi1>
    %103 = vector.broadcast %102 : vector<16x1xi1> to vector<16x128xi1>
    %104 = vector.broadcast %cst_51 : f32 to vector<16x128xf32>
    %105 = arith.select %103, %101, %104 : vector<16x128xi1>, vector<16x128xf32>
    %c4_i32_52 = arith.constant 4 : i32
    %106 = tpu.dynamic_rotate %100 by %c4_i32_52 dim 0 : vector<16x128xf32>, i32 -> vector<16x128xf32>
    %cst_53 = arith.constant 0.000000e+00 : f32
    %107 = vector.shape_cast %69 : vector<16x1xi1> to vector<16x1xi1>
    %108 = vector.broadcast %107 : vector<16x1xi1> to vector<16x128xi1>
    %109 = vector.broadcast %cst_53 : f32 to vector<16x128xf32>
    %110 = arith.select %108, %106, %109 : vector<16x128xi1>, vector<16x128xf32>
    %111 = tpu.concatenate %100, %105, %110 in 1 : vector<16x128xf32>, vector<16x128xf32>, vector<16x128xf32> -> vector<16x384xf32>
    %112 = arith.truncf %111 : vector<16x384xf32> to vector<16x384xbf16>
    %c3_54 = arith.constant 3 : index
    %c0_55 = arith.constant 0 : index
    %c0_56 = arith.constant 0 : index
    %113 = vector.load %arg2[%c3_54, %c0_55, %c0_56] : memref<4x384x128xbf16, #tpu.memory_space<vmem>>, vector<1x384x128xbf16>
    %114 = vector.shape_cast %113 : vector<1x384x128xbf16> to vector<384x128xbf16>
    %cst_57 = arith.constant dense<0.000000e+00> : vector<16x128xf32>
    %115 = tpu.matmul %112, %114, %cst_57 {dimension_numbers = #tpu.dot_dimension_numbers<[1], [0], [0], [1], [0, 0, 1, 1], [], []>} : vector<16x384xbf16>, vector<384x128xbf16>, vector<16x128xf32> -> vector<16x128xf32>
    %c4 = arith.constant 4 : index
    %c0_58 = arith.constant 0 : index
    %116 = vector.load %arg4[%c4, %c0_58] : memref<7x128xf32, #tpu.memory_space<vmem>>, vector<1x128xf32>
    %117 = vector.shape_cast %116 : vector<1x128xf32> to vector<128xf32>
    %118 = vector.shape_cast %117 : vector<128xf32> to vector<1x128xf32>
    %119 = vector.broadcast %118 : vector<1x128xf32> to vector<16x128xf32>
    %120 = arith.addf %115, %119 : vector<16x128xf32>
    %cst_59 = arith.constant 0.000000e+00 : f32
    %121 = vector.broadcast %cst_59 : f32 to vector<16x128xf32>
    %122 = arith.maximumf %120, %121 : vector<16x128xf32>
    %123 = arith.addf %122, %78 : vector<16x128xf32>
    %cst_60 = arith.constant 0.000000e+00 : f32
    %124 = vector.broadcast %cst_60 : f32 to vector<16x128xf32>
    %125 = arith.maximumf %123, %124 : vector<16x128xf32>
    %c0_61 = arith.constant 0 : index
    %c0_62 = arith.constant 0 : index
    %126 = vector.load %arg6[%c0_61, %c0_62] : memref<16x128xf32, #tpu.memory_space<vmem>>, vector<16x128xf32>
    tpu.vector_store %arg6[%c0_61, %c0_62], %125 {strides = array<i32>} : memref<16x128xf32, #tpu.memory_space<vmem>>, vector<16x128xf32>,
    %c15 = arith.constant 15 : index
    %c0_63 = arith.constant 0 : index
    %127 = vector.load %arg6[%c15, %c0_63] : memref<16x128xf32, #tpu.memory_space<vmem>>, vector<1x128xf32>
    %128 = arith.truncf %127 : vector<1x128xf32> to vector<1x128xbf16>
    %c2_64 = arith.constant 2 : index
    %c0_65 = arith.constant 0 : index
    %c0_66 = arith.constant 0 : index
    %129 = vector.load %arg3[%c2_64, %c0_65, %c0_66] : memref<3x128x128xbf16, #tpu.memory_space<vmem>>, vector<1x128x128xbf16>
    %130 = vector.shape_cast %129 : vector<1x128x128xbf16> to vector<128x128xbf16>
    %cst_67 = arith.constant dense<0.000000e+00> : vector<1x128xf32>
    %131 = tpu.matmul %128, %130, %cst_67 {dimension_numbers = #tpu.dot_dimension_numbers<[1], [0], [0], [1], [0, 0, 1, 1], [], []>} : vector<1x128xbf16>, vector<128x128xbf16>, vector<1x128xf32> -> vector<1x128xf32>
    %c6 = arith.constant 6 : index
    %c0_68 = arith.constant 0 : index
    %132 = vector.load %arg4[%c6, %c0_68] : memref<7x128xf32, #tpu.memory_space<vmem>>, vector<1x128xf32>
    %133 = vector.shape_cast %132 : vector<1x128xf32> to vector<128xf32>
    %134 = vector.shape_cast %133 : vector<128xf32> to vector<1x128xf32>
    %135 = arith.addf %131, %134 : vector<1x128xf32>
    %cst_69 = arith.constant 0.000000e+00 : f32
    %136 = vector.broadcast %cst_69 : f32 to vector<1x128xf32>
    %137 = arith.maximumf %135, %136 : vector<1x128xf32>
    %138 = vector.shape_cast %137 : vector<1x128xf32> to vector<1x1x128xf32>
    %c0_70 = arith.constant 0 : index
    %c0_71 = arith.constant 0 : index
    %c0_72 = arith.constant 0 : index
    %139 = vector.load %arg5[%c0_70, %c0_71, %c0_72] : memref<1x1x128xf32, #tpu.memory_space<vmem>>, vector<1x1x128xf32>
    tpu.vector_store %arg5[%c0_70, %c0_71, %c0_72], %138 {strides = array<i32>} : memref<1x1x128xf32, #tpu.memory_space<vmem>>, vector<1x1x128xf32>,
    return
  }
  func.func @transform_0(%arg0: i32) -> (i32, i32) {
    %c0_i32 = arith.constant 0 : i32
    %c0_i32_0 = arith.constant 0 : i32
    return %arg0, %c0_i32 : i32, i32
  }
  func.func @transform_1(%arg0: i32) -> (i32, i32, i32) {
    %c0_i32 = arith.constant 0 : i32
    %c0_i32_0 = arith.constant 0 : i32
    %c0_i32_1 = arith.constant 0 : i32
    %c0_i32_2 = arith.constant 0 : i32
    return %c0_i32, %c0_i32_0, %c0_i32_1 : i32, i32, i32
  }
  func.func @transform_2(%arg0: i32) -> (i32, i32, i32) {
    %c0_i32 = arith.constant 0 : i32
    %c0_i32_0 = arith.constant 0 : i32
    %c0_i32_1 = arith.constant 0 : i32
    %c0_i32_2 = arith.constant 0 : i32
    return %c0_i32, %c0_i32_0, %c0_i32_1 : i32, i32, i32
  }
  func.func @transform_3(%arg0: i32) -> (i32, i32) {
    %c0_i32 = arith.constant 0 : i32
    %c0_i32_0 = arith.constant 0 : i32
    %c0_i32_1 = arith.constant 0 : i32
    return %c0_i32, %c0_i32_0 : i32, i32
  }
  func.func @transform_4(%arg0: i32) -> (i32, i32, i32) {
    %c0_i32 = arith.constant 0 : i32
    %c0_i32_0 = arith.constant 0 : i32
    %c0_i32_1 = arith.constant 0 : i32
    return %arg0, %c0_i32, %c0_i32_0 : i32, i32, i32
  }
}

</mosaic_0001>

<llo_original>
// kernel: tpu_custom_call.1
$region0: #{tpu_custom_call.1}
  #allocation0 [shape = 'u32[]', space=smem, size = 0x4, offset = 0x4, fixed_abs, tag = 'smem constant byte address 0x4 - core index']
  #allocation1 [shape = 'u32[144,128]{1,0:T(1,128)}', space=vmem, size = 0x12000, scoped, tag = 'internal scratch']
  #allocation2 [shape = 'f32[16,128]{1,0:T(8,128)}', space=vmem, size = 0x2000, scoped, tag = 'scratch operand']
  %s0 = inlined_call_operand.vmem [shape: f32[32,4], index: 0, kind: input, shape index: {}]
  %s1 = inlined_call_operand.hbm [shape: bf16[4,384,128], index: 1, kind: input, shape index: {}]
  %s2 = inlined_call_operand.hbm [shape: bf16[3,128,128], index: 2, kind: input, shape index: {}]
  %s3 = inlined_call_operand.vmem [shape: f32[7,128], index: 3, kind: input, shape index: {}]
  %s4 = inlined_call_operand.hbm [shape: f32[2,1,128], index: 4, kind: output, shape index: {}]
  %s5 = sld [smem:[#allocation0]]
  $region57: #{tpu_custom_call.1} parent=0
    _
  %s7 = ssub.s32 1, %s5
  %s8 = scalar_select 0, %s7, %s5
  $region1: #{tpu_custom_call.1} parent=0
    #allocation3 [shape = 'u8[393216]{0}', space=vmem, size = 0x60000, scoped, tag = 'input window, operand 1, single buffered']
    #allocation4 [shape = 's32[2]{0}', space=sflag, size = 0x8, scoped, tag = 'scoped memory for tpu_custom_call.1']
    #allocation5 [shape = 's32[2]{0}', space=sflag, size = 0x8, scoped, tag = 'scoped memory for tpu_custom_call.1']
    #allocation6 [shape = 'u8[98304]{0}', space=vmem, size = 0x18000, scoped, tag = 'input window, operand 2, single buffered']
    #allocation7 [shape = 's32[1]{0}', space=sflag, size = 0x4, scoped, tag = 'scoped memory for tpu_custom_call.1']
    #allocation8 [shape = 'u8[1024]{0}', space=vmem, size = 0x400, scoped, tag = 'output window, operand 0']
    %9 = vsyncpa [#allocation4], 0
    %10 = vsyncpa [#allocation7], 0
    %11 = vsyncpa [#allocation5], 0
    %s12 = scalar_lea.sflag [#allocation5], 1
    %13 = vsyncpa %s12, 0
    loop: start=0, step=1, limit=4
    $region2: #{tpu_custom_call.1} parent=1 // loop_pre_header
      _
    $region3: #{tpu_custom_call.1} parent=1 // loop_header
      %s15 = sphi 0, %s19
      %p16 = scmp.ge.s32.totalorder %s15, 4
      %s25 = sphi 0, %s27
      %s28 = sphi 0, %s25
      %s29 = sphi 0, %s28
      %s45 = sphi 0, %s29
      %s49 = sphi 0, %s49
      %s51 = sphi 0, %s49
      %s52 = sphi 0, %s51
      %s66 = sphi 0, %s52
      %s70 = sphi 0, %s70
      %s72 = sphi 0, %s70
      %s73 = sphi 0, %s72
      %s87 = sphi 0, %s73
      %s91 = sphi 0, %s91
      %s93 = sphi 0, %s91
      %s94 = sphi 0, %s93
      %s108 = sphi 0, %s94
      %s114 = sphi 0, %s116
      %s117 = sphi 0, %s114
      %s118 = sphi 0, %s117
      %s134 = sphi 0, %s118
    $region4: #{tpu_custom_call.1} parent=1 // loop_header_branch
      %18 = sbr.rel (%p16) target = $region8
    $region5: #{tpu_custom_call.1} parent=1 // loop_body
      %s20 = ssub.s32 %s15, 1
      %s21 = ssub.s32 %s15, 2
      %s22 = sadd.s32 %s15, 1
      %s23 = ssub.s32 %s15, %s22
      %p24 = scmp.eq.s32.totalorder %s23, 0
      %s26 = sadd.s32 %s25, 1
      %s27 = scalar_select %p24, %s25, %s26
      %p30 = pneg %p24
      %p31 = scmp.eq.s32.totalorder %s15, 1
      %p32 = por %p30, %p31
      %p33 = scmp.ne.s32.totalorder %s25, %s28
      %p34 = scmp.eq.s32.totalorder %s15, 0
      %p35 = por %p33, %p34
      %p36 = scmp.ne.s32.totalorder %s25, %s28
      %p37 = scmp.eq.s32.totalorder %s20, 1
      %p38 = por %p36, %p37
      %p39 = scmp.ne.s32.totalorder %s28, %s29
      %p40 = scmp.eq.s32.totalorder %s20, 0
      %p41 = por %p39, %p40
      %p42 = scmp.ne.s32.totalorder %s28, %s29
      %p43 = scmp.eq.s32.totalorder %s21, 1
      %p44 = por %p42, %p43
      %p46 = scmp.ne.s32.totalorder %s29, %s45
      %p47 = scmp.eq.s32.totalorder %s21, 0
      %p48 = por %p46, %p47
      %s50 = sadd.s32 %s49, 1
      %p53 = scmp.eq.s32.totalorder %s15, 1
      %p54 = scmp.ne.s32.totalorder %s49, %s51
      %p55 = scmp.eq.s32.totalorder %s15, 0
      %p56 = por %p54, %p55
      %p57 = scmp.ne.s32.totalorder %s49, %s51
      %p58 = scmp.eq.s32.totalorder %s20, 1
      %p59 = por %p57, %p58
      %p60 = scmp.ne.s32.totalorder %s51, %s52
      %p61 = scmp.eq.s32.totalorder %s20, 0
      %p62 = por %p60, %p61
      %p63 = scmp.ne.s32.totalorder %s51, %s52
      %p64 = scmp.eq.s32.totalorder %s21, 1
      %p65 = por %p63, %p64
      %p67 = scmp.ne.s32.totalorder %s52, %s66
      %p68 = scmp.eq.s32.totalorder %s21, 0
      %p69 = por %p67, %p68
      %s71 = sadd.s32 %s70, 1
      %p74 = scmp.eq.s32.totalorder %s15, 1
      %p75 = scmp.ne.s32.totalorder %s70, %s72
      %p76 = scmp.eq.s32.totalorder %s15, 0
      %p77 = por %p75, %p76
      %p78 = scmp.ne.s32.totalorder %s70, %s72
      %p79 = scmp.eq.s32.totalorder %s20, 1
      %p80 = por %p78, %p79
      %p81 = scmp.ne.s32.totalorder %s72, %s73
      %p82 = scmp.eq.s32.totalorder %s20, 0
      %p83 = por %p81, %p82
      %p84 = scmp.ne.s32.totalorder %s72, %s73
      %p85 = scmp.eq.s32.totalorder %s21, 1
      %p86 = por %p84, %p85
      %p88 = scmp.ne.s32.totalorder %s73, %s87
      %p89 = scmp.eq.s32.totalorder %s21, 0
      %p90 = por %p88, %p89
      %s92 = sadd.s32 %s91, 1
      %p95 = scmp.eq.s32.totalorder %s15, 1
      %p96 = scmp.ne.s32.totalorder %s91, %s93
      %p97 = scmp.eq.s32.totalorder %s15, 0
      %p98 = por %p96, %p97
      %p99 = scmp.ne.s32.totalorder %s91, %s93
      %p100 = scmp.eq.s32.totalorder %s20, 1
      %p101 = por %p99, %p100
      %p102 = scmp.ne.s32.totalorder %s93, %s94
      %p103 = scmp.eq.s32.totalorder %s20, 0
      %p104 = por %p102, %p103
      %p105 = scmp.ne.s32.totalorder %s93, %s94
      %p106 = scmp.eq.s32.totalorder %s21, 1
      %p107 = por %p105, %p106
      %p109 = scmp.ne.s32.totalorder %s94, %s108
      %p110 = scmp.eq.s32.totalorder %s21, 0
      %p111 = por %p109, %p110
      %s112 = ssub.s32 %s15, %s22
      %p113 = scmp.eq.s32.totalorder %s112, 0
      %s115 = sadd.s32 %s114, 1
      %s116 = scalar_select %p113, %s114, %s115
      %p119 = pneg %p113
      %p120 = scmp.eq.s32.totalorder %s15, 1
      %p121 = por %p119, %p120
      %p122 = scmp.ne.s32.totalorder %s114, %s117
      %p123 = scmp.eq.s32.totalorder %s15, 0
      %p124 = por %p122, %p123
      %p125 = scmp.ne.s32.totalorder %s114, %s117
      %p126 = scmp.eq.s32.totalorder %s20, 1
      %p127 = por %p125, %p126
      %p128 = scmp.ne.s32.totalorder %s117, %s118
      %p129 = scmp.eq.s32.totalorder %s20, 0
      %p130 = por %p128, %p129
      %p131 = scmp.ne.s32.totalorder %s117, %s118
      %p132 = scmp.eq.s32.totalorder %s21, 1
      %p133 = por %p131, %p132
      %p135 = scmp.ne.s32.totalorder %s118, %s134
      %p136 = scmp.eq.s32.totalorder %s21, 0
      %p137 = por %p135, %p136
      %p138 = scmp.le.s32.totalorder 1, %s15
      %p139 = scmp.lt.s32.totalorder %s15, 3
      %p140 = pnand %p138, %p139
      %p141 = pneg %p140
      // Predicated region
      $region9: #{tpu_custom_call.1} parent=5 // pred_check
        _
      $region10: #{tpu_custom_call.1} parent=5 // pred_check_branch
        %143 = sbr.rel (%p140) target = $region12
      $region11: #{tpu_custom_call.1} parent=5 // pred_region
        %s144 = ssub.s32 %s15, 1
        // Predicated region
        $region13: #{tpu_custom_call.1} parent=11 // pred_check
          %p145 = pneg %p62
        $region14: #{tpu_custom_call.1} parent=11 // pred_check_branch
          %147 = sbr.rel (%p145) target = $region16
        $region15: #{tpu_custom_call.1} parent=11 // pred_region
          %s149 = ssub.s32 12288, 12288
          %150 = vsyncadd [#allocation4], %s149
          %s151 = sshll.u32 [#allocation3], 4
          %s152 = int_to_ptr.vmem [resolvable:$true] %s151
          %157 = dma.hbm_to_vmem [thread:$0]  %s1, 12288, %s152, [#allocation4], 64, 64, 4
        $region16: #{tpu_custom_call.1} parent=11 // pred_fallthru
          _
        // Predicated region
        $region17: #{tpu_custom_call.1} parent=11 // pred_check
          %p158 = pneg %p83
        $region18: #{tpu_custom_call.1} parent=11 // pred_check_branch
          %160 = sbr.rel (%p158) target = $region20
        $region19: #{tpu_custom_call.1} parent=11 // pred_region
          %s162 = ssub.s32 3072, 3072
          %163 = vsyncadd [#allocation7], %s162
          %s164 = sshll.u32 [#allocation6], 4
          %s165 = int_to_ptr.vmem [resolvable:$true] %s164
          %170 = dma.hbm_to_vmem [thread:$0]  %s2, 3072, %s165, [#allocation7], 64, 64, 4
        $region20: #{tpu_custom_call.1} parent=11 // pred_fallthru
          _
        // Predicated region
        $region21: #{tpu_custom_call.1} parent=11 // pred_check
          %p171 = pneg %p104
        $region22: #{tpu_custom_call.1} parent=11 // pred_check_branch
          %173 = sbr.rel (%p171) target = $region24
        $region23: #{tpu_custom_call.1} parent=11 // pred_region
          _
        $region24: #{tpu_custom_call.1} parent=11 // pred_fallthru
          _
      $region12: #{tpu_custom_call.1} parent=5 // pred_fallthru
        _
      %p174 = scmp.lt.s32.totalorder %s15, 2
      // Predicated region
      $region25: #{tpu_custom_call.1} parent=5 // pred_check
        %p175 = pneg %p174
      $region26: #{tpu_custom_call.1} parent=5 // pred_check_branch
        %177 = sbr.rel (%p175) target = $region28
      $region27: #{tpu_custom_call.1} parent=5 // pred_region
        // Predicated region
        $region29: #{tpu_custom_call.1} parent=27 // pred_check
          %p178 = pneg %p35
        $region30: #{tpu_custom_call.1} parent=27 // pred_check_branch
          %180 = sbr.rel (%p178) target = $region32
        $region31: #{tpu_custom_call.1} parent=27 // pred_region
          %s181 = smul.u32 2, %s15
          %p182 = scmp.lt.s32.totalorder %s181, 3
          %s183 = scalar_select %p182, %s181, 3
          %s184 = smul.addr %s183, 8
          %s185 = scalar_lea.vmem %s0, %s184
          %s186 = smul.u32 2, %s15
        $region32: #{tpu_custom_call.1} parent=27 // pred_fallthru
          _
      $region28: #{tpu_custom_call.1} parent=5 // pred_fallthru
        _
      %p187 = scmp.le.s32.totalorder 1, %s15
      %p188 = scmp.lt.s32.totalorder %s15, 3
      %p189 = pnand %p187, %p188
      %p190 = pneg %p189
      // Predicated region
      $region33: #{tpu_custom_call.1} parent=5 // pred_check
        _
      $region34: #{tpu_custom_call.1} parent=5 // pred_check_branch
        %192 = sbr.rel (%p189) target = $region36
      $region35: #{tpu_custom_call.1} parent=5 // pred_region
        %s193 = ssub.s32 %s15, 1
        // Predicated region
        $region37: #{tpu_custom_call.1} parent=35 // pred_check
          %p194 = pneg %p62
        $region38: #{tpu_custom_call.1} parent=35 // pred_check_branch
          %196 = sbr.rel (%p194) target = $region40
        $region39: #{tpu_custom_call.1} parent=35 // pred_region
          %197 = dma.done [#allocation4], 12288
        $region40: #{tpu_custom_call.1} parent=35 // pred_fallthru
          _
        // Predicated region
        $region41: #{tpu_custom_call.1} parent=35 // pred_check
          %p198 = pneg %p83
        $region42: #{tpu_custom_call.1} parent=35 // pred_check_branch
          %200 = sbr.rel (%p198) target = $region44
        $region43: #{tpu_custom_call.1} parent=35 // pred_region
          %201 = dma.done [#allocation7], 3072
        $region44: #{tpu_custom_call.1} parent=35 // pred_fallthru
          _
        %s202 = smul.u32 2, %s20
        %p203 = scmp.lt.s32.totalorder %s202, 3
        %s204 = scalar_select %p203, %s202, 3
        %s205 = smul.addr %s204, 8
        %s206 = scalar_lea.vmem %s0, %s205
        %p207 = pneg %p41
        %p208 = pneg %p38
        %p209 = pneg %p62
        %p210 = pneg %p59
        %p211 = pneg %p83
        %p212 = pneg %p80
        %p213 = pneg %p104
        %p214 = pneg %p101
        %p215 = pneg %p130
        %p216 = pneg %p127
        %s217 = sand.u32 %s117, 1
        %s218 = scalar_lea.sflag [#allocation5], %s217
        %s219 = sand.u32 %s117, 1
        %s220 = scalar_lea.vmem [#allocation8], %s219
        %s221 = smul.u32 2, %s20
        %p222 = scmp.lt.s32.totalorder %s221, 3
        %s223 = scalar_select %p222, %s221, 3
        %s224 = smul.addr %s223, 8
        %s225 = scalar_lea.vmem %s0, %s224
        %s226 = smul.u32 2, %s20
        %228 = vst [vmem:[#allocation2] sm:$0xff] 0.0
        %229 = vst [vmem:[#allocation2 + $0x8] sm:$0xff] 0.0
        %v230 = vld [vmem:[%s225] sm:$0xff]
        %v231 = vld [vmem:[%s225 + $0x8] sm:$0xff]
        %vm232 = vcmask 31744
        %233 = vst.msk [vmem:[#allocation2] sm:$0xff] %vm232, %v230
        %234 = vst.msk [vmem:[#allocation2 + $0x8] sm:$0xff] %vm232, %v231
        %v235 = vld [vmem:[#allocation2] sm:$0xff]
        %v236 = vld [vmem:[#allocation2 + $0x8] sm:$0xff]
        %v237 = vlaneseq
        %v238 = vshrl.u32 %v237, 7
        %v239 = vadd.s32 %v238, 8
        %vm240 = vcmp.ge.s32.totalorder %v238, 1
        %vm241 = vcmp.ge.s32.totalorder %v239, 1
        %vm242 = vcmp.ge.s32.totalorder %v238, 2
        %vm243 = vcmp.ge.s32.totalorder %v239, 2
        %v244 = vpack.c.bf16 %v236, %v235
        %v245 = vld [vmem:[#allocation6] sm:$0xf]
        %v246 = vld [vmem:[#allocation6 + $0x4] sm:$0xf]
        %v247 = vld [vmem:[#allocation6 + $0x8] sm:$0xf]
        %v248 = vld [vmem:[#allocation6 + $0xc] sm:$0xf]
        %v249 = vld [vmem:[#allocation6 + $0x10] sm:$0xf]
        %v250 = vld [vmem:[#allocation6 + $0x14] sm:$0xf]
        %v251 = vld [vmem:[#allocation6 + $0x18] sm:$0xf]
        %v252 = vld [vmem:[#allocation6 + $0x1c] sm:$0xf]
        %v253 = vld [vmem:[#allocation6 + $0x20] sm:$0xf]
        %v254 = vld [vmem:[#allocation6 + $0x24] sm:$0xf]
        %v255 = vld [vmem:[#allocation6 + $0x28] sm:$0xf]
        %v256 = vld [vmem:[#allocation6 + $0x2c] sm:$0xf]
        %v257 = vld [vmem:[#allocation6 + $0x30] sm:$0xf]
        %v258 = vld [vmem:[#allocation6 + $0x34] sm:$0xf]
        %v259 = vld [vmem:[#allocation6 + $0x38] sm:$0xf]
        %v260 = vld [vmem:[#allocation6 + $0x3c] sm:$0xf]
        %v261 = vld [vmem:[%s3 + $0x2] sm:$0x1]
        %v262 = vlaneseq
        %v263 = vshrl.u32 %v262, 7
        %v264 = vsub.s32 0, %v263
        %v265 = vrot.slane %v261, %v264
        %v282 = vunpack.c.l.b16 %v245
        %v283 = vunpack.c.l.b16 %v246
        %v284 = vunpack.c.l.b16 %v247
        %v285 = vunpack.c.l.b16 %v248
        %v286 = vunpack.c.l.b16 %v249
        %v287 = vunpack.c.l.b16 %v250
        %v288 = vunpack.c.l.b16 %v251
        %v289 = vunpack.c.l.b16 %v252
        %v290 = vunpack.c.l.b16 %v253
        %v291 = vunpack.c.l.b16 %v254
        %v292 = vunpack.c.l.b16 %v255
        %v293 = vunpack.c.l.b16 %v256
        %v294 = vunpack.c.l.b16 %v257
        %v295 = vunpack.c.l.b16 %v258
        %v296 = vunpack.c.l.b16 %v259
        %v297 = vunpack.c.l.b16 %v260
        %v298 = vpack.c.b16 %v283, %v282
        %v299 = vpack.c.b16 %v285, %v284
        %v300 = vpack.c.b16 %v287, %v286
        %v301 = vpack.c.b16 %v289, %v288
        %v302 = vpack.c.b16 %v291, %v290
        %v303 = vpack.c.b16 %v293, %v292
        %v304 = vpack.c.b16 %v295, %v294
        %v305 = vpack.c.b16 %v297, %v296
        %314 = vmatprep.subr.bf16.mxu0 0
        %315 = vmatpush1.bf16.msra.mxu0 %v298
        %316 = vmatprep.subr.bf16.mxu0 0
        %317 = vmatpush1.bf16.msra.mxu0 %v299
        %318 = vmatprep.subr.bf16.mxu0 0
        %319 = vmatpush1.bf16.msra.mxu0 %v300
        %320 = vmatprep.subr.bf16.mxu0 0
        %321 = vmatpush1.bf16.msra.mxu0 %v301
        %322 = vmatprep.subr.bf16.mxu0 0
        %323 = vmatpush1.bf16.msra.mxu0 %v302
        %324 = vmatprep.subr.bf16.mxu0 0
        %325 = vmatpush1.bf16.msra.mxu0 %v303
        %326 = vmatprep.subr.bf16.mxu0 0
        %327 = vmatpush1.bf16.msra.mxu0 %v304
        %328 = vmatprep.subr.bf16.mxu0 0
        %329 = vmatpush1.bf16.msra.mxu0 %v305
        %330 = vmatprep.subr.bf16.mxu0 0
        %331 = vmatpush1.bf16.msra.mxu0 0
        %332 = vmatprep.subr.bf16.mxu0 0
        %333 = vmatpush1.bf16.msra.mxu0 0
        %334 = vmatprep.subr.bf16.mxu0 0
        %335 = vmatpush1.bf16.msra.mxu0 0
        %336 = vmatprep.subr.bf16.mxu0 0
        %337 = vmatpush1.bf16.msra.mxu0 0
        %338 = vmatprep.subr.bf16.mxu0 0
        %339 = vmatpush1.bf16.msra.mxu0 0
        %340 = vmatprep.subr.bf16.mxu0 0
        %341 = vmatpush1.bf16.msra.mxu0 0
        %342 = vmatprep.subr.bf16.mxu0 0
        %343 = vmatpush1.bf16.msra.mxu0 0
        %344 = vmatprep.subr.bf16.mxu0 0
        %345 = vmatpush1.bf16.msra.mxu0 0
        %346 = vmatprep.mubr.bf16.mxu0 0
        %347 = vmatmul.mubr.bf16.gmra.mrb[0].mxu0 %v244
        %v348 = vpop.f32.mrb[0].mxu0
        %v349 = vadd.f32 %v265, %v348
        %v350 = vpop.f32.mrb[0].mxu0
        %v351 = vpop.f32.mrb[0].mxu0
        %v352 = vadd.f32 %v265, %v351
        %v353 = vpop.f32.mrb[0].mxu0
        %354 = vdwg.mxu0
        %v355 = vrot.slane %v235, 7
        %v356 = vrot.slane %v236, 7
        %vm357 = vcmp.lt.s32.totalorder %v238, 1
        %v358 = vsel %vm357, %v355, %v356
        %v359 = vsel %vm357, %v356, %v355
        %v360 = vsel %vm240, 1, 0
        %v361 = vsel %vm241, 1, 0
        %vm362 = vcmp.eq.s32.totalorder %v360, 1
        %vm363 = vcmp.eq.s32.totalorder %v361, 1
        %v364 = vsel %vm362, %v359, 0.0
        %v365 = vsel %vm363, %v358, 0.0
        %v366 = vrot.slane %v235, 6
        %v367 = vrot.slane %v236, 6
        %vm368 = vcmp.lt.s32.totalorder %v238, 2
        %v369 = vsel %vm368, %v366, %v367
        %v370 = vsel %vm368, %v367, %v366
        %v371 = vsel %vm242, 1, 0
        %v372 = vsel %vm243, 1, 0
        %vm373 = vcmp.eq.s32.totalorder %v371, 1
        %vm374 = vcmp.eq.s32.totalorder %v372, 1
        %v375 = vsel %vm373, %v370, 0.0
        %v376 = vsel %vm374, %v369, 0.0
        %v377 = vpack.c.bf16 %v365, %v364
        %v378 = vpack.c.bf16 %v376, %v375
        %v379 = vld [vmem:[#allocation3] sm:$0xf]
        %v380 = vld [vmem:[#allocation3 + $0x4] sm:$0xf]
        %v381 = vld [vmem:[#allocation3 + $0x8] sm:$0xf]
        %v382 = vld [vmem:[#allocation3 + $0xc] sm:$0xf]
        %v383 = vld [vmem:[#allocation3 + $0x10] sm:$0xf]
        %v384 = vld [vmem:[#allocation3 + $0x14] sm:$0xf]
        %v385 = vld [vmem:[#allocation3 + $0x18] sm:$0xf]
        %v386 = vld [vmem:[#allocation3 + $0x1c] sm:$0xf]
        %v387 = vld [vmem:[#allocation3 + $0x20] sm:$0xf]
        %v388 = vld [vmem:[#allocation3 + $0x24] sm:$0xf]
        %v389 = vld [vmem:[#allocation3 + $0x28] sm:$0xf]
        %v390 = vld [vmem:[#allocation3 + $0x2c] sm:$0xf]
        %v391 = vld [vmem:[#allocation3 + $0x30] sm:$0xf]
        %v392 = vld [vmem:[#allocation3 + $0x34] sm:$0xf]
        %v393 = vld [vmem:[#allocation3 + $0x38] sm:$0xf]
        %v394 = vld [vmem:[#allocation3 + $0x3c] sm:$0xf]
        %v395 = vld [vmem:[#allocation3 + $0x40] sm:$0xf]
        %v396 = vld [vmem:[#allocation3 + $0x44] sm:$0xf]
        %v397 = vld [vmem:[#allocation3 + $0x48] sm:$0xf]
        %v398 = vld [vmem:[#allocation3 + $0x4c] sm:$0xf]
        %v399 = vld [vmem:[#allocation3 + $0x50] sm:$0xf]
        %v400 = vld [vmem:[#allocation3 + $0x54] sm:$0xf]
        %v401 = vld [vmem:[#allocation3 + $0x58] sm:$0xf]
        %v402 = vld [vmem:[#allocation3 + $0x5c] sm:$0xf]
        %v403 = vld [vmem:[#allocation3 + $0x60] sm:$0xf]
        %v404 = vld [vmem:[#allocation3 + $0x64] sm:$0xf]
        %v405 = vld [vmem:[#allocation3 + $0x68] sm:$0xf]
        %v406 = vld [vmem:[#allocation3 + $0x6c] sm:$0xf]
        %v407 = vld [vmem:[#allocation3 + $0x70] sm:$0xf]
        %v408 = vld [vmem:[#allocation3 + $0x74] sm:$0xf]
        %v409 = vld [vmem:[#allocation3 + $0x78] sm:$0xf]
        %v410 = vld [vmem:[#allocation3 + $0x7c] sm:$0xf]
        %v411 = vld [vmem:[#allocation3 + $0x80] sm:$0xf]
        %v412 = vld [vmem:[#allocation3 + $0x84] sm:$0xf]
        %v413 = vld [vmem:[#allocation3 + $0x88] sm:$0xf]
        %v414 = vld [vmem:[#allocation3 + $0x8c] sm:$0xf]
        %v415 = vld [vmem:[#allocation3 + $0x90] sm:$0xf]
        %v416 = vld [vmem:[#allocation3 + $0x94] sm:$0xf]
        %v417 = vld [vmem:[#allocation3 + $0x98] sm:$0xf]
        %v418 = vld [vmem:[#allocation3 + $0x9c] sm:$0xf]
        %v419 = vld [vmem:[#allocation3 + $0xa0] sm:$0xf]
        %v420 = vld [vmem:[#allocation3 + $0xa4] sm:$0xf]
        %v421 = vld [vmem:[#allocation3 + $0xa8] sm:$0xf]
        %v422 = vld [vmem:[#allocation3 + $0xac] sm:$0xf]
        %v423 = vld [vmem:[#allocation3 + $0xb0] sm:$0xf]
        %v424 = vld [vmem:[#allocation3 + $0xb4] sm:$0xf]
        %v425 = vld [vmem:[#allocation3 + $0xb8] sm:$0xf]
        %v426 = vld [vmem:[#allocation3 + $0xbc] sm:$0xf]
        %v427 = vld [vmem:[%s3] sm:$0x1]
        %v428 = vlaneseq
        %v429 = vshrl.u32 %v428, 7
        %v430 = vsub.s32 0, %v429
        %v431 = vrot.slane %v427, %v430
        %v480 = vunpack.c.l.b16 %v379
        %v481 = vunpack.c.l.b16 %v380
        %v482 = vunpack.c.l.b16 %v381
        %v483 = vunpack.c.l.b16 %v382
        %v484 = vunpack.c.l.b16 %v383
        %v485 = vunpack.c.l.b16 %v384
        %v486 = vunpack.c.l.b16 %v385
        %v487 = vunpack.c.l.b16 %v386
        %v488 = vunpack.c.l.b16 %v387
        %v489 = vunpack.c.l.b16 %v388
        %v490 = vunpack.c.l.b16 %v389
        %v491 = vunpack.c.l.b16 %v390
        %v492 = vunpack.c.l.b16 %v391
        %v493 = vunpack.c.l.b16 %v392
        %v494 = vunpack.c.l.b16 %v393
        %v495 = vunpack.c.l.b16 %v394
        %v496 = vunpack.c.l.b16 %v395
        %v497 = vunpack.c.l.b16 %v396
        %v498 = vunpack.c.l.b16 %v397
        %v499 = vunpack.c.l.b16 %v398
        %v500 = vunpack.c.l.b16 %v399
        %v501 = vunpack.c.l.b16 %v400
        %v502 = vunpack.c.l.b16 %v401
        %v503 = vunpack.c.l.b16 %v402
        %v504 = vunpack.c.l.b16 %v403
        %v505 = vunpack.c.l.b16 %v404
        %v506 = vunpack.c.l.b16 %v405
        %v507 = vunpack.c.l.b16 %v406
        %v508 = vunpack.c.l.b16 %v407
        %v509 = vunpack.c.l.b16 %v408
        %v510 = vunpack.c.l.b16 %v409
        %v511 = vunpack.c.l.b16 %v410
        %v512 = vunpack.c.l.b16 %v411
        %v513 = vunpack.c.l.b16 %v412
        %v514 = vunpack.c.l.b16 %v413
        %v515 = vunpack.c.l.b16 %v414
        %v516 = vunpack.c.l.b16 %v415
        %v517 = vunpack.c.l.b16 %v416
        %v518 = vunpack.c.l.b16 %v417
        %v519 = vunpack.c.l.b16 %v418
        %v520 = vunpack.c.l.b16 %v419
        %v521 = vunpack.c.l.b16 %v420
        %v522 = vunpack.c.l.b16 %v421
        %v523 = vunpack.c.l.b16 %v422
        %v524 = vunpack.c.l.b16 %v423
        %v525 = vunpack.c.l.b16 %v424
        %v526 = vunpack.c.l.b16 %v425
        %v527 = vunpack.c.l.b16 %v426
        %v528 = vpack.c.b16 %v481, %v480
        %v529 = vpack.c.b16 %v483, %v482
        %v530 = vpack.c.b16 %v485, %v484
        %v531 = vpack.c.b16 %v487, %v486
        %v532 = vpack.c.b16 %v489, %v488
        %v533 = vpack.c.b16 %v491, %v490
        %v534 = vpack.c.b16 %v493, %v492
        %v535 = vpack.c.b16 %v495, %v494
        %v536 = vpack.c.b16 %v497, %v496
        %v537 = vpack.c.b16 %v499, %v498
        %v538 = vpack.c.b16 %v501, %v500
        %v539 = vpack.c.b16 %v503, %v502
        %v540 = vpack.c.b16 %v505, %v504
        %v541 = vpack.c.b16 %v507, %v506
        %v542 = vpack.c.b16 %v509, %v508
        %v543 = vpack.c.b16 %v511, %v510
        %v544 = vpack.c.b16 %v513, %v512
        %v545 = vpack.c.b16 %v515, %v514
        %v546 = vpack.c.b16 %v517, %v516
        %v547 = vpack.c.b16 %v519, %v518
        %v548 = vpack.c.b16 %v521, %v520
        %v549 = vpack.c.b16 %v523, %v522
        %v550 = vpack.c.b16 %v525, %v524
        %v551 = vpack.c.b16 %v527, %v526
        %576 = vmatprep.subr.bf16.mxu0 0
        %577 = vmatpush1.bf16.msra.mxu0 %v528
        %578 = vmatprep.subr.bf16.mxu0 0
        %579 = vmatpush1.bf16.msra.mxu0 %v529
        %580 = vmatprep.subr.bf16.mxu0 0
        %581 = vmatpush1.bf16.msra.mxu0 %v530
        %582 = vmatprep.subr.bf16.mxu0 0
        %583 = vmatpush1.bf16.msra.mxu0 %v531
        %584 = vmatprep.subr.bf16.mxu0 0
        %585 = vmatpush1.bf16.msra.mxu0 %v532
        %586 = vmatprep.subr.bf16.mxu0 0
        %587 = vmatpush1.bf16.msra.mxu0 %v533
        %588 = vmatprep.subr.bf16.mxu0 0
        %589 = vmatpush1.bf16.msra.mxu0 %v534
        %590 = vmatprep.subr.bf16.mxu0 0
        %591 = vmatpush1.bf16.msra.mxu0 %v535
        %592 = vmatprep.subr.bf16.mxu0 0
        %593 = vmatpush1.bf16.msra.mxu0 %v536
        %594 = vmatprep.subr.bf16.mxu0 0
        %595 = vmatpush1.bf16.msra.mxu0 %v537
        %596 = vmatprep.subr.bf16.mxu0 0
        %597 = vmatpush1.bf16.msra.mxu0 %v538
        %598 = vmatprep.subr.bf16.mxu0 0
        %599 = vmatpush1.bf16.msra.mxu0 %v539
        %600 = vmatprep.subr.bf16.mxu0 0
        %601 = vmatpush1.bf16.msra.mxu0 %v540
        %602 = vmatprep.subr.bf16.mxu0 0
        %603 = vmatpush1.bf16.msra.mxu0 %v541
        %604 = vmatprep.subr.bf16.mxu0 0
        %605 = vmatpush1.bf16.msra.mxu0 %v542
        %606 = vmatprep.subr.bf16.mxu0 0
        %607 = vmatpush1.bf16.msra.mxu0 %v543
        %608 = vmatprep.mubr.bf16.mxu0 %v377
        %609 = vmatmul.mubr.bf16.gmra.mrb[0].mxu0 %v244
        %v610 = vpop.f32.mrb[0].mxu0
        %v611 = vadd.f32 %v431, %v610
        %v612 = vpop.f32.mrb[0].mxu0
        %v613 = vpop.f32.mrb[0].mxu0
        %v614 = vadd.f32 %v431, %v613
        %v615 = vpop.f32.mrb[0].mxu0
        %616 = vdwg.mxu0
        %617 = vmatprep.subr.bf16.mxu0 0
        %618 = vmatpush1.bf16.msra.mxu0 %v544
        %619 = vmatprep.subr.bf16.mxu0 0
        %620 = vmatpush1.bf16.msra.mxu0 %v545
        %621 = vmatprep.subr.bf16.mxu0 0
        %622 = vmatpush1.bf16.msra.mxu0 %v546
        %623 = vmatprep.subr.bf16.mxu0 0
        %624 = vmatpush1.bf16.msra.mxu0 %v547
        %625 = vmatprep.subr.bf16.mxu0 0
        %626 = vmatpush1.bf16.msra.mxu0 %v548
        %627 = vmatprep.subr.bf16.mxu0 0
        %628 = vmatpush1.bf16.msra.mxu0 %v549
        %629 = vmatprep.subr.bf16.mxu0 0
        %630 = vmatpush1.bf16.msra.mxu0 %v550
        %631 = vmatprep.subr.bf16.mxu0 0
        %632 = vmatpush1.bf16.msra.mxu0 %v551
        %633 = vmatprep.subr.bf16.mxu0 0
        %634 = vmatpush1.bf16.msra.mxu0 0
        %635 = vmatprep.subr.bf16.mxu0 0
        %636 = vmatpush1.bf16.msra.mxu0 0
        %637 = vmatprep.subr.bf16.mxu0 0
        %638 = vmatpush1.bf16.msra.mxu0 0
        %639 = vmatprep.subr.bf16.mxu0 0
        %640 = vmatpush1.bf16.msra.mxu0 0
        %641 = vmatprep.subr.bf16.mxu0 0
        %642 = vmatpush1.bf16.msra.mxu0 0
        %643 = vmatprep.subr.bf16.mxu0 0
        %644 = vmatpush1.bf16.msra.mxu0 0
        %645 = vmatprep.subr.bf16.mxu0 0
        %646 = vmatpush1.bf16.msra.mxu0 0
        %647 = vmatprep.subr.bf16.mxu0 0
        %648 = vmatpush1.bf16.msra.mxu0 0
        %649 = vmatprep.mubr.bf16.mxu0 0
        %650 = vmatmul.mubr.bf16.gmra.mrb[0].mxu0 %v378
        %v651 = vpop.f32.mrb[0].mxu0
        %v652 = vadd.f32 %v611, %v651
        %v653 = vpop.f32.mrb[0].mxu0
        %v654 = vpop.f32.mrb[0].mxu0
        %v655 = vadd.f32 %v614, %v654
        %v656 = vpop.f32.mrb[0].mxu0
        %657 = vdwg.mxu0
        %v658 = vmax.f32 %v652, 0.0
        %v659 = vmax.f32 %v655, 0.0
        %v660 = vrot.slane %v658, 7
        %v661 = vrot.slane %v659, 7
        %v662 = vsel %vm357, %v660, %v661
        %v663 = vsel %vm357, %v661, %v660
        %v664 = vsel %vm362, %v663, 0.0
        %v665 = vsel %vm363, %v662, 0.0
        %v666 = vrot.slane %v658, 6
        %v667 = vrot.slane %v659, 6
        %v668 = vsel %vm368, %v666, %v667
        %v669 = vsel %vm368, %v667, %v666
        %v670 = vsel %vm373, %v669, 0.0
        %v671 = vsel %vm374, %v668, 0.0
        %v672 = vpack.c.bf16 %v659, %v658
        %v673 = vpack.c.bf16 %v665, %v664
        %v674 = vpack.c.bf16 %v671, %v670
        %s675 = scalar_lea.vmem [#allocation3], 192
        %v676 = vld [vmem:[%s675] sm:$0xf]
        %v677 = vld [vmem:[%s675 + $0x4] sm:$0xf]
        %v678 = vld [vmem:[%s675 + $0x8] sm:$0xf]
        %v679 = vld [vmem:[%s675 + $0xc] sm:$0xf]
        %v680 = vld [vmem:[%s675 + $0x10] sm:$0xf]
        %v681 = vld [vmem:[%s675 + $0x14] sm:$0xf]
        %v682 = vld [vmem:[%s675 + $0x18] sm:$0xf]
        %v683 = vld [vmem:[%s675 + $0x1c] sm:$0xf]
        %v684 = vld [vmem:[%s675 + $0x20] sm:$0xf]
        %v685 = vld [vmem:[%s675 + $0x24] sm:$0xf]
        %v686 = vld [vmem:[%s675 + $0x28] sm:$0xf]
        %v687 = vld [vmem:[%s675 + $0x2c] sm:$0xf]
        %v688 = vld [vmem:[%s675 + $0x30] sm:$0xf]
        %v689 = vld [vmem:[%s675 + $0x34] sm:$0xf]
        %v690 = vld [vmem:[%s675 + $0x38] sm:$0xf]
        %v691 = vld [vmem:[%s675 + $0x3c] sm:$0xf]
        %v692 = vld [vmem:[%s675 + $0x40] sm:$0xf]
        %v693 = vld [vmem:[%s675 + $0x44] sm:$0xf]
        %v694 = vld [vmem:[%s675 + $0x48] sm:$0xf]
        %v695 = vld [vmem:[%s675 + $0x4c] sm:$0xf]
        %v696 = vld [vmem:[%s675 + $0x50] sm:$0xf]
        %v697 = vld [vmem:[%s675 + $0x54] sm:$0xf]
        %v698 = vld [vmem:[%s675 + $0x58] sm:$0xf]
        %v699 = vld [vmem:[%s675 + $0x5c] sm:$0xf]
        %v700 = vld [vmem:[%s675 + $0x60] sm:$0xf]
        %v701 = vld [vmem:[%s675 + $0x64] sm:$0xf]
        %v702 = vld [vmem:[%s675 + $0x68] sm:$0xf]
        %v703 = vld [vmem:[%s675 + $0x6c] sm:$0xf]
        %v704 = vld [vmem:[%s675 + $0x70] sm:$0xf]
        %v705 = vld [vmem:[%s675 + $0x74] sm:$0xf]
        %v706 = vld [vmem:[%s675 + $0x78] sm:$0xf]
        %v707 = vld [vmem:[%s675 + $0x7c] sm:$0xf]
        %v708 = vld [vmem:[%s675 + $0x80] sm:$0xf]
        %v709 = vld [vmem:[%s675 + $0x84] sm:$0xf]
        %v710 = vld [vmem:[%s675 + $0x88] sm:$0xf]
        %v711 = vld [vmem:[%s675 + $0x8c] sm:$0xf]
        %v712 = vld [vmem:[%s675 + $0x90] sm:$0xf]
        %v713 = vld [vmem:[%s675 + $0x94] sm:$0xf]
        %v714 = vld [vmem:[%s675 + $0x98] sm:$0xf]
        %v715 = vld [vmem:[%s675 + $0x9c] sm:$0xf]
        %v716 = vld [vmem:[%s675 + $0xa0] sm:$0xf]
        %v717 = vld [vmem:[%s675 + $0xa4] sm:$0xf]
        %v718 = vld [vmem:[%s675 + $0xa8] sm:$0xf]
        %v719 = vld [vmem:[%s675 + $0xac] sm:$0xf]
        %v720 = vld [vmem:[%s675 + $0xb0] sm:$0xf]
        %v721 = vld [vmem:[%s675 + $0xb4] sm:$0xf]
        %v722 = vld [vmem:[%s675 + $0xb8] sm:$0xf]
        %v723 = vld [vmem:[%s675 + $0xbc] sm:$0xf]
        %v724 = vld [vmem:[%s3 + $0x1] sm:$0x1]
        %v725 = vlaneseq
        %v726 = vshrl.u32 %v725, 7
        %v727 = vsub.s32 0, %v726
        %v728 = vrot.slane %v724, %v727
        %v777 = vunpack.c.l.b16 %v676
        %v778 = vunpack.c.l.b16 %v677
        %v779 = vunpack.c.l.b16 %v678
        %v780 = vunpack.c.l.b16 %v679
        %v781 = vunpack.c.l.b16 %v680
        %v782 = vunpack.c.l.b16 %v681
        %v783 = vunpack.c.l.b16 %v682
        %v784 = vunpack.c.l.b16 %v683
        %v785 = vunpack.c.l.b16 %v684
        %v786 = vunpack.c.l.b16 %v685
        %v787 = vunpack.c.l.b16 %v686
        %v788 = vunpack.c.l.b16 %v687
        %v789 = vunpack.c.l.b16 %v688
        %v790 = vunpack.c.l.b16 %v689
        %v791 = vunpack.c.l.b16 %v690
        %v792 = vunpack.c.l.b16 %v691
        %v793 = vunpack.c.l.b16 %v692
        %v794 = vunpack.c.l.b16 %v693
        %v795 = vunpack.c.l.b16 %v694
        %v796 = vunpack.c.l.b16 %v695
        %v797 = vunpack.c.l.b16 %v696
        %v798 = vunpack.c.l.b16 %v697
        %v799 = vunpack.c.l.b16 %v698
        %v800 = vunpack.c.l.b16 %v699
        %v801 = vunpack.c.l.b16 %v700
        %v802 = vunpack.c.l.b16 %v701
        %v803 = vunpack.c.l.b16 %v702
        %v804 = vunpack.c.l.b16 %v703
        %v805 = vunpack.c.l.b16 %v704
        %v806 = vunpack.c.l.b16 %v705
        %v807 = vunpack.c.l.b16 %v706
        %v808 = vunpack.c.l.b16 %v707
        %v809 = vunpack.c.l.b16 %v708
        %v810 = vunpack.c.l.b16 %v709
        %v811 = vunpack.c.l.b16 %v710
        %v812 = vunpack.c.l.b16 %v711
        %v813 = vunpack.c.l.b16 %v712
        %v814 = vunpack.c.l.b16 %v713
        %v815 = vunpack.c.l.b16 %v714
        %v816 = vunpack.c.l.b16 %v715
        %v817 = vunpack.c.l.b16 %v716
        %v818 = vunpack.c.l.b16 %v717
        %v819 = vunpack.c.l.b16 %v718
        %v820 = vunpack.c.l.b16 %v719
        %v821 = vunpack.c.l.b16 %v720
        %v822 = vunpack.c.l.b16 %v721
        %v823 = vunpack.c.l.b16 %v722
        %v824 = vunpack.c.l.b16 %v723
        %v825 = vpack.c.b16 %v778, %v777
        %v826 = vpack.c.b16 %v780, %v779
        %v827 = vpack.c.b16 %v782, %v781
        %v828 = vpack.c.b16 %v784, %v783
        %v829 = vpack.c.b16 %v786, %v785
        %v830 = vpack.c.b16 %v788, %v787
        %v831 = vpack.c.b16 %v790, %v789
        %v832 = vpack.c.b16 %v792, %v791
        %v833 = vpack.c.b16 %v794, %v793
        %v834 = vpack.c.b16 %v796, %v795
        %v835 = vpack.c.b16 %v798, %v797
        %v836 = vpack.c.b16 %v800, %v799
        %v837 = vpack.c.b16 %v802, %v801
        %v838 = vpack.c.b16 %v804, %v803
        %v839 = vpack.c.b16 %v806, %v805
        %v840 = vpack.c.b16 %v808, %v807
        %v841 = vpack.c.b16 %v810, %v809
        %v842 = vpack.c.b16 %v812, %v811
        %v843 = vpack.c.b16 %v814, %v813
        %v844 = vpack.c.b16 %v816, %v815
        %v845 = vpack.c.b16 %v818, %v817
        %v846 = vpack.c.b16 %v820, %v819
        %v847 = vpack.c.b16 %v822, %v821
        %v848 = vpack.c.b16 %v824, %v823
        %873 = vmatprep.subr.bf16.mxu0 0
        %874 = vmatpush1.bf16.msra.mxu0 %v825
        %875 = vmatprep.subr.bf16.mxu0 0
        %876 = vmatpush1.bf16.msra.mxu0 %v826
        %877 = vmatprep.subr.bf16.mxu0 0
        %878 = vmatpush1.bf16.msra.mxu0 %v827
        %879 = vmatprep.subr.bf16.mxu0 0
        %880 = vmatpush1.bf16.msra.mxu0 %v828
        %881 = vmatprep.subr.bf16.mxu0 0
        %882 = vmatpush1.bf16.msra.mxu0 %v829
        %883 = vmatprep.subr.bf16.mxu0 0
        %884 = vmatpush1.bf16.msra.mxu0 %v830
        %885 = vmatprep.subr.bf16.mxu0 0
        %886 = vmatpush1.bf16.msra.mxu0 %v831
        %887 = vmatprep.subr.bf16.mxu0 0
        %888 = vmatpush1.bf16.msra.mxu0 %v832
        %889 = vmatprep.subr.bf16.mxu0 0
        %890 = vmatpush1.bf16.msra.mxu0 %v833
        %891 = vmatprep.subr.bf16.mxu0 0
        %892 = vmatpush1.bf16.msra.mxu0 %v834
        %893 = vmatprep.subr.bf16.mxu0 0
        %894 = vmatpush1.bf16.msra.mxu0 %v835
        %895 = vmatprep.subr.bf16.mxu0 0
        %896 = vmatpush1.bf16.msra.mxu0 %v836
        %897 = vmatprep.subr.bf16.mxu0 0
        %898 = vmatpush1.bf16.msra.mxu0 %v837
        %899 = vmatprep.subr.bf16.mxu0 0
        %900 = vmatpush1.bf16.msra.mxu0 %v838
        %901 = vmatprep.subr.bf16.mxu0 0
        %902 = vmatpush1.bf16.msra.mxu0 %v839
        %903 = vmatprep.subr.bf16.mxu0 0
        %904 = vmatpush1.bf16.msra.mxu0 %v840
        %905 = vmatprep.mubr.bf16.mxu0 %v673
        %906 = vmatmul.mubr.bf16.gmra.mrb[0].mxu0 %v672
        %v907 = vpop.f32.mrb[0].mxu0
        %v908 = vadd.f32 %v728, %v907
        %v909 = vpop.f32.mrb[0].mxu0
        %v910 = vpop.f32.mrb[0].mxu0
        %v911 = vadd.f32 %v728, %v910
        %v912 = vpop.f32.mrb[0].mxu0
        %913 = vdwg.mxu0
        %914 = vmatprep.subr.bf16.mxu0 0
        %915 = vmatpush1.bf16.msra.mxu0 %v841
        %916 = vmatprep.subr.bf16.mxu0 0
        %917 = vmatpush1.bf16.msra.mxu0 %v842
        %918 = vmatprep.subr.bf16.mxu0 0
        %919 = vmatpush1.bf16.msra.mxu0 %v843
        %920 = vmatprep.subr.bf16.mxu0 0
        %921 = vmatpush1.bf16.msra.mxu0 %v844
        %922 = vmatprep.subr.bf16.mxu0 0
        %923 = vmatpush1.bf16.msra.mxu0 %v845
        %924 = vmatprep.subr.bf16.mxu0 0
        %925 = vmatpush1.bf16.msra.mxu0 %v846
        %926 = vmatprep.subr.bf16.mxu0 0
        %927 = vmatpush1.bf16.msra.mxu0 %v847
        %928 = vmatprep.subr.bf16.mxu0 0
        %929 = vmatpush1.bf16.msra.mxu0 %v848
        %930 = vmatprep.subr.bf16.mxu0 0
        %931 = vmatpush1.bf16.msra.mxu0 0
        %932 = vmatprep.subr.bf16.mxu0 0
        %933 = vmatpush1.bf16.msra.mxu0 0
        %934 = vmatprep.subr.bf16.mxu0 0
        %935 = vmatpush1.bf16.msra.mxu0 0
        %936 = vmatprep.subr.bf16.mxu0 0
        %937 = vmatpush1.bf16.msra.mxu0 0
        %938 = vmatprep.subr.bf16.mxu0 0
        %939 = vmatpush1.bf16.msra.mxu0 0
        %940 = vmatprep.subr.bf16.mxu0 0
        %941 = vmatpush1.bf16.msra.mxu0 0
        %942 = vmatprep.subr.bf16.mxu0 0
        %943 = vmatpush1.bf16.msra.mxu0 0
        %944 = vmatprep.subr.bf16.mxu0 0
        %945 = vmatpush1.bf16.msra.mxu0 0
        %946 = vmatprep.mubr.bf16.mxu0 0
        %947 = vmatmul.mubr.bf16.gmra.mrb[0].mxu0 %v674
        %v948 = vpop.f32.mrb[0].mxu0
        %v949 = vadd.f32 %v908, %v948
        %v950 = vpop.f32.mrb[0].mxu0
        %v951 = vpop.f32.mrb[0].mxu0
        %v952 = vadd.f32 %v911, %v951
        %v953 = vpop.f32.mrb[0].mxu0
        %954 = vdwg.mxu0
        %v955 = vmax.f32 %v949, 0.0
        %v956 = vmax.f32 %v952, 0.0
        %v957 = vadd.f32 %v955, %v349
        %v958 = vadd.f32 %v956, %v352
        %v959 = vmax.f32 %v957, 0.0
        %v960 = vmax.f32 %v958, 0.0
        %vm961 = vcmp.ge.s32.totalorder %v238, 4
        %vm962 = vcmp.ge.s32.totalorder %v239, 4
        %v963 = vpack.c.bf16 %v960, %v959
        %s964 = scalar_lea.vmem [#allocation6], 64
        %v965 = vld [vmem:[%s964] sm:$0xf]
        %v966 = vld [vmem:[%s964 + $0x4] sm:$0xf]
        %v967 = vld [vmem:[%s964 + $0x8] sm:$0xf]
        %v968 = vld [vmem:[%s964 + $0xc] sm:$0xf]
        %v969 = vld [vmem:[%s964 + $0x10] sm:$0xf]
        %v970 = vld [vmem:[%s964 + $0x14] sm:$0xf]
        %v971 = vld [vmem:[%s964 + $0x18] sm:$0xf]
        %v972 = vld [vmem:[%s964 + $0x1c] sm:$0xf]
        %v973 = vld [vmem:[%s964 + $0x20] sm:$0xf]
        %v974 = vld [vmem:[%s964 + $0x24] sm:$0xf]
        %v975 = vld [vmem:[%s964 + $0x28] sm:$0xf]
        %v976 = vld [vmem:[%s964 + $0x2c] sm:$0xf]
        %v977 = vld [vmem:[%s964 + $0x30] sm:$0xf]
        %v978 = vld [vmem:[%s964 + $0x34] sm:$0xf]
        %v979 = vld [vmem:[%s964 + $0x38] sm:$0xf]
        %v980 = vld [vmem:[%s964 + $0x3c] sm:$0xf]
        %v981 = vld [vmem:[%s3 + $0x5] sm:$0x1]
        %v982 = vlaneseq
        %v983 = vshrl.u32 %v982, 7
        %v984 = vsub.s32 0, %v983
        %v985 = vrot.slane %v981, %v984
        %v1002 = vunpack.c.l.b16 %v965
        %v1003 = vunpack.c.l.b16 %v966
        %v1004 = vunpack.c.l.b16 %v967
        %v1005 = vunpack.c.l.b16 %v968
        %v1006 = vunpack.c.l.b16 %v969
        %v1007 = vunpack.c.l.b16 %v970
        %v1008 = vunpack.c.l.b16 %v971
        %v1009 = vunpack.c.l.b16 %v972
        %v1010 = vunpack.c.l.b16 %v973
        %v1011 = vunpack.c.l.b16 %v974
        %v1012 = vunpack.c.l.b16 %v975
        %v1013 = vunpack.c.l.b16 %v976
        %v1014 = vunpack.c.l.b16 %v977
        %v1015 = vunpack.c.l.b16 %v978
        %v1016 = vunpack.c.l.b16 %v979
        %v1017 = vunpack.c.l.b16 %v980
        %v1018 = vpack.c.b16 %v1003, %v1002
        %v1019 = vpack.c.b16 %v1005, %v1004
        %v1020 = vpack.c.b16 %v1007, %v1006
        %v1021 = vpack.c.b16 %v1009, %v1008
        %v1022 = vpack.c.b16 %v1011, %v1010
        %v1023 = vpack.c.b16 %v1013, %v1012
        %v1024 = vpack.c.b16 %v1015, %v1014
        %v1025 = vpack.c.b16 %v1017, %v1016
        %1034 = vmatprep.subr.bf16.mxu0 0
        %1035 = vmatpush1.bf16.msra.mxu0 %v1018
        %1036 = vmatprep.subr.bf16.mxu0 0
        %1037 = vmatpush1.bf16.msra.mxu0 %v1019
        %1038 = vmatprep.subr.bf16.mxu0 0
        %1039 = vmatpush1.bf16.msra.mxu0 %v1020
        %1040 = vmatprep.subr.bf16.mxu0 0
        %1041 = vmatpush1.bf16.msra.mxu0 %v1021
        %1042 = vmatprep.subr.bf16.mxu0 0
        %1043 = vmatpush1.bf16.msra.mxu0 %v1022
        %1044 = vmatprep.subr.bf16.mxu0 0
        %1045 = vmatpush1.bf16.msra.mxu0 %v1023
        %1046 = vmatprep.subr.bf16.mxu0 0
        %1047 = vmatpush1.bf16.msra.mxu0 %v1024
        %1048 = vmatprep.subr.bf16.mxu0 0
        %1049 = vmatpush1.bf16.msra.mxu0 %v1025
        %1050 = vmatprep.subr.bf16.mxu0 0
        %1051 = vmatpush1.bf16.msra.mxu0 0
        %1052 = vmatprep.subr.bf16.mxu0 0
        %1053 = vmatpush1.bf16.msra.mxu0 0
        %1054 = vmatprep.subr.bf16.mxu0 0
        %1055 = vmatpush1.bf16.msra.mxu0 0
        %1056 = vmatprep.subr.bf16.mxu0 0
        %1057 = vmatpush1.bf16.msra.mxu0 0
        %1058 = vmatprep.subr.bf16.mxu0 0
        %1059 = vmatpush1.bf16.msra.mxu0 0
        %1060 = vmatprep.subr.bf16.mxu0 0
        %1061 = vmatpush1.bf16.msra.mxu0 0
        %1062 = vmatprep.subr.bf16.mxu0 0
        %1063 = vmatpush1.bf16.msra.mxu0 0
        %1064 = vmatprep.subr.bf16.mxu0 0
        %1065 = vmatpush1.bf16.msra.mxu0 0
        %1066 = vmatprep.mubr.bf16.mxu0 0
        %1067 = vmatmul.mubr.bf16.gmra.mrb[0].mxu0 %v963
        %v1068 = vpop.f32.mrb[0].mxu0
        %v1069 = vadd.f32 %v985, %v1068
        %v1070 = vpop.f32.mrb[0].mxu0
        %v1071 = vpop.f32.mrb[0].mxu0
        %v1072 = vadd.f32 %v985, %v1071
        %v1073 = vpop.f32.mrb[0].mxu0
        %1074 = vdwg.mxu0
        %v1075 = vrot.slane %v959, 6
        %v1076 = vrot.slane %v960, 6
        %v1077 = vsel %vm368, %v1075, %v1076
        %v1078 = vsel %vm368, %v1076, %v1075
        %v1079 = vsel %vm373, %v1078, 0.0
        %v1080 = vsel %vm374, %v1077, 0.0
        %v1081 = vrot.slane %v959, 4
        %v1082 = vrot.slane %v960, 4
        %vm1083 = vcmp.lt.s32.totalorder %v238, 4
        %v1084 = vsel %vm1083, %v1081, %v1082
        %v1085 = vsel %vm1083, %v1082, %v1081
        %v1086 = vsel %vm961, 1, 0
        %v1087 = vsel %vm962, 1, 0
        %vm1088 = vcmp.eq.s32.totalorder %v1086, 1
        %vm1089 = vcmp.eq.s32.totalorder %v1087, 1
        %v1090 = vsel %vm1088, %v1085, 0.0
        %v1091 = vsel %vm1089, %v1084, 0.0
        %v1092 = vpack.c.bf16 %v1080, %v1079
        %v1093 = vpack.c.bf16 %v1091, %v1090
        %s1094 = scalar_lea.vmem [#allocation3], 384
        %v1095 = vld [vmem:[%s1094] sm:$0xf]
        %v1096 = vld [vmem:[%s1094 + $0x4] sm:$0xf]
        %v1097 = vld [vmem:[%s1094 + $0x8] sm:$0xf]
        %v1098 = vld [vmem:[%s1094 + $0xc] sm:$0xf]
        %v1099 = vld [vmem:[%s1094 + $0x10] sm:$0xf]
        %v1100 = vld [vmem:[%s1094 + $0x14] sm:$0xf]
        %v1101 = vld [vmem:[%s1094 + $0x18] sm:$0xf]
        %v1102 = vld [vmem:[%s1094 + $0x1c] sm:$0xf]
        %v1103 = vld [vmem:[%s1094 + $0x20] sm:$0xf]
        %v1104 = vld [vmem:[%s1094 + $0x24] sm:$0xf]
        %v1105 = vld [vmem:[%s1094 + $0x28] sm:$0xf]
        %v1106 = vld [vmem:[%s1094 + $0x2c] sm:$0xf]
        %v1107 = vld [vmem:[%s1094 + $0x30] sm:$0xf]
        %v1108 = vld [vmem:[%s1094 + $0x34] sm:$0xf]
        %v1109 = vld [vmem:[%s1094 + $0x38] sm:$0xf]
        %v1110 = vld [vmem:[%s1094 + $0x3c] sm:$0xf]
        %v1111 = vld [vmem:[%s1094 + $0x40] sm:$0xf]
        %v1112 = vld [vmem:[%s1094 + $0x44] sm:$0xf]
        %v1113 = vld [vmem:[%s1094 + $0x48] sm:$0xf]
        %v1114 = vld [vmem:[%s1094 + $0x4c] sm:$0xf]
        %v1115 = vld [vmem:[%s1094 + $0x50] sm:$0xf]
        %v1116 = vld [vmem:[%s1094 + $0x54] sm:$0xf]
        %v1117 = vld [vmem:[%s1094 + $0x58] sm:$0xf]
        %v1118 = vld [vmem:[%s1094 + $0x5c] sm:$0xf]
        %v1119 = vld [vmem:[%s1094 + $0x60] sm:$0xf]
        %v1120 = vld [vmem:[%s1094 + $0x64] sm:$0xf]
        %v1121 = vld [vmem:[%s1094 + $0x68] sm:$0xf]
        %v1122 = vld [vmem:[%s1094 + $0x6c] sm:$0xf]
        %v1123 = vld [vmem:[%s1094 + $0x70] sm:$0xf]
        %v1124 = vld [vmem:[%s1094 + $0x74] sm:$0xf]
        %v1125 = vld [vmem:[%s1094 + $0x78] sm:$0xf]
        %v1126 = vld [vmem:[%s1094 + $0x7c] sm:$0xf]
        %v1127 = vld [vmem:[%s1094 + $0x80] sm:$0xf]
        %v1128 = vld [vmem:[%s1094 + $0x84] sm:$0xf]
        %v1129 = vld [vmem:[%s1094 + $0x88] sm:$0xf]
        %v1130 = vld [vmem:[%s1094 + $0x8c] sm:$0xf]
        %v1131 = vld [vmem:[%s1094 + $0x90] sm:$0xf]
        %v1132 = vld [vmem:[%s1094 + $0x94] sm:$0xf]
        %v1133 = vld [vmem:[%s1094 + $0x98] sm:$0xf]
        %v1134 = vld [vmem:[%s1094 + $0x9c] sm:$0xf]
        %v1135 = vld [vmem:[%s1094 + $0xa0] sm:$0xf]
        %v1136 = vld [vmem:[%s1094 + $0xa4] sm:$0xf]
        %v1137 = vld [vmem:[%s1094 + $0xa8] sm:$0xf]
        %v1138 = vld [vmem:[%s1094 + $0xac] sm:$0xf]
        %v1139 = vld [vmem:[%s1094 + $0xb0] sm:$0xf]
        %v1140 = vld [vmem:[%s1094 + $0xb4] sm:$0xf]
        %v1141 = vld [vmem:[%s1094 + $0xb8] sm:$0xf]
        %v1142 = vld [vmem:[%s1094 + $0xbc] sm:$0xf]
        %v1143 = vld [vmem:[%s3 + $0x3] sm:$0x1]
        %v1144 = vlaneseq
        %v1145 = vshrl.u32 %v1144, 7
        %v1146 = vsub.s32 0, %v1145
        %v1147 = vrot.slane %v1143, %v1146
        %v1196 = vunpack.c.l.b16 %v1095
        %v1197 = vunpack.c.l.b16 %v1096
        %v1198 = vunpack.c.l.b16 %v1097
        %v1199 = vunpack.c.l.b16 %v1098
        %v1200 = vunpack.c.l.b16 %v1099
        %v1201 = vunpack.c.l.b16 %v1100
        %v1202 = vunpack.c.l.b16 %v1101
        %v1203 = vunpack.c.l.b16 %v1102
        %v1204 = vunpack.c.l.b16 %v1103
        %v1205 = vunpack.c.l.b16 %v1104
        %v1206 = vunpack.c.l.b16 %v1105
        %v1207 = vunpack.c.l.b16 %v1106
        %v1208 = vunpack.c.l.b16 %v1107
        %v1209 = vunpack.c.l.b16 %v1108
        %v1210 = vunpack.c.l.b16 %v1109
        %v1211 = vunpack.c.l.b16 %v1110
        %v1212 = vunpack.c.l.b16 %v1111
        %v1213 = vunpack.c.l.b16 %v1112
        %v1214 = vunpack.c.l.b16 %v1113
        %v1215 = vunpack.c.l.b16 %v1114
        %v1216 = vunpack.c.l.b16 %v1115
        %v1217 = vunpack.c.l.b16 %v1116
        %v1218 = vunpack.c.l.b16 %v1117
        %v1219 = vunpack.c.l.b16 %v1118
        %v1220 = vunpack.c.l.b16 %v1119
        %v1221 = vunpack.c.l.b16 %v1120
        %v1222 = vunpack.c.l.b16 %v1121
        %v1223 = vunpack.c.l.b16 %v1122
        %v1224 = vunpack.c.l.b16 %v1123
        %v1225 = vunpack.c.l.b16 %v1124
        %v1226 = vunpack.c.l.b16 %v1125
        %v1227 = vunpack.c.l.b16 %v1126
        %v1228 = vunpack.c.l.b16 %v1127
        %v1229 = vunpack.c.l.b16 %v1128
        %v1230 = vunpack.c.l.b16 %v1129
        %v1231 = vunpack.c.l.b16 %v1130
        %v1232 = vunpack.c.l.b16 %v1131
        %v1233 = vunpack.c.l.b16 %v1132
        %v1234 = vunpack.c.l.b16 %v1133
        %v1235 = vunpack.c.l.b16 %v1134
        %v1236 = vunpack.c.l.b16 %v1135
        %v1237 = vunpack.c.l.b16 %v1136
        %v1238 = vunpack.c.l.b16 %v1137
        %v1239 = vunpack.c.l.b16 %v1138
        %v1240 = vunpack.c.l.b16 %v1139
        %v1241 = vunpack.c.l.b16 %v1140
        %v1242 = vunpack.c.l.b16 %v1141
        %v1243 = vunpack.c.l.b16 %v1142
        %v1244 = vpack.c.b16 %v1197, %v1196
        %v1245 = vpack.c.b16 %v1199, %v1198
        %v1246 = vpack.c.b16 %v1201, %v1200
        %v1247 = vpack.c.b16 %v1203, %v1202
        %v1248 = vpack.c.b16 %v1205, %v1204
        %v1249 = vpack.c.b16 %v1207, %v1206
        %v1250 = vpack.c.b16 %v1209, %v1208
        %v1251 = vpack.c.b16 %v1211, %v1210
        %v1252 = vpack.c.b16 %v1213, %v1212
        %v1253 = vpack.c.b16 %v1215, %v1214
        %v1254 = vpack.c.b16 %v1217, %v1216
        %v1255 = vpack.c.b16 %v1219, %v1218
        %v1256 = vpack.c.b16 %v1221, %v1220
        %v1257 = vpack.c.b16 %v1223, %v1222
        %v1258 = vpack.c.b16 %v1225, %v1224
        %v1259 = vpack.c.b16 %v1227, %v1226
        %v1260 = vpack.c.b16 %v1229, %v1228
        %v1261 = vpack.c.b16 %v1231, %v1230
        %v1262 = vpack.c.b16 %v1233, %v1232
        %v1263 = vpack.c.b16 %v1235, %v1234
        %v1264 = vpack.c.b16 %v1237, %v1236
        %v1265 = vpack.c.b16 %v1239, %v1238
        %v1266 = vpack.c.b16 %v1241, %v1240
        %v1267 = vpack.c.b16 %v1243, %v1242
        %1292 = vmatprep.subr.bf16.mxu0 0
        %1293 = vmatpush1.bf16.msra.mxu0 %v1244
        %1294 = vmatprep.subr.bf16.mxu0 0
        %1295 = vmatpush1.bf16.msra.mxu0 %v1245
        %1296 = vmatprep.subr.bf16.mxu0 0
        %1297 = vmatpush1.bf16.msra.mxu0 %v1246
        %1298 = vmatprep.subr.bf16.mxu0 0
        %1299 = vmatpush1.bf16.msra.mxu0 %v1247
        %1300 = vmatprep.subr.bf16.mxu0 0
        %1301 = vmatpush1.bf16.msra.mxu0 %v1248
        %1302 = vmatprep.subr.bf16.mxu0 0
        %1303 = vmatpush1.bf16.msra.mxu0 %v1249
        %1304 = vmatprep.subr.bf16.mxu0 0
        %1305 = vmatpush1.bf16.msra.mxu0 %v1250
        %1306 = vmatprep.subr.bf16.mxu0 0
        %1307 = vmatpush1.bf16.msra.mxu0 %v1251
        %1308 = vmatprep.subr.bf16.mxu0 0
        %1309 = vmatpush1.bf16.msra.mxu0 %v1252
        %1310 = vmatprep.subr.bf16.mxu0 0
        %1311 = vmatpush1.bf16.msra.mxu0 %v1253
        %1312 = vmatprep.subr.bf16.mxu0 0
        %1313 = vmatpush1.bf16.msra.mxu0 %v1254
        %1314 = vmatprep.subr.bf16.mxu0 0
        %1315 = vmatpush1.bf16.msra.mxu0 %v1255
        %1316 = vmatprep.subr.bf16.mxu0 0
        %1317 = vmatpush1.bf16.msra.mxu0 %v1256
        %1318 = vmatprep.subr.bf16.mxu0 0
        %1319 = vmatpush1.bf16.msra.mxu0 %v1257
        %1320 = vmatprep.subr.bf16.mxu0 0
        %1321 = vmatpush1.bf16.msra.mxu0 %v1258
        %1322 = vmatprep.subr.bf16.mxu0 0
        %1323 = vmatpush1.bf16.msra.mxu0 %v1259
        %1324 = vmatprep.mubr.bf16.mxu0 %v1092
        %1325 = vmatmul.mubr.bf16.gmra.mrb[0].mxu0 %v963
        %v1326 = vpop.f32.mrb[0].mxu0
        %v1327 = vadd.f32 %v1147, %v1326
        %v1328 = vpop.f32.mrb[0].mxu0
        %v1329 = vpop.f32.mrb[0].mxu0
        %v1330 = vadd.f32 %v1147, %v1329
        %v1331 = vpop.f32.mrb[0].mxu0
        %1332 = vdwg.mxu0
        %1333 = vmatprep.subr.bf16.mxu0 0
        %1334 = vmatpush1.bf16.msra.mxu0 %v1260
        %1335 = vmatprep.subr.bf16.mxu0 0
        %1336 = vmatpush1.bf16.msra.mxu0 %v1261
        %1337 = vmatprep.subr.bf16.mxu0 0
        %1338 = vmatpush1.bf16.msra.mxu0 %v1262
        %1339 = vmatprep.subr.bf16.mxu0 0
        %1340 = vmatpush1.bf16.msra.mxu0 %v1263
        %1341 = vmatprep.subr.bf16.mxu0 0
        %1342 = vmatpush1.bf16.msra.mxu0 %v1264
        %1343 = vmatprep.subr.bf16.mxu0 0
        %1344 = vmatpush1.bf16.msra.mxu0 %v1265
        %1345 = vmatprep.subr.bf16.mxu0 0
        %1346 = vmatpush1.bf16.msra.mxu0 %v1266
        %1347 = vmatprep.subr.bf16.mxu0 0
        %1348 = vmatpush1.bf16.msra.mxu0 %v1267
        %1349 = vmatprep.subr.bf16.mxu0 0
        %1350 = vmatpush1.bf16.msra.mxu0 0
        %1351 = vmatprep.subr.bf16.mxu0 0
        %1352 = vmatpush1.bf16.msra.mxu0 0
        %1353 = vmatprep.subr.bf16.mxu0 0
        %1354 = vmatpush1.bf16.msra.mxu0 0
        %1355 = vmatprep.subr.bf16.mxu0 0
        %1356 = vmatpush1.bf16.msra.mxu0 0
        %1357 = vmatprep.subr.bf16.mxu0 0
        %1358 = vmatpush1.bf16.msra.mxu0 0
        %1359 = vmatprep.subr.bf16.mxu0 0
        %1360 = vmatpush1.bf16.msra.mxu0 0
        %1361 = vmatprep.subr.bf16.mxu0 0
        %1362 = vmatpush1.bf16.msra.mxu0 0
        %1363 = vmatprep.subr.bf16.mxu0 0
        %1364 = vmatpush1.bf16.msra.mxu0 0
        %1365 = vmatprep.mubr.bf16.mxu0 0
        %1366 = vmatmul.mubr.bf16.gmra.mrb[0].mxu0 %v1093
        %v1367 = vpop.f32.mrb[0].mxu0
        %v1368 = vadd.f32 %v1327, %v1367
        %v1369 = vpop.f32.mrb[0].mxu0
        %v1370 = vpop.f32.mrb[0].mxu0
        %v1371 = vadd.f32 %v1330, %v1370
        %v1372 = vpop.f32.mrb[0].mxu0
        %1373 = vdwg.mxu0
        %v1374 = vmax.f32 %v1368, 0.0
        %v1375 = vmax.f32 %v1371, 0.0
        %v1376 = vrot.slane %v1374, 6
        %v1377 = vrot.slane %v1375, 6
        %v1378 = vsel %vm368, %v1376, %v1377
        %v1379 = vsel %vm368, %v1377, %v1376
        %v1380 = vsel %vm373, %v1379, 0.0
        %v1381 = vsel %vm374, %v1378, 0.0
        %v1382 = vrot.slane %v1374, 4
        %v1383 = vrot.slane %v1375, 4
        %v1384 = vsel %vm1083, %v1382, %v1383
        %v1385 = vsel %vm1083, %v1383, %v1382
        %v1386 = vsel %vm1088, %v1385, 0.0
        %v1387 = vsel %vm1089, %v1384, 0.0
        %v1388 = vpack.c.bf16 %v1375, %v1374
        %v1389 = vpack.c.bf16 %v1381, %v1380
        %v1390 = vpack.c.bf16 %v1387, %v1386
        %s1391 = scalar_lea.vmem [#allocation3], 576
        %v1392 = vld [vmem:[%s1391] sm:$0xf]
        %v1393 = vld [vmem:[%s1391 + $0x4] sm:$0xf]
        %v1394 = vld [vmem:[%s1391 + $0x8] sm:$0xf]
        %v1395 = vld [vmem:[%s1391 + $0xc] sm:$0xf]
        %v1396 = vld [vmem:[%s1391 + $0x10] sm:$0xf]
        %v1397 = vld [vmem:[%s1391 + $0x14] sm:$0xf]
        %v1398 = vld [vmem:[%s1391 + $0x18] sm:$0xf]
        %v1399 = vld [vmem:[%s1391 + $0x1c] sm:$0xf]
        %v1400 = vld [vmem:[%s1391 + $0x20] sm:$0xf]
        %v1401 = vld [vmem:[%s1391 + $0x24] sm:$0xf]
        %v1402 = vld [vmem:[%s1391 + $0x28] sm:$0xf]
        %v1403 = vld [vmem:[%s1391 + $0x2c] sm:$0xf]
        %v1404 = vld [vmem:[%s1391 + $0x30] sm:$0xf]
        %v1405 = vld [vmem:[%s1391 + $0x34] sm:$0xf]
        %v1406 = vld [vmem:[%s1391 + $0x38] sm:$0xf]
        %v1407 = vld [vmem:[%s1391 + $0x3c] sm:$0xf]
        %v1408 = vld [vmem:[%s1391 + $0x40] sm:$0xf]
        %v1409 = vld [vmem:[%s1391 + $0x44] sm:$0xf]
        %v1410 = vld [vmem:[%s1391 + $0x48] sm:$0xf]
        %v1411 = vld [vmem:[%s1391 + $0x4c] sm:$0xf]
        %v1412 = vld [vmem:[%s1391 + $0x50] sm:$0xf]
        %v1413 = vld [vmem:[%s1391 + $0x54] sm:$0xf]
        %v1414 = vld [vmem:[%s1391 + $0x58] sm:$0xf]
        %v1415 = vld [vmem:[%s1391 + $0x5c] sm:$0xf]
        %v1416 = vld [vmem:[%s1391 + $0x60] sm:$0xf]
        %v1417 = vld [vmem:[%s1391 + $0x64] sm:$0xf]
        %v1418 = vld [vmem:[%s1391 + $0x68] sm:$0xf]
        %v1419 = vld [vmem:[%s1391 + $0x6c] sm:$0xf]
        %v1420 = vld [vmem:[%s1391 + $0x70] sm:$0xf]
        %v1421 = vld [vmem:[%s1391 + $0x74] sm:$0xf]
        %v1422 = vld [vmem:[%s1391 + $0x78] sm:$0xf]
        %v1423 = vld [vmem:[%s1391 + $0x7c] sm:$0xf]
        %v1424 = vld [vmem:[%s1391 + $0x80] sm:$0xf]
        %v1425 = vld [vmem:[%s1391 + $0x84] sm:$0xf]
        %v1426 = vld [vmem:[%s1391 + $0x88] sm:$0xf]
        %v1427 = vld [vmem:[%s1391 + $0x8c] sm:$0xf]
        %v1428 = vld [vmem:[%s1391 + $0x90] sm:$0xf]
        %v1429 = vld [vmem:[%s1391 + $0x94] sm:$0xf]
        %v1430 = vld [vmem:[%s1391 + $0x98] sm:$0xf]
        %v1431 = vld [vmem:[%s1391 + $0x9c] sm:$0xf]
        %v1432 = vld [vmem:[%s1391 + $0xa0] sm:$0xf]
        %v1433 = vld [vmem:[%s1391 + $0xa4] sm:$0xf]
        %v1434 = vld [vmem:[%s1391 + $0xa8] sm:$0xf]
        %v1435 = vld [vmem:[%s1391 + $0xac] sm:$0xf]
        %v1436 = vld [vmem:[%s1391 + $0xb0] sm:$0xf]
        %v1437 = vld [vmem:[%s1391 + $0xb4] sm:$0xf]
        %v1438 = vld [vmem:[%s1391 + $0xb8] sm:$0xf]
        %v1439 = vld [vmem:[%s1391 + $0xbc] sm:$0xf]
        %v1440 = vld [vmem:[%s3 + $0x4] sm:$0x1]
        %v1441 = vlaneseq
        %v1442 = vshrl.u32 %v1441, 7
        %v1443 = vsub.s32 0, %v1442
        %v1444 = vrot.slane %v1440, %v1443
        %v1493 = vunpack.c.l.b16 %v1392
        %v1494 = vunpack.c.l.b16 %v1393
        %v1495 = vunpack.c.l.b16 %v1394
        %v1496 = vunpack.c.l.b16 %v1395
        %v1497 = vunpack.c.l.b16 %v1396
        %v1498 = vunpack.c.l.b16 %v1397
        %v1499 = vunpack.c.l.b16 %v1398
        %v1500 = vunpack.c.l.b16 %v1399
        %v1501 = vunpack.c.l.b16 %v1400
        %v1502 = vunpack.c.l.b16 %v1401
        %v1503 = vunpack.c.l.b16 %v1402
        %v1504 = vunpack.c.l.b16 %v1403
        %v1505 = vunpack.c.l.b16 %v1404
        %v1506 = vunpack.c.l.b16 %v1405
        %v1507 = vunpack.c.l.b16 %v1406
        %v1508 = vunpack.c.l.b16 %v1407
        %v1509 = vunpack.c.l.b16 %v1408
        %v1510 = vunpack.c.l.b16 %v1409
        %v1511 = vunpack.c.l.b16 %v1410
        %v1512 = vunpack.c.l.b16 %v1411
        %v1513 = vunpack.c.l.b16 %v1412
        %v1514 = vunpack.c.l.b16 %v1413
        %v1515 = vunpack.c.l.b16 %v1414
        %v1516 = vunpack.c.l.b16 %v1415
        %v1517 = vunpack.c.l.b16 %v1416
        %v1518 = vunpack.c.l.b16 %v1417
        %v1519 = vunpack.c.l.b16 %v1418
        %v1520 = vunpack.c.l.b16 %v1419
        %v1521 = vunpack.c.l.b16 %v1420
        %v1522 = vunpack.c.l.b16 %v1421
        %v1523 = vunpack.c.l.b16 %v1422
        %v1524 = vunpack.c.l.b16 %v1423
        %v1525 = vunpack.c.l.b16 %v1424
        %v1526 = vunpack.c.l.b16 %v1425
        %v1527 = vunpack.c.l.b16 %v1426
        %v1528 = vunpack.c.l.b16 %v1427
        %v1529 = vunpack.c.l.b16 %v1428
        %v1530 = vunpack.c.l.b16 %v1429
        %v1531 = vunpack.c.l.b16 %v1430
        %v1532 = vunpack.c.l.b16 %v1431
        %v1533 = vunpack.c.l.b16 %v1432
        %v1534 = vunpack.c.l.b16 %v1433
        %v1535 = vunpack.c.l.b16 %v1434
        %v1536 = vunpack.c.l.b16 %v1435
        %v1537 = vunpack.c.l.b16 %v1436
        %v1538 = vunpack.c.l.b16 %v1437
        %v1539 = vunpack.c.l.b16 %v1438
        %v1540 = vunpack.c.l.b16 %v1439
        %v1541 = vpack.c.b16 %v1494, %v1493
        %v1542 = vpack.c.b16 %v1496, %v1495
        %v1543 = vpack.c.b16 %v1498, %v1497
        %v1544 = vpack.c.b16 %v1500, %v1499
        %v1545 = vpack.c.b16 %v1502, %v1501
        %v1546 = vpack.c.b16 %v1504, %v1503
        %v1547 = vpack.c.b16 %v1506, %v1505
        %v1548 = vpack.c.b16 %v1508, %v1507
        %v1549 = vpack.c.b16 %v1510, %v1509
        %v1550 = vpack.c.b16 %v1512, %v1511
        %v1551 = vpack.c.b16 %v1514, %v1513
        %v1552 = vpack.c.b16 %v1516, %v1515
        %v1553 = vpack.c.b16 %v1518, %v1517
        %v1554 = vpack.c.b16 %v1520, %v1519
        %v1555 = vpack.c.b16 %v1522, %v1521
        %v1556 = vpack.c.b16 %v1524, %v1523
        %v1557 = vpack.c.b16 %v1526, %v1525
        %v1558 = vpack.c.b16 %v1528, %v1527
        %v1559 = vpack.c.b16 %v1530, %v1529
        %v1560 = vpack.c.b16 %v1532, %v1531
        %v1561 = vpack.c.b16 %v1534, %v1533
        %v1562 = vpack.c.b16 %v1536, %v1535
        %v1563 = vpack.c.b16 %v1538, %v1537
        %v1564 = vpack.c.b16 %v1540, %v1539
        %1589 = vmatprep.subr.bf16.mxu0 0
        %1590 = vmatpush1.bf16.msra.mxu0 %v1541
        %1591 = vmatprep.subr.bf16.mxu0 0
        %1592 = vmatpush1.bf16.msra.mxu0 %v1542
        %1593 = vmatprep.subr.bf16.mxu0 0
        %1594 = vmatpush1.bf16.msra.mxu0 %v1543
        %1595 = vmatprep.subr.bf16.mxu0 0
        %1596 = vmatpush1.bf16.msra.mxu0 %v1544
        %1597 = vmatprep.subr.bf16.mxu0 0
        %1598 = vmatpush1.bf16.msra.mxu0 %v1545
        %1599 = vmatprep.subr.bf16.mxu0 0
        %1600 = vmatpush1.bf16.msra.mxu0 %v1546
        %1601 = vmatprep.subr.bf16.mxu0 0
        %1602 = vmatpush1.bf16.msra.mxu0 %v1547
        %1603 = vmatprep.subr.bf16.mxu0 0
        %1604 = vmatpush1.bf16.msra.mxu0 %v1548
        %1605 = vmatprep.subr.bf16.mxu0 0
        %1606 = vmatpush1.bf16.msra.mxu0 %v1549
        %1607 = vmatprep.subr.bf16.mxu0 0
        %1608 = vmatpush1.bf16.msra.mxu0 %v1550
        %1609 = vmatprep.subr.bf16.mxu0 0
        %1610 = vmatpush1.bf16.msra.mxu0 %v1551
        %1611 = vmatprep.subr.bf16.mxu0 0
        %1612 = vmatpush1.bf16.msra.mxu0 %v1552
        %1613 = vmatprep.subr.bf16.mxu0 0
        %1614 = vmatpush1.bf16.msra.mxu0 %v1553
        %1615 = vmatprep.subr.bf16.mxu0 0
        %1616 = vmatpush1.bf16.msra.mxu0 %v1554
        %1617 = vmatprep.subr.bf16.mxu0 0
        %1618 = vmatpush1.bf16.msra.mxu0 %v1555
        %1619 = vmatprep.subr.bf16.mxu0 0
        %1620 = vmatpush1.bf16.msra.mxu0 %v1556
        %1621 = vmatprep.mubr.bf16.mxu0 %v1389
        %1622 = vmatmul.mubr.bf16.gmra.mrb[0].mxu0 %v1388
        %v1623 = vpop.f32.mrb[0].mxu0
        %v1624 = vadd.f32 %v1444, %v1623
        %v1625 = vpop.f32.mrb[0].mxu0
        %v1626 = vpop.f32.mrb[0].mxu0
        %v1627 = vadd.f32 %v1444, %v1626
        %v1628 = vpop.f32.mrb[0].mxu0
        %1629 = vdwg.mxu0
        %1630 = vmatprep.subr.bf16.mxu0 0
        %1631 = vmatpush1.bf16.msra.mxu0 %v1557
        %1632 = vmatprep.subr.bf16.mxu0 0
        %1633 = vmatpush1.bf16.msra.mxu0 %v1558
        %1634 = vmatprep.subr.bf16.mxu0 0
        %1635 = vmatpush1.bf16.msra.mxu0 %v1559
        %1636 = vmatprep.subr.bf16.mxu0 0
        %1637 = vmatpush1.bf16.msra.mxu0 %v1560
        %1638 = vmatprep.subr.bf16.mxu0 0
        %1639 = vmatpush1.bf16.msra.mxu0 %v1561
        %1640 = vmatprep.subr.bf16.mxu0 0
        %1641 = vmatpush1.bf16.msra.mxu0 %v1562
        %1642 = vmatprep.subr.bf16.mxu0 0
        %1643 = vmatpush1.bf16.msra.mxu0 %v1563
        %1644 = vmatprep.subr.bf16.mxu0 0
        %1645 = vmatpush1.bf16.msra.mxu0 %v1564
        %1646 = vmatprep.subr.bf16.mxu0 0
        %1647 = vmatpush1.bf16.msra.mxu0 0
        %1648 = vmatprep.subr.bf16.mxu0 0
        %1649 = vmatpush1.bf16.msra.mxu0 0
        %1650 = vmatprep.subr.bf16.mxu0 0
        %1651 = vmatpush1.bf16.msra.mxu0 0
        %1652 = vmatprep.subr.bf16.mxu0 0
        %1653 = vmatpush1.bf16.msra.mxu0 0
        %1654 = vmatprep.subr.bf16.mxu0 0
        %1655 = vmatpush1.bf16.msra.mxu0 0
        %1656 = vmatprep.subr.bf16.mxu0 0
        %1657 = vmatpush1.bf16.msra.mxu0 0
        %1658 = vmatprep.subr.bf16.mxu0 0
        %1659 = vmatpush1.bf16.msra.mxu0 0
        %1660 = vmatprep.subr.bf16.mxu0 0
        %1661 = vmatpush1.bf16.msra.mxu0 0
        %1662 = vmatprep.mubr.bf16.mxu0 0
        %1663 = vmatmul.mubr.bf16.gmra.mrb[0].mxu0 %v1390
        %v1664 = vpop.f32.mrb[0].mxu0
        %v1665 = vadd.f32 %v1624, %v1664
        %v1666 = vpop.f32.mrb[0].mxu0
        %v1667 = vpop.f32.mrb[0].mxu0
        %v1668 = vadd.f32 %v1627, %v1667
        %v1669 = vpop.f32.mrb[0].mxu0
        %1670 = vdwg.mxu0
        %v1671 = vmax.f32 %v1665, 0.0
        %v1672 = vmax.f32 %v1668, 0.0
        %v1673 = vadd.f32 %v1671, %v1069
        %v1674 = vadd.f32 %v1672, %v1072
        %v1675 = vmax.f32 %v1673, 0.0
        %v1676 = vmax.f32 %v1674, 0.0
        %1677 = vst [vmem:[#allocation2] sm:$0xff] %v1675
        %1678 = vst [vmem:[#allocation2 + $0x8] sm:$0xff] %v1676
        %v1679 = vld [vmem:[#allocation2 + $0xf] sm:$0x1]
        %v1680 = vpack.c.bf16 %v1679, %v1679
        %s1681 = scalar_lea.vmem [#allocation6], 128
        %v1682 = vld [vmem:[%s1681] sm:$0xf]
        %v1683 = vld [vmem:[%s1681 + $0x4] sm:$0xf]
        %v1684 = vld [vmem:[%s1681 + $0x8] sm:$0xf]
        %v1685 = vld [vmem:[%s1681 + $0xc] sm:$0xf]
        %v1686 = vld [vmem:[%s1681 + $0x10] sm:$0xf]
        %v1687 = vld [vmem:[%s1681 + $0x14] sm:$0xf]
        %v1688 = vld [vmem:[%s1681 + $0x18] sm:$0xf]
        %v1689 = vld [vmem:[%s1681 + $0x1c] sm:$0xf]
        %v1690 = vld [vmem:[%s1681 + $0x20] sm:$0xf]
        %v1691 = vld [vmem:[%s1681 + $0x24] sm:$0xf]
        %v1692 = vld [vmem:[%s1681 + $0x28] sm:$0xf]
        %v1693 = vld [vmem:[%s1681 + $0x2c] sm:$0xf]
        %v1694 = vld [vmem:[%s1681 + $0x30] sm:$0xf]
        %v1695 = vld [vmem:[%s1681 + $0x34] sm:$0xf]
        %v1696 = vld [vmem:[%s1681 + $0x38] sm:$0xf]
        %v1697 = vld [vmem:[%s1681 + $0x3c] sm:$0xf]
        %v1698 = vld [vmem:[%s3 + $0x6] sm:$0x1]
        %v1715 = vunpack.c.l.b16 %v1682
        %v1716 = vunpack.c.l.b16 %v1683
        %v1717 = vunpack.c.l.b16 %v1684
        %v1718 = vunpack.c.l.b16 %v1685
        %v1719 = vunpack.c.l.b16 %v1686
        %v1720 = vunpack.c.l.b16 %v1687
        %v1721 = vunpack.c.l.b16 %v1688
        %v1722 = vunpack.c.l.b16 %v1689
        %v1723 = vunpack.c.l.b16 %v1690
        %v1724 = vunpack.c.l.b16 %v1691
        %v1725 = vunpack.c.l.b16 %v1692
        %v1726 = vunpack.c.l.b16 %v1693
        %v1727 = vunpack.c.l.b16 %v1694
        %v1728 = vunpack.c.l.b16 %v1695
        %v1729 = vunpack.c.l.b16 %v1696
        %v1730 = vunpack.c.l.b16 %v1697
        %v1731 = vpack.c.b16 %v1716, %v1715
        %v1732 = vpack.c.b16 %v1718, %v1717
        %v1733 = vpack.c.b16 %v1720, %v1719
        %v1734 = vpack.c.b16 %v1722, %v1721
        %v1735 = vpack.c.b16 %v1724, %v1723
        %v1736 = vpack.c.b16 %v1726, %v1725
        %v1737 = vpack.c.b16 %v1728, %v1727
        %v1738 = vpack.c.b16 %v1730, %v1729
        %1747 = vmatprep.subr.bf16.mxu0 0
        %1748 = vmatpush1.bf16.msra.mxu0 %v1731
        %1749 = vmatprep.subr.bf16.mxu0 0
        %1750 = vmatpush1.bf16.msra.mxu0 %v1732
        %1751 = vmatprep.subr.bf16.mxu0 0
        %1752 = vmatpush1.bf16.msra.mxu0 %v1733
        %1753 = vmatprep.subr.bf16.mxu0 0
        %1754 = vmatpush1.bf16.msra.mxu0 %v1734
        %1755 = vmatprep.subr.bf16.mxu0 0
        %1756 = vmatpush1.bf16.msra.mxu0 %v1735
        %1757 = vmatprep.subr.bf16.mxu0 0
        %1758 = vmatpush1.bf16.msra.mxu0 %v1736
        %1759 = vmatprep.subr.bf16.mxu0 0
        %1760 = vmatpush1.bf16.msra.mxu0 %v1737
        %1761 = vmatprep.subr.bf16.mxu0 0
        %1762 = vmatpush1.bf16.msra.mxu0 %v1738
        %1763 = vmatprep.subr.bf16.mxu0 0
        %1764 = vmatpush1.bf16.msra.mxu0 0
        %1765 = vmatprep.subr.bf16.mxu0 0
        %1766 = vmatpush1.bf16.msra.mxu0 0
        %1767 = vmatprep.subr.bf16.mxu0 0
        %1768 = vmatpush1.bf16.msra.mxu0 0
        %1769 = vmatprep.subr.bf16.mxu0 0
        %1770 = vmatpush1.bf16.msra.mxu0 0
        %1771 = vmatprep.subr.bf16.mxu0 0
        %1772 = vmatpush1.bf16.msra.mxu0 0
        %1773 = vmatprep.subr.bf16.mxu0 0
        %1774 = vmatpush1.bf16.msra.mxu0 0
        %1775 = vmatprep.subr.bf16.mxu0 0
        %1776 = vmatpush1.bf16.msra.mxu0 0
        %1777 = vmatprep.subr.bf16.mxu0 0
        %1778 = vmatpush1.bf16.msra.mxu0 0
        %1779 = vmatprep.mubr.bf16.mxu0 0
        %1780 = vmatmul.mubr.bf16.gmra.mrb[0].mxu0 %v1680
        %v1781 = vpop.f32.mrb[0].mxu0
        %v1782 = vadd.f32 %v1698, %v1781
        %v1783 = vpop.f32.mrb[0].mxu0
        %v1784 = vpop.f32.mrb[0].mxu0
        %v1785 = vpop.f32.mrb[0].mxu0
        %1786 = vdwg.mxu0
        %v1787 = vmax.f32 %v1782, 0.0
        %1788 = vst [vmem:[%s220] sm:$0x1] %v1787
        %s1789 = sand.u32 %s117, 1
        %s1790 = scalar_lea.sflag [#allocation5], %s1789
        %s1791 = sand.u32 %s117, 1
        %s1792 = scalar_lea.vmem [#allocation8], %s1791
        // Predicated region
        $region45: #{tpu_custom_call.1} parent=35 // pred_check
          %p1793 = pneg %p127
        $region46: #{tpu_custom_call.1} parent=35 // pred_check_branch
          %1795 = sbr.rel (%p1793) target = $region48
        $region47: #{tpu_custom_call.1} parent=35 // pred_region
          %s1797 = ssub.s32 16, 16
          %1798 = vsyncadd %s1790, %s1797
          %s1799 = smul.addr %s20, 16
          %s1800 = scalar_lea.hbm %s4, %s1799
          %s1802 = sshll.u32 %s1792, 4
          %s1803 = int_to_ptr.vmem [resolvable:$true] %s1802
          %1805 = dma.vmem_to_hbm [thread:$0]  %s1803, 16, %s1800, %s1790
        $region48: #{tpu_custom_call.1} parent=35 // pred_fallthru
          _
      $region36: #{tpu_custom_call.1} parent=5 // pred_fallthru
        _
      %p1806 = scmp.le.s32.totalorder 2, %s15
      // Predicated region
      $region49: #{tpu_custom_call.1} parent=5 // pred_check
        %p1807 = pneg %p1806
      $region50: #{tpu_custom_call.1} parent=5 // pred_check_branch
        %1809 = sbr.rel (%p1807) target = $region52
      $region51: #{tpu_custom_call.1} parent=5 // pred_region
        %s1810 = ssub.s32 %s15, 2
        // Predicated region
        $region53: #{tpu_custom_call.1} parent=51 // pred_check
          %p1811 = pneg %p133
        $region54: #{tpu_custom_call.1} parent=51 // pred_check_branch
          %1813 = sbr.rel (%p1811) target = $region56
        $region55: #{tpu_custom_call.1} parent=51 // pred_region
          %s1814 = sand.u32 %s118, 1
          %s1815 = scalar_lea.sflag [#allocation5], %s1814
          %s1816 = sand.u32 %s118, 1
          %s1817 = scalar_lea.vmem [#allocation8], %s1816
          %1818 = dma.done %s1815, 16
        $region56: #{tpu_custom_call.1} parent=51 // pred_fallthru
          _
      $region52: #{tpu_custom_call.1} parent=5 // pred_fallthru
        _
    $region6: #{tpu_custom_call.1} parent=1 // loop_footer
      %s19 = sadd.s32 1, %s15
    $region7: #{tpu_custom_call.1} parent=1 // loop_footer_branch
      %14 = sbr.rel target = $region3
    $region8: #{tpu_custom_call.1} parent=1 // loop_exit
      _
    %1819 = vsyncpa [#allocation4], 1
    %s1820 = scalar_lea.sflag [#allocation4], 1
    %1821 = vsyncpa %s1820, 1
    %1822 = vsyncpa [#allocation7], 1
    %1823 = vsyncpa [#allocation5], 1
    %s1824 = scalar_lea.sflag [#allocation5], 1
    %1825 = vsyncpa %s1824, 1

// kernel: tpu_custom_call.1
$region0: #{tpu_custom_call.1}
  #allocation0 [shape = 'u32[]', space=smem, size = 0x4, offset = 0x4, fixed_abs, tag = 'smem constant byte address 0x4 - core index']
  #allocation1 [shape = 'u32[144,128]{1,0:T(1,128)}', space=vmem, size = 0x12000, scoped, tag = 'internal scratch']
  #allocation2 [shape = 'f32[16,128]{1,0:T(8,128)}', space=vmem, size = 0x2000, scoped, tag = 'scratch operand']
  %s0 = inlined_call_operand.vmem [shape: f32[32,4], index: 0, kind: input, shape index: {}]
  %s1 = inlined_call_operand.hbm [shape: bf16[4,384,128], index: 1, kind: input, shape index: {}]
  %s2 = inlined_call_operand.hbm [shape: bf16[3,128,128], index: 2, kind: input, shape index: {}]
  %s3 = inlined_call_operand.vmem [shape: f32[7,128], index: 3, kind: input, shape index: {}]
  %s4 = inlined_call_operand.hbm [shape: f32[2,1,128], index: 4, kind: output, shape index: {}]
  %s5 = sld [smem:[#allocation0]]
  $region57: #{tpu_custom_call.1} parent=0
    _
  %s7 = ssub.s32 1, %s5
  %s8 = scalar_select 0, %s7, %s5
  $region1: #{tpu_custom_call.1} parent=0
    #allocation3 [shape = 'u8[393216]{0}', space=vmem, size = 0x60000, scoped, tag = 'input window, operand 1, single buffered']
    #allocation4 [shape = 's32[2]{0}', space=sflag, size = 0x8, scoped, tag = 'scoped memory for tpu_custom_call.1']
    #allocation5 [shape = 's32[2]{0}', space=sflag, size = 0x8, scoped, tag = 'scoped memory for tpu_custom_call.1']
    #allocation6 [shape = 'u8[98304]{0}', space=vmem, size = 0x18000, scoped, tag = 'input window, operand 2, single buffered']
    #allocation7 [shape = 's32[1]{0}', space=sflag, size = 0x4, scoped, tag = 'scoped memory for tpu_custom_call.1']
    #allocation8 [shape = 'u8[1024]{0}', space=vmem, size = 0x400, scoped, tag = 'output window, operand 0']
    %9 = vsyncpa [#allocation4], 0
    %10 = vsyncpa [#allocation7], 0
    %11 = vsyncpa [#allocation5], 0
    %s12 = scalar_lea.sflag [#allocation5], 1
    %13 = vsyncpa %s12, 0
    loop: start=0, step=1, limit=4
    $region2: #{tpu_custom_call.1} parent=1 // loop_pre_header
      _
    $region3: #{tpu_custom_call.1} parent=1 // loop_header
      %s15 = sphi 0, %s19
      %p16 = scmp.ge.s32.totalorder %s15, 4
      %s25 = sphi 0, %s27
      %s28 = sphi 0, %s25
      %s29 = sphi 0, %s28
      %s45 = sphi 0, %s29
      %s49 = sphi 0, %s49
      %s51 = sphi 0, %s49
      %s52 = sphi 0, %s51
      %s66 = sphi 0, %s52
      %s70 = sphi 0, %s70
      %s72 = sphi 0, %s70
      %s73 = sphi 0, %s72
      %s87 = sphi 0, %s73
      %s91 = sphi 0, %s91
      %s93 = sphi 0, %s91
      %s94 = sphi 0, %s93
      %s108 = sphi 0, %s94
      %s114 = sphi 0, %s116
      %s117 = sphi 0, %s114
      %s118 = sphi 0, %s117
      %s134 = sphi 0, %s118
    $region4: #{tpu_custom_call.1} parent=1 // loop_header_branch
      %18 = sbr.rel (%p16) target = $region8
    $region5: #{tpu_custom_call.1} parent=1 // loop_body
      %s20 = ssub.s32 %s15, 1
      %s21 = ssub.s32 %s15, 2
      %s22 = sadd.s32 %s15, 1
      %s23 = ssub.s32 %s15, %s22
      %p24 = scmp.eq.s32.totalorder %s23, 0
      %s26 = sadd.s32 %s25, 1
      %s27 = scalar_select %p24, %s25, %s26
      %p30 = pneg %p24
      %p31 = scmp.eq.s32.totalorder %s15, 1
      %p32 = por %p30, %p31
      %p33 = scmp.ne.s32.totalorder %s25, %s28
      %p34 = scmp.eq.s32.totalorder %s15, 0
      %p35 = por %p33, %p34
      %p36 = scmp.ne.s32.totalorder %s25, %s28
      %p37 = scmp.eq.s32.totalorder %s20, 1
      %p38 = por %p36, %p37
      %p39 = scmp.ne.s32.totalorder %s28, %s29
      %p40 = scmp.eq.s32.totalorder %s20, 0
      %p41 = por %p39, %p40
      %p42 = scmp.ne.s32.totalorder %s28, %s29
      %p43 = scmp.eq.s32.totalorder %s21, 1
      %p44 = por %p42, %p43
      %p46 = scmp.ne.s32.totalorder %s29, %s45
      %p47 = scmp.eq.s32.totalorder %s21, 0
      %p48 = por %p46, %p47
      %s50 = sadd.s32 %s49, 1
      %p53 = scmp.eq.s32.totalorder %s15, 1
      %p54 = scmp.ne.s32.totalorder %s49, %s51
      %p55 = scmp.eq.s32.totalorder %s15, 0
      %p56 = por %p54, %p55
      %p57 = scmp.ne.s32.totalorder %s49, %s51
      %p58 = scmp.eq.s32.totalorder %s20, 1
      %p59 = por %p57, %p58
      %p60 = scmp.ne.s32.totalorder %s51, %s52
      %p61 = scmp.eq.s32.totalorder %s20, 0
      %p62 = por %p60, %p61
      %p63 = scmp.ne.s32.totalorder %s51, %s52
      %p64 = scmp.eq.s32.totalorder %s21, 1
      %p65 = por %p63, %p64
      %p67 = scmp.ne.s32.totalorder %s52, %s66
      %p68 = scmp.eq.s32.totalorder %s21, 0
      %p69 = por %p67, %p68
      %s71 = sadd.s32 %s70, 1
      %p74 = scmp.eq.s32.totalorder %s15, 1
      %p75 = scmp.ne.s32.totalorder %s70, %s72
      %p76 = scmp.eq.s32.totalorder %s15, 0
      %p77 = por %p75, %p76
      %p78 = scmp.ne.s32.totalorder %s70, %s72
      %p79 = scmp.eq.s32.totalorder %s20, 1
      %p80 = por %p78, %p79
      %p81 = scmp.ne.s32.totalorder %s72, %s73
      %p82 = scmp.eq.s32.totalorder %s20, 0
      %p83 = por %p81, %p82
      %p84 = scmp.ne.s32.totalorder %s72, %s73
      %p85 = scmp.eq.s32.totalorder %s21, 1
      %p86 = por %p84, %p85
      %p88 = scmp.ne.s32.totalorder %s73, %s87
      %p89 = scmp.eq.s32.totalorder %s21, 0
      %p90 = por %p88, %p89
      %s92 = sadd.s32 %s91, 1
      %p95 = scmp.eq.s32.totalorder %s15, 1
      %p96 = scmp.ne.s32.totalorder %s91, %s93
      %p97 = scmp.eq.s32.totalorder %s15, 0
      %p98 = por %p96, %p97
      %p99 = scmp.ne.s32.totalorder %s91, %s93
      %p100 = scmp.eq.s32.totalorder %s20, 1
      %p101 = por %p99, %p100
      %p102 = scmp.ne.s32.totalorder %s93, %s94
      %p103 = scmp.eq.s32.totalorder %s20, 0
      %p104 = por %p102, %p103
      %p105 = scmp.ne.s32.totalorder %s93, %s94
      %p106 = scmp.eq.s32.totalorder %s21, 1
      %p107 = por %p105, %p106
      %p109 = scmp.ne.s32.totalorder %s94, %s108
      %p110 = scmp.eq.s32.totalorder %s21, 0
      %p111 = por %p109, %p110
      %s112 = ssub.s32 %s15, %s22
      %p113 = scmp.eq.s32.totalorder %s112, 0
      %s115 = sadd.s32 %s114, 1
      %s116 = scalar_select %p113, %s114, %s115
      %p119 = pneg %p113
      %p120 = scmp.eq.s32.totalorder %s15, 1
      %p121 = por %p119, %p120
      %p122 = scmp.ne.s32.totalorder %s114, %s117
      %p123 = scmp.eq.s32.totalorder %s15, 0
      %p124 = por %p122, %p123
      %p125 = scmp.ne.s32.totalorder %s114, %s117
      %p126 = scmp.eq.s32.totalorder %s20, 1
      %p127 = por %p125, %p126
      %p128 = scmp.ne.s32.totalorder %s117, %s118
      %p129 = scmp.eq.s32.totalorder %s20, 0
      %p130 = por %p128, %p129
      %p131 = scmp.ne.s32.totalorder %s117, %s118
      %p132 = scmp.eq.s32.totalorder %s21, 1
      %p133 = por %p131, %p132
      %p135 = scmp.ne.s32.totalorder %s118, %s134
      %p136 = scmp.eq.s32.totalorder %s21, 0
      %p137 = por %p135, %p136
      %p138 = scmp.le.s32.totalorder 1, %s15
      %p139 = scmp.lt.s32.totalorder %s15, 3
      %p140 = pnand %p138, %p139
      %p141 = pneg %p140
      // Predicated region
      $region9: #{tpu_custom_call.1} parent=5 // pred_check
        _
      $region10: #{tpu_custom_call.1} parent=5 // pred_check_branch
        %143 = sbr.rel (%p140) target = $region12
      $region11: #{tpu_custom_call.1} parent=5 // pred_region
        %s144 = ssub.s32 %s15, 1
        // Predicated region
        $region13: #{tpu_custom_call.1} parent=11 // pred_check
          %p145 = pneg %p62
        $region14: #{tpu_custom_call.1} parent=11 // pred_check_branch
          %147 = sbr.rel (%p145) target = $region16
        $region15: #{tpu_custom_call.1} parent=11 // pred_region
          %s149 = ssub.s32 12288, 12288
          %150 = vsyncadd [#allocation4], %s149
          %s151 = sshll.u32 [#allocation3], 4
          %s152 = int_to_ptr.vmem [resolvable:$true] %s151
          %157 = dma.hbm_to_vmem [thread:$0]  %s1, 12288, %s152, [#allocation4], 64, 64, 4
        $region16: #{tpu_custom_call.1} parent=11 // pred_fallthru
          _
        // Predicated region
        $region17: #{tpu_custom_call.1} parent=11 // pred_check
          %p158 = pneg %p83
        $region18: #{tpu_custom_call.1} parent=11 // pred_check_branch
          %160 = sbr.rel (%p158) target = $region20
        $region19: #{tpu_custom_call.1} parent=11 // pred_region
          %s162 = ssub.s32 3072, 3072
          %163 = vsyncadd [#allocation7], %s162
          %s164 = sshll.u32 [#allocation6], 4
          %s165 = int_to_ptr.vmem [resolvable:$true] %s164
          %170 = dma.hbm_to_vmem [thread:$0]  %s2, 3072, %s165, [#allocation7], 64, 64, 4
        $region20: #{tpu_custom_call.1} parent=11 // pred_fallthru
          _
        // Predicated region
        $region21: #{tpu_custom_call.1} parent=11 // pred_check
          %p171 = pneg %p104
        $region22: #{tpu_custom_call.1} parent=11 // pred_check_branch
          %173 = sbr.rel (%p171) target = $region24
        $region23: #{tpu_custom_call.1} parent=11 // pred_region
          _
        $region24: #{tpu_custom_call.1} parent=11 // pred_fallthru
          _
      $region12: #{tpu_custom_call.1} parent=5 // pred_fallthru
        _
      %p174 = scmp.lt.s32.totalorder %s15, 2
      // Predicated region
      $region25: #{tpu_custom_call.1} parent=5 // pred_check
        %p175 = pneg %p174
      $region26: #{tpu_custom_call.1} parent=5 // pred_check_branch
        %177 = sbr.rel (%p175) target = $region28
      $region27: #{tpu_custom_call.1} parent=5 // pred_region
        // Predicated region
        $region29: #{tpu_custom_call.1} parent=27 // pred_check
          %p178 = pneg %p35
        $region30: #{tpu_custom_call.1} parent=27 // pred_check_branch
          %180 = sbr.rel (%p178) target = $region32
        $region31: #{tpu_custom_call.1} parent=27 // pred_region
          %s181 = smul.u32 2, %s15
          %p182 = scmp.lt.s32.totalorder %s181, 3
          %s183 = scalar_select %p182, %s181, 3
          %s184 = smul.addr %s183, 8
          %s185 = scalar_lea.vmem %s0, %s184
          %s186 = smul.u32 2, %s15
        $region32: #{tpu_custom_call.1} parent=27 // pred_fallthru
          _
      $region28: #{tpu_custom_call.1} parent=5 // pred_fallthru
        _
      %p187 = scmp.le.s32.totalorder 1, %s15
      %p188 = scmp.lt.s32.totalorder %s15, 3
      %p189 = pnand %p187, %p188
      %p190 = pneg %p189
      // Predicated region
      $region33: #{tpu_custom_call.1} parent=5 // pred_check
        _
      $region34: #{tpu_custom_call.1} parent=5 // pred_check_branch
        %192 = sbr.rel (%p189) target = $region36
      $region35: #{tpu_custom_call.1} parent=5 // pred_region
        %s193 = ssub.s32 %s15, 1
        // Predicated region
        $region37: #{tpu_custom_call.1} parent=35 // pred_check
          %p194 = pneg %p62
        $region38: #{tpu_custom_call.1} parent=35 // pred_check_branch
          %196 = sbr.rel (%p194) target = $region40
        $region39: #{tpu_custom_call.1} parent=35 // pred_region
          %197 = dma.done [#allocation4], 12288
        $region40: #{tpu_custom_call.1} parent=35 // pred_fallthru
          _
        // Predicated region
        $region41: #{tpu_custom_call.1} parent=35 // pred_check
          %p198 = pneg %p83
        $region42: #{tpu_custom_call.1} parent=35 // pred_check_branch
          %200 = sbr.rel (%p198) target = $region44
        $region43: #{tpu_custom_call.1} parent=35 // pred_region
          %201 = dma.done [#allocation7], 3072
        $region44: #{tpu_custom_call.1} parent=35 // pred_fallthru
          _
        %s202 = smul.u32 2, %s20
        %p203 = scmp.lt.s32.totalorder %s202, 3
        %s204 = scalar_select %p203, %s202, 3
        %s205 = smul.addr %s204, 8
        %s206 = scalar_lea.vmem %s0, %s205
        %p207 = pneg %p41
        %p208 = pneg %p38
        %p209 = pneg %p62
        %p210 = pneg %p59
        %p211 = pneg %p83
        %p212 = pneg %p80
        %p213 = pneg %p104
        %p214 = pneg %p101
        %p215 = pneg %p130
        %p216 = pneg %p127
        %s217 = sand.u32 %s117, 1
        %s218 = scalar_lea.sflag [#allocation5], %s217
        %s219 = sand.u32 %s117, 1
        %s220 = scalar_lea.vmem [#allocation8], %s219
        %s221 = smul.u32 2, %s20
        %p222 = scmp.lt.s32.totalorder %s221, 3
        %s223 = scalar_select %p222, %s221, 3
        %s224 = smul.addr %s223, 8
        %s225 = scalar_lea.vmem %s0, %s224
        %s226 = smul.u32 2, %s20
        %228 = vst [vmem:[#allocation2] sm:$0xff] 0.0
        %229 = vst [vmem:[#allocation2 + $0x8] sm:$0xff] 0.0
        %v230 = vld [vmem:[%s225] sm:$0xff]
        %v231 = vld [vmem:[%s225 + $0x8] sm:$0xff]
        %vm232 = vcmask 31744
        %233 = vst.msk [vmem:[#allocation2] sm:$0xff] %vm232, %v230
        %234 = vst.msk [vmem:[#allocation2 + $0x8] sm:$0xff] %vm232, %v231
        %v235 = vld [vmem:[#allocation2] sm:$0xff]
        %v236 = vld [vmem:[#allocation2 + $0x8] sm:$0xff]
        %v237 = vlaneseq
        %v238 = vshrl.u32 %v237, 7
        %v239 = vadd.s32 %v238, 8
        %vm240 = vcmp.ge.s32.totalorder %v238, 1
        %vm241 = vcmp.ge.s32.totalorder %v239, 1
        %vm242 = vcmp.ge.s32.totalorder %v238, 2
        %vm243 = vcmp.ge.s32.totalorder %v239, 2
        %v244 = vpack.c.bf16 %v236, %v235
        %v245 = vld [vmem:[#allocation6] sm:$0xf]
        %v246 = vld [vmem:[#allocation6 + $0x4] sm:$0xf]
        %v247 = vld [vmem:[#allocation6 + $0x8] sm:$0xf]
        %v248 = vld [vmem:[#allocation6 + $0xc] sm:$0xf]
        %v249 = vld [vmem:[#allocation6 + $0x10] sm:$0xf]
        %v250 = vld [vmem:[#allocation6 + $0x14] sm:$0xf]
        %v251 = vld [vmem:[#allocation6 + $0x18] sm:$0xf]
        %v252 = vld [vmem:[#allocation6 + $0x1c] sm:$0xf]
        %v253 = vld [vmem:[#allocation6 + $0x20] sm:$0xf]
        %v254 = vld [vmem:[#allocation6 + $0x24] sm:$0xf]
        %v255 = vld [vmem:[#allocation6 + $0x28] sm:$0xf]
        %v256 = vld [vmem:[#allocation6 + $0x2c] sm:$0xf]
        %v257 = vld [vmem:[#allocation6 + $0x30] sm:$0xf]
        %v258 = vld [vmem:[#allocation6 + $0x34] sm:$0xf]
        %v259 = vld [vmem:[#allocation6 + $0x38] sm:$0xf]
        %v260 = vld [vmem:[#allocation6 + $0x3c] sm:$0xf]
        %v261 = vld [vmem:[%s3 + $0x2] sm:$0x1]
        %v262 = vlaneseq
        %v263 = vshrl.u32 %v262, 7
        %v264 = vsub.s32 0, %v263
        %v265 = vrot.slane %v261, %v264
        %v282 = vunpack.c.l.b16 %v245
        %v283 = vunpack.c.l.b16 %v246
        %v284 = vunpack.c.l.b16 %v247
        %v285 = vunpack.c.l.b16 %v248
        %v286 = vunpack.c.l.b16 %v249
        %v287 = vunpack.c.l.b16 %v250
        %v288 = vunpack.c.l.b16 %v251
        %v289 = vunpack.c.l.b16 %v252
        %v290 = vunpack.c.l.b16 %v253
        %v291 = vunpack.c.l.b16 %v254
        %v292 = vunpack.c.l.b16 %v255
        %v293 = vunpack.c.l.b16 %v256
        %v294 = vunpack.c.l.b16 %v257
        %v295 = vunpack.c.l.b16 %v258
        %v296 = vunpack.c.l.b16 %v259
        %v297 = vunpack.c.l.b16 %v260
        %v298 = vpack.c.b16 %v283, %v282
        %v299 = vpack.c.b16 %v285, %v284
        %v300 = vpack.c.b16 %v287, %v286
        %v301 = vpack.c.b16 %v289, %v288
        %v302 = vpack.c.b16 %v291, %v290
        %v303 = vpack.c.b16 %v293, %v292
        %v304 = vpack.c.b16 %v295, %v294
        %v305 = vpack.c.b16 %v297, %v296
        %314 = vmatprep.subr.bf16.mxu0 0
        %315 = vmatpush1.bf16.msra.mxu0 %v298
        %316 = vmatprep.subr.bf16.mxu0 0
        %317 = vmatpush1.bf16.msra.mxu0 %v299
        %318 = vmatprep.subr.bf16.mxu0 0
        %319 = vmatpush1.bf16.msra.mxu0 %v300
        %320 = vmatprep.subr.bf16.mxu0 0
        %321 = vmatpush1.bf16.msra.mxu0 %v301
        %322 = vmatprep.subr.bf16.mxu0 0
        %323 = vmatpush1.bf16.msra.mxu0 %v302
        %324 = vmatprep.subr.bf16.mxu0 0
        %325 = vmatpush1.bf16.msra.mxu0 %v303
        %326 = vmatprep.subr.bf16.mxu0 0
        %327 = vmatpush1.bf16.msra.mxu0 %v304
        %328 = vmatprep.subr.bf16.mxu0 0
        %329 = vmatpush1.bf16.msra.mxu0 %v305
        %330 = vmatprep.subr.bf16.mxu0 0
        %331 = vmatpush1.bf16.msra.mxu0 0
        %332 = vmatprep.subr.bf16.mxu0 0
        %333 = vmatpush1.bf16.msra.mxu0 0
        %334 = vmatprep.subr.bf16.mxu0 0
        %335 = vmatpush1.bf16.msra.mxu0 0
        %336 = vmatprep.subr.bf16.mxu0 0
        %337 = vmatpush1.bf16.msra.mxu0 0
        %338 = vmatprep.subr.bf16.mxu0 0
        %339 = vmatpush1.bf16.msra.mxu0 0
        %340 = vmatprep.subr.bf16.mxu0 0
        %341 = vmatpush1.bf16.msra.mxu0 0
        %342 = vmatprep.subr.bf16.mxu0 0
        %343 = vmatpush1.bf16.msra.mxu0 0
        %344 = vmatprep.subr.bf16.mxu0 0
        %345 = vmatpush1.bf16.msra.mxu0 0
        %346 = vmatprep.mubr.bf16.mxu0 0
        %347 = vmatmul.mubr.bf16.gmra.mrb[0].mxu0 %v244
        %v348 = vpop.f32.mrb[0].mxu0
        %v349 = vadd.f32 %v265, %v348
        %v350 = vpop.f32.mrb[0].mxu0
        %v351 = vpop.f32.mrb[0].mxu0
        %v352 = vadd.f32 %v265, %v351
        %v353 = vpop.f32.mrb[0].mxu0
        %354 = vdwg.mxu0
        %v355 = vrot.slane %v235, 7
        %v356 = vrot.slane %v236, 7
        %vm357 = vcmp.lt.s32.totalorder %v238, 1
        %v358 = vsel %vm357, %v355, %v356
        %v359 = vsel %vm357, %v356, %v355
        %v360 = vsel %vm240, 1, 0
        %v361 = vsel %vm241, 1, 0
        %vm362 = vcmp.eq.s32.totalorder %v360, 1
        %vm363 = vcmp.eq.s32.totalorder %v361, 1
        %v364 = vsel %vm362, %v359, 0.0
        %v365 = vsel %vm363, %v358, 0.0
        %v366 = vrot.slane %v235, 6
        %v367 = vrot.slane %v236, 6
        %vm368 = vcmp.lt.s32.totalorder %v238, 2
        %v369 = vsel %vm368, %v366, %v367
        %v370 = vsel %vm368, %v367, %v366
        %v371 = vsel %vm242, 1, 0
        %v372 = vsel %vm243, 1, 0
        %vm373 = vcmp.eq.s32.totalorder %v371, 1
        %vm374 = vcmp.eq.s32.totalorder %v372, 1
        %v375 = vsel %vm373, %v370, 0.0
        %v376 = vsel %vm374, %v369, 0.0
        %v377 = vpack.c.bf16 %v365, %v364
        %v378 = vpack.c.bf16 %v376, %v375
        %v379 = vld [vmem:[#allocation3] sm:$0xf]
        %v380 = vld [vmem:[#allocation3 + $0x4] sm:$0xf]
        %v381 = vld [vmem:[#allocation3 + $0x8] sm:$0xf]
        %v382 = vld [vmem:[#allocation3 + $0xc] sm:$0xf]
        %v383 = vld [vmem:[#allocation3 + $0x10] sm:$0xf]
        %v384 = vld [vmem:[#allocation3 + $0x14] sm:$0xf]
        %v385 = vld [vmem:[#allocation3 + $0x18] sm:$0xf]
        %v386 = vld [vmem:[#allocation3 + $0x1c] sm:$0xf]
        %v387 = vld [vmem:[#allocation3 + $0x20] sm:$0xf]
        %v388 = vld [vmem:[#allocation3 + $0x24] sm:$0xf]
        %v389 = vld [vmem:[#allocation3 + $0x28] sm:$0xf]
        %v390 = vld [vmem:[#allocation3 + $0x2c] sm:$0xf]
        %v391 = vld [vmem:[#allocation3 + $0x30] sm:$0xf]
        %v392 = vld [vmem:[#allocation3 + $0x34] sm:$0xf]
        %v393 = vld [vmem:[#allocation3 + $0x38] sm:$0xf]
        %v394 = vld [vmem:[#allocation3 + $0x3c] sm:$0xf]
        %v395 = vld [vmem:[#allocation3 + $0x40] sm:$0xf]
        %v396 = vld [vmem:[#allocation3 + $0x44] sm:$0xf]
        %v397 = vld [vmem:[#allocation3 + $0x48] sm:$0xf]
        %v398 = vld [vmem:[#allocation3 + $0x4c] sm:$0xf]
        %v399 = vld [vmem:[#allocation3 + $0x50] sm:$0xf]
        %v400 = vld [vmem:[#allocation3 + $0x54] sm:$0xf]
        %v401 = vld [vmem:[#allocation3 + $0x58] sm:$0xf]
        %v402 = vld [vmem:[#allocation3 + $0x5c] sm:$0xf]
        %v403 = vld [vmem:[#allocation3 + $0x60] sm:$0xf]
        %v404 = vld [vmem:[#allocation3 + $0x64] sm:$0xf]
        %v405 = vld [vmem:[#allocation3 + $0x68] sm:$0xf]
        %v406 = vld [vmem:[#allocation3 + $0x6c] sm:$0xf]
        %v407 = vld [vmem:[#allocation3 + $0x70] sm:$0xf]
        %v408 = vld [vmem:[#allocation3 + $0x74] sm:$0xf]
        %v409 = vld [vmem:[#allocation3 + $0x78] sm:$0xf]
        %v410 = vld [vmem:[#allocation3 + $0x7c] sm:$0xf]
        %v411 = vld [vmem:[#allocation3 + $0x80] sm:$0xf]
        %v412 = vld [vmem:[#allocation3 + $0x84] sm:$0xf]
        %v413 = vld [vmem:[#allocation3 + $0x88] sm:$0xf]
        %v414 = vld [vmem:[#allocation3 + $0x8c] sm:$0xf]
        %v415 = vld [vmem:[#allocation3 + $0x90] sm:$0xf]
        %v416 = vld [vmem:[#allocation3 + $0x94] sm:$0xf]
        %v417 = vld [vmem:[#allocation3 + $0x98] sm:$0xf]
        %v418 = vld [vmem:[#allocation3 + $0x9c] sm:$0xf]
        %v419 = vld [vmem:[#allocation3 + $0xa0] sm:$0xf]
        %v420 = vld [vmem:[#allocation3 + $0xa4] sm:$0xf]
        %v421 = vld [vmem:[#allocation3 + $0xa8] sm:$0xf]
        %v422 = vld [vmem:[#allocation3 + $0xac] sm:$0xf]
        %v423 = vld [vmem:[#allocation3 + $0xb0] sm:$0xf]
        %v424 = vld [vmem:[#allocation3 + $0xb4] sm:$0xf]
        %v425 = vld [vmem:[#allocation3 + $0xb8] sm:$0xf]
        %v426 = vld [vmem:[#allocation3 + $0xbc] sm:$0xf]
        %v427 = vld [vmem:[%s3] sm:$0x1]
        %v428 = vlaneseq
        %v429 = vshrl.u32 %v428, 7
        %v430 = vsub.s32 0, %v429
        %v431 = vrot.slane %v427, %v430
        %v480 = vunpack.c.l.b16 %v379
        %v481 = vunpack.c.l.b16 %v380
        %v482 = vunpack.c.l.b16 %v381
        %v483 = vunpack.c.l.b16 %v382
        %v484 = vunpack.c.l.b16 %v383
        %v485 = vunpack.c.l.b16 %v384
        %v486 = vunpack.c.l.b16 %v385
        %v487 = vunpack.c.l.b16 %v386
        %v488 = vunpack.c.l.b16 %v387
        %v489 = vunpack.c.l.b16 %v388
        %v490 = vunpack.c.l.b16 %v389
        %v491 = vunpack.c.l.b16 %v390
        %v492 = vunpack.c.l.b16 %v391
        %v493 = vunpack.c.l.b16 %v392
        %v494 = vunpack.c.l.b16 %v393
        %v495 = vunpack.c.l.b16 %v394
        %v496 = vunpack.c.l.b16 %v395
        %v497 = vunpack.c.l.b16 %v396
        %v498 = vunpack.c.l.b16 %v397
        %v499 = vunpack.c.l.b16 %v398
        %v500 = vunpack.c.l.b16 %v399
        %v501 = vunpack.c.l.b16 %v400
        %v502 = vunpack.c.l.b16 %v401
        %v503 = vunpack.c.l.b16 %v402
        %v504 = vunpack.c.l.b16 %v403
        %v505 = vunpack.c.l.b16 %v404
        %v506 = vunpack.c.l.b16 %v405
        %v507 = vunpack.c.l.b16 %v406
        %v508 = vunpack.c.l.b16 %v407
        %v509 = vunpack.c.l.b16 %v408
        %v510 = vunpack.c.l.b16 %v409
        %v511 = vunpack.c.l.b16 %v410
        %v512 = vunpack.c.l.b16 %v411
        %v513 = vunpack.c.l.b16 %v412
        %v514 = vunpack.c.l.b16 %v413
        %v515 = vunpack.c.l.b16 %v414
        %v516 = vunpack.c.l.b16 %v415
        %v517 = vunpack.c.l.b16 %v416
        %v518 = vunpack.c.l.b16 %v417
        %v519 = vunpack.c.l.b16 %v418
        %v520 = vunpack.c.l.b16 %v419
        %v521 = vunpack.c.l.b16 %v420
        %v522 = vunpack.c.l.b16 %v421
        %v523 = vunpack.c.l.b16 %v422
        %v524 = vunpack.c.l.b16 %v423
        %v525 = vunpack.c.l.b16 %v424
        %v526 = vunpack.c.l.b16 %v425
        %v527 = vunpack.c.l.b16 %v426
        %v528 = vpack.c.b16 %v481, %v480
        %v529 = vpack.c.b16 %v483, %v482
        %v530 = vpack.c.b16 %v485, %v484
        %v531 = vpack.c.b16 %v487, %v486
        %v532 = vpack.c.b16 %v489, %v488
        %v533 = vpack.c.b16 %v491, %v490
        %v534 = vpack.c.b16 %v493, %v492
        %v535 = vpack.c.b16 %v495, %v494
        %v536 = vpack.c.b16 %v497, %v496
        %v537 = vpack.c.b16 %v499, %v498
        %v538 = vpack.c.b16 %v501, %v500
        %v539 = vpack.c.b16 %v503, %v502
        %v540 = vpack.c.b16 %v505, %v504
        %v541 = vpack.c.b16 %v507, %v506
        %v542 = vpack.c.b16 %v509, %v508
        %v543 = vpack.c.b16 %v511, %v510
        %v544 = vpack.c.b16 %v513, %v512
        %v545 = vpack.c.b16 %v515, %v514
        %v546 = vpack.c.b16 %v517, %v516
        %v547 = vpack.c.b16 %v519, %v518
        %v548 = vpack.c.b16 %v521, %v520
        %v549 = vpack.c.b16 %v523, %v522
        %v550 = vpack.c.b16 %v525, %v524
        %v551 = vpack.c.b16 %v527, %v526
        %576 = vmatprep.subr.bf16.mxu0 0
        %577 = vmatpush1.bf16.msra.mxu0 %v528
        %578 = vmatprep.subr.bf16.mxu0 0
        %579 = vmatpush1.bf16.msra.mxu0 %v529
        %580 = vmatprep.subr.bf16.mxu0 0
        %581 = vmatpush1.bf16.msra.mxu0 %v530
        %582 = vmatprep.subr.bf16.mxu0 0
        %583 = vmatpush1.bf16.msra.mxu0 %v531
        %584 = vmatprep.subr.bf16.mxu0 0
        %585 = vmatpush1.bf16.msra.mxu0 %v532
        %586 = vmatprep.subr.bf16.mxu0 0
        %587 = vmatpush1.bf16.msra.mxu0 %v533
        %588 = vmatprep.subr.bf16.mxu0 0
        %589 = vmatpush1.bf16.msra.mxu0 %v534
        %590 = vmatprep.subr.bf16.mxu0 0
        %591 = vmatpush1.bf16.msra.mxu0 %v535
        %592 = vmatprep.subr.bf16.mxu0 0
        %593 = vmatpush1.bf16.msra.mxu0 %v536
        %594 = vmatprep.subr.bf16.mxu0 0
        %595 = vmatpush1.bf16.msra.mxu0 %v537
        %596 = vmatprep.subr.bf16.mxu0 0
        %597 = vmatpush1.bf16.msra.mxu0 %v538
        %598 = vmatprep.subr.bf16.mxu0 0
        %599 = vmatpush1.bf16.msra.mxu0 %v539
        %600 = vmatprep.subr.bf16.mxu0 0
        %601 = vmatpush1.bf16.msra.mxu0 %v540
        %602 = vmatprep.subr.bf16.mxu0 0
        %603 = vmatpush1.bf16.msra.mxu0 %v541
        %604 = vmatprep.subr.bf16.mxu0 0
        %605 = vmatpush1.bf16.msra.mxu0 %v542
        %606 = vmatprep.subr.bf16.mxu0 0
        %607 = vmatpush1.bf16.msra.mxu0 %v543
        %608 = vmatprep.mubr.bf16.mxu0 %v377
        %609 = vmatmul.mubr.bf16.gmra.mrb[0].mxu0 %v244
        %v610 = vpop.f32.mrb[0].mxu0
        %v611 = vadd.f32 %v431, %v610
        %v612 = vpop.f32.mrb[0].mxu0
        %v613 = vpop.f32.mrb[0].mxu0
        %v614 = vadd.f32 %v431, %v613
        %v615 = vpop.f32.mrb[0].mxu0
        %616 = vdwg.mxu0
        %617 = vmatprep.subr.bf16.mxu0 0
        %618 = vmatpush1.bf16.msra.mxu0 %v544
        %619 = vmatprep.subr.bf16.mxu0 0
        %620 = vmatpush1.bf16.msra.mxu0 %v545
        %621 = vmatprep.subr.bf16.mxu0 0
        %622 = vmatpush1.bf16.msra.mxu0 %v546
        %623 = vmatprep.subr.bf16.mxu0 0
        %624 = vmatpush1.bf16.msra.mxu0 %v547
        %625 = vmatprep.subr.bf16.mxu0 0
        %626 = vmatpush1.bf16.msra.mxu0 %v548
        %627 = vmatprep.subr.bf16.mxu0 0
        %628 = vmatpush1.bf16.msra.mxu0 %v549
        %629 = vmatprep.subr.bf16.mxu0 0
        %630 = vmatpush1.bf16.msra.mxu0 %v550
        %631 = vmatprep.subr.bf16.mxu0 0
        %632 = vmatpush1.bf16.msra.mxu0 %v551
        %633 = vmatprep.subr.bf16.mxu0 0
        %634 = vmatpush1.bf16.msra.mxu0 0
        %635 = vmatprep.subr.bf16.mxu0 0
        %636 = vmatpush1.bf16.msra.mxu0 0
        %637 = vmatprep.subr.bf16.mxu0 0
        %638 = vmatpush1.bf16.msra.mxu0 0
        %639 = vmatprep.subr.bf16.mxu0 0
        %640 = vmatpush1.bf16.msra.mxu0 0
        %641 = vmatprep.subr.bf16.mxu0 0
        %642 = vmatpush1.bf16.msra.mxu0 0
        %643 = vmatprep.subr.bf16.mxu0 0
        %644 = vmatpush1.bf16.msra.mxu0 0
        %645 = vmatprep.subr.bf16.mxu0 0
        %646 = vmatpush1.bf16.msra.mxu0 0
        %647 = vmatprep.subr.bf16.mxu0 0
        %648 = vmatpush1.bf16.msra.mxu0 0
        %649 = vmatprep.mubr.bf16.mxu0 0
        %650 = vmatmul.mubr.bf16.gmra.mrb[0].mxu0 %v378
        %v651 = vpop.f32.mrb[0].mxu0
        %v652 = vadd.f32 %v611, %v651
        %v653 = vpop.f32.mrb[0].mxu0
        %v654 = vpop.f32.mrb[0].mxu0
        %v655 = vadd.f32 %v614, %v654
        %v656 = vpop.f32.mrb[0].mxu0
        %657 = vdwg.mxu0
        %v658 = vmax.f32 %v652, 0.0
        %v659 = vmax.f32 %v655, 0.0
        %v660 = vrot.slane %v658, 7
        %v661 = vrot.slane %v659, 7
        %v662 = vsel %vm357, %v660, %v661
        %v663 = vsel %vm357, %v661, %v660
        %v664 = vsel %vm362, %v663, 0.0
        %v665 = vsel %vm363, %v662, 0.0
        %v666 = vrot.slane %v658, 6
        %v667 = vrot.slane %v659, 6
        %v668 = vsel %vm368, %v666, %v667
        %v669 = vsel %vm368, %v667, %v666
        %v670 = vsel %vm373, %v669, 0.0
        %v671 = vsel %vm374, %v668, 0.0
        %v672 = vpack.c.bf16 %v659, %v658
        %v673 = vpack.c.bf16 %v665, %v664
        %v674 = vpack.c.bf16 %v671, %v670
        %s675 = scalar_lea.vmem [#allocation3], 192
        %v676 = vld [vmem:[%s675] sm:$0xf]
        %v677 = vld [vmem:[%s675 + $0x4] sm:$0xf]
        %v678 = vld [vmem:[%s675 + $0x8] sm:$0xf]
        %v679 = vld [vmem:[%s675 + $0xc] sm:$0xf]
        %v680 = vld [vmem:[%s675 + $0x10] sm:$0xf]
        %v681 = vld [vmem:[%s675 + $0x14] sm:$0xf]
        %v682 = vld [vmem:[%s675 + $0x18] sm:$0xf]
        %v683 = vld [vmem:[%s675 + $0x1c] sm:$0xf]
        %v684 = vld [vmem:[%s675 + $0x20] sm:$0xf]
        %v685 = vld [vmem:[%s675 + $0x24] sm:$0xf]
        %v686 = vld [vmem:[%s675 + $0x28] sm:$0xf]
        %v687 = vld [vmem:[%s675 + $0x2c] sm:$0xf]
        %v688 = vld [vmem:[%s675 + $0x30] sm:$0xf]
        %v689 = vld [vmem:[%s675 + $0x34] sm:$0xf]
        %v690 = vld [vmem:[%s675 + $0x38] sm:$0xf]
        %v691 = vld [vmem:[%s675 + $0x3c] sm:$0xf]
        %v692 = vld [vmem:[%s675 + $0x40] sm:$0xf]
        %v693 = vld [vmem:[%s675 + $0x44] sm:$0xf]
        %v694 = vld [vmem:[%s675 + $0x48] sm:$0xf]
        %v695 = vld [vmem:[%s675 + $0x4c] sm:$0xf]
        %v696 = vld [vmem:[%s675 + $0x50] sm:$0xf]
        %v697 = vld [vmem:[%s675 + $0x54] sm:$0xf]
        %v698 = vld [vmem:[%s675 + $0x58] sm:$0xf]
        %v699 = vld [vmem:[%s675 + $0x5c] sm:$0xf]
        %v700 = vld [vmem:[%s675 + $0x60] sm:$0xf]
        %v701 = vld [vmem:[%s675 + $0x64] sm:$0xf]
        %v702 = vld [vmem:[%s675 + $0x68] sm:$0xf]
        %v703 = vld [vmem:[%s675 + $0x6c] sm:$0xf]
        %v704 = vld [vmem:[%s675 + $0x70] sm:$0xf]
        %v705 = vld [vmem:[%s675 + $0x74] sm:$0xf]
        %v706 = vld [vmem:[%s675 + $0x78] sm:$0xf]
        %v707 = vld [vmem:[%s675 + $0x7c] sm:$0xf]
        %v708 = vld [vmem:[%s675 + $0x80] sm:$0xf]
        %v709 = vld [vmem:[%s675 + $0x84] sm:$0xf]
        %v710 = vld [vmem:[%s675 + $0x88] sm:$0xf]
        %v711 = vld [vmem:[%s675 + $0x8c] sm:$0xf]
        %v712 = vld [vmem:[%s675 + $0x90] sm:$0xf]
        %v713 = vld [vmem:[%s675 + $0x94] sm:$0xf]
        %v714 = vld [vmem:[%s675 + $0x98] sm:$0xf]
        %v715 = vld [vmem:[%s675 + $0x9c] sm:$0xf]
        %v716 = vld [vmem:[%s675 + $0xa0] sm:$0xf]
        %v717 = vld [vmem:[%s675 + $0xa4] sm:$0xf]
        %v718 = vld [vmem:[%s675 + $0xa8] sm:$0xf]
        %v719 = vld [vmem:[%s675 + $0xac] sm:$0xf]
        %v720 = vld [vmem:[%s675 + $0xb0] sm:$0xf]
        %v721 = vld [vmem:[%s675 + $0xb4] sm:$0xf]
        %v722 = vld [vmem:[%s675 + $0xb8] sm:$0xf]
        %v723 = vld [vmem:[%s675 + $0xbc] sm:$0xf]
        %v724 = vld [vmem:[%s3 + $0x1] sm:$0x1]
        %v725 = vlaneseq
        %v726 = vshrl.u32 %v725, 7
        %v727 = vsub.s32 0, %v726
        %v728 = vrot.slane %v724, %v727
        %v777 = vunpack.c.l.b16 %v676
        %v778 = vunpack.c.l.b16 %v677
        %v779 = vunpack.c.l.b16 %v678
        %v780 = vunpack.c.l.b16 %v679
        %v781 = vunpack.c.l.b16 %v680
        %v782 = vunpack.c.l.b16 %v681
        %v783 = vunpack.c.l.b16 %v682
        %v784 = vunpack.c.l.b16 %v683
        %v785 = vunpack.c.l.b16 %v684
        %v786 = vunpack.c.l.b16 %v685
        %v787 = vunpack.c.l.b16 %v686
        %v788 = vunpack.c.l.b16 %v687
        %v789 = vunpack.c.l.b16 %v688
        %v790 = vunpack.c.l.b16 %v689
        %v791 = vunpack.c.l.b16 %v690
        %v792 = vunpack.c.l.b16 %v691
        %v793 = vunpack.c.l.b16 %v692
        %v794 = vunpack.c.l.b16 %v693
        %v795 = vunpack.c.l.b16 %v694
        %v796 = vunpack.c.l.b16 %v695
        %v797 = vunpack.c.l.b16 %v696
        %v798 = vunpack.c.l.b16 %v697
        %v799 = vunpack.c.l.b16 %v698
        %v800 = vunpack.c.l.b16 %v699
        %v801 = vunpack.c.l.b16 %v700
        %v802 = vunpack.c.l.b16 %v701
        %v803 = vunpack.c.l.b16 %v702
        %v804 = vunpack.c.l.b16 %v703
        %v805 = vunpack.c.l.b16 %v704
        %v806 = vunpack.c.l.b16 %v705
        %v807 = vunpack.c.l.b16 %v706
        %v808 = vunpack.c.l.b16 %v707
        %v809 = vunpack.c.l.b16 %v708
        %v810 = vunpack.c.l.b16 %v709
        %v811 = vunpack.c.l.b16 %v710
        %v812 = vunpack.c.l.b16 %v711
        %v813 = vunpack.c.l.b16 %v712
        %v814 = vunpack.c.l.b16 %v713
        %v815 = vunpack.c.l.b16 %v714
        %v816 = vunpack.c.l.b16 %v715
        %v817 = vunpack.c.l.b16 %v716
        %v818 = vunpack.c.l.b16 %v717
        %v819 = vunpack.c.l.b16 %v718
        %v820 = vunpack.c.l.b16 %v719
        %v821 = vunpack.c.l.b16 %v720
        %v822 = vunpack.c.l.b16 %v721
        %v823 = vunpack.c.l.b16 %v722
        %v824 = vunpack.c.l.b16 %v723
        %v825 = vpack.c.b16 %v778, %v777
        %v826 = vpack.c.b16 %v780, %v779
        %v827 = vpack.c.b16 %v782, %v781
        %v828 = vpack.c.b16 %v784, %v783
        %v829 = vpack.c.b16 %v786, %v785
        %v830 = vpack.c.b16 %v788, %v787
        %v831 = vpack.c.b16 %v790, %v789
        %v832 = vpack.c.b16 %v792, %v791
        %v833 = vpack.c.b16 %v794, %v793
        %v834 = vpack.c.b16 %v796, %v795
        %v835 = vpack.c.b16 %v798, %v797
        %v836 = vpack.c.b16 %v800, %v799
        %v837 = vpack.c.b16 %v802, %v801
        %v838 = vpack.c.b16 %v804, %v803
        %v839 = vpack.c.b16 %v806, %v805
        %v840 = vpack.c.b16 %v808, %v807
        %v841 = vpack.c.b16 %v810, %v809
        %v842 = vpack.c.b16 %v812, %v811
        %v843 = vpack.c.b16 %v814, %v813
        %v844 = vpack.c.b16 %v816, %v815
        %v845 = vpack.c.b16 %v818, %v817
        %v846 = vpack.c.b16 %v820, %v819
        %v847 = vpack.c.b16 %v822, %v821
        %v848 = vpack.c.b16 %v824, %v823
        %873 = vmatprep.subr.bf16.mxu0 0
        %874 = vmatpush1.bf16.msra.mxu0 %v825
        %875 = vmatprep.subr.bf16.mxu0 0
        %876 = vmatpush1.bf16.msra.mxu0 %v826
        %877 = vmatprep.subr.bf16.mxu0 0
        %878 = vmatpush1.bf16.msra.mxu0 %v827
        %879 = vmatprep.subr.bf16.mxu0 0
        %880 = vmatpush1.bf16.msra.mxu0 %v828
        %881 = vmatprep.subr.bf16.mxu0 0
        %882 = vmatpush1.bf16.msra.mxu0 %v829
        %883 = vmatprep.subr.bf16.mxu0 0
        %884 = vmatpush1.bf16.msra.mxu0 %v830
        %885 = vmatprep.subr.bf16.mxu0 0
        %886 = vmatpush1.bf16.msra.mxu0 %v831
        %887 = vmatprep.subr.bf16.mxu0 0
        %888 = vmatpush1.bf16.msra.mxu0 %v832
        %889 = vmatprep.subr.bf16.mxu0 0
        %890 = vmatpush1.bf16.msra.mxu0 %v833
        %891 = vmatprep.subr.bf16.mxu0 0
        %892 = vmatpush1.bf16.msra.mxu0 %v834
        %893 = vmatprep.subr.bf16.mxu0 0
        %894 = vmatpush1.bf16.msra.mxu0 %v835
        %895 = vmatprep.subr.bf16.mxu0 0
        %896 = vmatpush1.bf16.msra.mxu0 %v836
        %897 = vmatprep.subr.bf16.mxu0 0
        %898 = vmatpush1.bf16.msra.mxu0 %v837
        %899 = vmatprep.subr.bf16.mxu0 0
        %900 = vmatpush1.bf16.msra.mxu0 %v838
        %901 = vmatprep.subr.bf16.mxu0 0
        %902 = vmatpush1.bf16.msra.mxu0 %v839
        %903 = vmatprep.subr.bf16.mxu0 0
        %904 = vmatpush1.bf16.msra.mxu0 %v840
        %905 = vmatprep.mubr.bf16.mxu0 %v673
        %906 = vmatmul.mubr.bf16.gmra.mrb[0].mxu0 %v672
        %v907 = vpop.f32.mrb[0].mxu0
        %v908 = vadd.f32 %v728, %v907
        %v909 = vpop.f32.mrb[0].mxu0
        %v910 = vpop.f32.mrb[0].mxu0
        %v911 = vadd.f32 %v728, %v910
        %v912 = vpop.f32.mrb[0].mxu0
        %913 = vdwg.mxu0
        %914 = vmatprep.subr.bf16.mxu0 0
        %915 = vmatpush1.bf16.msra.mxu0 %v841
        %916 = vmatprep.subr.bf16.mxu0 0
        %917 = vmatpush1.bf16.msra.mxu0 %v842
        %918 = vmatprep.subr.bf16.mxu0 0
        %919 = vmatpush1.bf16.msra.mxu0 %v843
        %920 = vmatprep.subr.bf16.mxu0 0
        %921 = vmatpush1.bf16.msra.mxu0 %v844
        %922 = vmatprep.subr.bf16.mxu0 0
        %923 = vmatpush1.bf16.msra.mxu0 %v845
        %924 = vmatprep.subr.bf16.mxu0 0
        %925 = vmatpush1.bf16.msra.mxu0 %v846
        %926 = vmatprep.subr.bf16.mxu0 0
        %927 = vmatpush1.bf16.msra.mxu0 %v847
        %928 = vmatprep.subr.bf16.mxu0 0
        %929 = vmatpush1.bf16.msra.mxu0 %v848
        %930 = vmatprep.subr.bf16.mxu0 0
        %931 = vmatpush1.bf16.msra.mxu0 0
        %932 = vmatprep.subr.bf16.mxu0 0
        %933 = vmatpush1.bf16.msra.mxu0 0
        %934 = vmatprep.subr.bf16.mxu0 0
        %935 = vmatpush1.bf16.msra.mxu0 0
        %936 = vmatprep.subr.bf16.mxu0 0
        %937 = vmatpush1.bf16.msra.mxu0 0
        %938 = vmatprep.subr.bf16.mxu0 0
        %939 = vmatpush1.bf16.msra.mxu0 0
        %940 = vmatprep.subr.bf16.mxu0 0
        %941 = vmatpush1.bf16.msra.mxu0 0
        %942 = vmatprep.subr.bf16.mxu0 0
        %943 = vmatpush1.bf16.msra.mxu0 0
        %944 = vmatprep.subr.bf16.mxu0 0
        %945 = vmatpush1.bf16.msra.mxu0 0
        %946 = vmatprep.mubr.bf16.mxu0 0
        %947 = vmatmul.mubr.bf16.gmra.mrb[0].mxu0 %v674
        %v948 = vpop.f32.mrb[0].mxu0
        %v949 = vadd.f32 %v908, %v948
        %v950 = vpop.f32.mrb[0].mxu0
        %v951 = vpop.f32.mrb[0].mxu0
        %v952 = vadd.f32 %v911, %v951
        %v953 = vpop.f32.mrb[0].mxu0
        %954 = vdwg.mxu0
        %v955 = vmax.f32 %v949, 0.0
        %v956 = vmax.f32 %v952, 0.0
        %v957 = vadd.f32 %v955, %v349
        %v958 = vadd.f32 %v956, %v352
        %v959 = vmax.f32 %v957, 0.0
        %v960 = vmax.f32 %v958, 0.0
        %vm961 = vcmp.ge.s32.totalorder %v238, 4
        %vm962 = vcmp.ge.s32.totalorder %v239, 4
        %v963 = vpack.c.bf16 %v960, %v959
        %s964 = scalar_lea.vmem [#allocation6], 64
        %v965 = vld [vmem:[%s964] sm:$0xf]
        %v966 = vld [vmem:[%s964 + $0x4] sm:$0xf]
        %v967 = vld [vmem:[%s964 + $0x8] sm:$0xf]
        %v968 = vld [vmem:[%s964 + $0xc] sm:$0xf]
        %v969 = vld [vmem:[%s964 + $0x10] sm:$0xf]
        %v970 = vld [vmem:[%s964 + $0x14] sm:$0xf]
        %v971 = vld [vmem:[%s964 + $0x18] sm:$0xf]
        %v972 = vld [vmem:[%s964 + $0x1c] sm:$0xf]
        %v973 = vld [vmem:[%s964 + $0x20] sm:$0xf]
        %v974 = vld [vmem:[%s964 + $0x24] sm:$0xf]
        %v975 = vld [vmem:[%s964 + $0x28] sm:$0xf]
        %v976 = vld [vmem:[%s964 + $0x2c] sm:$0xf]
        %v977 = vld [vmem:[%s964 + $0x30] sm:$0xf]
        %v978 = vld [vmem:[%s964 + $0x34] sm:$0xf]
        %v979 = vld [vmem:[%s964 + $0x38] sm:$0xf]
        %v980 = vld [vmem:[%s964 + $0x3c] sm:$0xf]
        %v981 = vld [vmem:[%s3 + $0x5] sm:$0x1]
        %v982 = vlaneseq
        %v983 = vshrl.u32 %v982, 7
        %v984 = vsub.s32 0, %v983
        %v985 = vrot.slane %v981, %v984
        %v1002 = vunpack.c.l.b16 %v965
        %v1003 = vunpack.c.l.b16 %v966
        %v1004 = vunpack.c.l.b16 %v967
        %v1005 = vunpack.c.l.b16 %v968
        %v1006 = vunpack.c.l.b16 %v969
        %v1007 = vunpack.c.l.b16 %v970
        %v1008 = vunpack.c.l.b16 %v971
        %v1009 = vunpack.c.l.b16 %v972
        %v1010 = vunpack.c.l.b16 %v973
        %v1011 = vunpack.c.l.b16 %v974
        %v1012 = vunpack.c.l.b16 %v975
        %v1013 = vunpack.c.l.b16 %v976
        %v1014 = vunpack.c.l.b16 %v977
        %v1015 = vunpack.c.l.b16 %v978
        %v1016 = vunpack.c.l.b16 %v979
        %v1017 = vunpack.c.l.b16 %v980
        %v1018 = vpack.c.b16 %v1003, %v1002
        %v1019 = vpack.c.b16 %v1005, %v1004
        %v1020 = vpack.c.b16 %v1007, %v1006
        %v1021 = vpack.c.b16 %v1009, %v1008
        %v1022 = vpack.c.b16 %v1011, %v1010
        %v1023 = vpack.c.b16 %v1013, %v1012
        %v1024 = vpack.c.b16 %v1015, %v1014
        %v1025 = vpack.c.b16 %v1017, %v1016
        %1034 = vmatprep.subr.bf16.mxu0 0
        %1035 = vmatpush1.bf16.msra.mxu0 %v1018
        %1036 = vmatprep.subr.bf16.mxu0 0
        %1037 = vmatpush1.bf16.msra.mxu0 %v1019
        %1038 = vmatprep.subr.bf16.mxu0 0
        %1039 = vmatpush1.bf16.msra.mxu0 %v1020
        %1040 = vmatprep.subr.bf16.mxu0 0
        %1041 = vmatpush1.bf16.msra.mxu0 %v1021
        %1042 = vmatprep.subr.bf16.mxu0 0
        %1043 = vmatpush1.bf16.msra.mxu0 %v1022
        %1044 = vmatprep.subr.bf16.mxu0 0
        %1045 = vmatpush1.bf16.msra.mxu0 %v1023
        %1046 = vmatprep.subr.bf16.mxu0 0
        %1047 = vmatpush1.bf16.msra.mxu0 %v1024
        %1048 = vmatprep.subr.bf16.mxu0 0
        %1049 = vmatpush1.bf16.msra.mxu0 %v1025
        %1050 = vmatprep.subr.bf16.mxu0 0
        %1051 = vmatpush1.bf16.msra.mxu0 0
        %1052 = vmatprep.subr.bf16.mxu0 0
        %1053 = vmatpush1.bf16.msra.mxu0 0
        %1054 = vmatprep.subr.bf16.mxu0 0
        %1055 = vmatpush1.bf16.msra.mxu0 0
        %1056 = vmatprep.subr.bf16.mxu0 0
        %1057 = vmatpush1.bf16.msra.mxu0 0
        %1058 = vmatprep.subr.bf16.mxu0 0
        %1059 = vmatpush1.bf16.msra.mxu0 0
        %1060 = vmatprep.subr.bf16.mxu0 0
        %1061 = vmatpush1.bf16.msra.mxu0 0
        %1062 = vmatprep.subr.bf16.mxu0 0
        %1063 = vmatpush1.bf16.msra.mxu0 0
        %1064 = vmatprep.subr.bf16.mxu0 0
        %1065 = vmatpush1.bf16.msra.mxu0 0
        %1066 = vmatprep.mubr.bf16.mxu0 0
        %1067 = vmatmul.mubr.bf16.gmra.mrb[0].mxu0 %v963
        %v1068 = vpop.f32.mrb[0].mxu0
        %v1069 = vadd.f32 %v985, %v1068
        %v1070 = vpop.f32.mrb[0].mxu0
        %v1071 = vpop.f32.mrb[0].mxu0
        %v1072 = vadd.f32 %v985, %v1071
        %v1073 = vpop.f32.mrb[0].mxu0
        %1074 = vdwg.mxu0
        %v1075 = vrot.slane %v959, 6
        %v1076 = vrot.slane %v960, 6
        %v1077 = vsel %vm368, %v1075, %v1076
        %v1078 = vsel %vm368, %v1076, %v1075
        %v1079 = vsel %vm373, %v1078, 0.0
        %v1080 = vsel %vm374, %v1077, 0.0
        %v1081 = vrot.slane %v959, 4
        %v1082 = vrot.slane %v960, 4
        %vm1083 = vcmp.lt.s32.totalorder %v238, 4
        %v1084 = vsel %vm1083, %v1081, %v1082
        %v1085 = vsel %vm1083, %v1082, %v1081
        %v1086 = vsel %vm961, 1, 0
        %v1087 = vsel %vm962, 1, 0
        %vm1088 = vcmp.eq.s32.totalorder %v1086, 1
        %vm1089 = vcmp.eq.s32.totalorder %v1087, 1
        %v1090 = vsel %vm1088, %v1085, 0.0
        %v1091 = vsel %vm1089, %v1084, 0.0
        %v1092 = vpack.c.bf16 %v1080, %v1079
        %v1093 = vpack.c.bf16 %v1091, %v1090
        %s1094 = scalar_lea.vmem [#allocation3], 384
        %v1095 = vld [vmem:[%s1094] sm:$0xf]
        %v1096 = vld [vmem:[%s1094 + $0x4] sm:$0xf]
        %v1097 = vld [vmem:[%s1094 + $0x8] sm:$0xf]
        %v1098 = vld [vmem:[%s1094 + $0xc] sm:$0xf]
        %v1099 = vld [vmem:[%s1094 + $0x10] sm:$0xf]
        %v1100 = vld [vmem:[%s1094 + $0x14] sm:$0xf]
        %v1101 = vld [vmem:[%s1094 + $0x18] sm:$0xf]
        %v1102 = vld [vmem:[%s1094 + $0x1c] sm:$0xf]
        %v1103 = vld [vmem:[%s1094 + $0x20] sm:$0xf]
        %v1104 = vld [vmem:[%s1094 + $0x24] sm:$0xf]
        %v1105 = vld [vmem:[%s1094 + $0x28] sm:$0xf]
        %v1106 = vld [vmem:[%s1094 + $0x2c] sm:$0xf]
        %v1107 = vld [vmem:[%s1094 + $0x30] sm:$0xf]
        %v1108 = vld [vmem:[%s1094 + $0x34] sm:$0xf]
        %v1109 = vld [vmem:[%s1094 + $0x38] sm:$0xf]
        %v1110 = vld [vmem:[%s1094 + $0x3c] sm:$0xf]
        %v1111 = vld [vmem:[%s1094 + $0x40] sm:$0xf]
        %v1112 = vld [vmem:[%s1094 + $0x44] sm:$0xf]
        %v1113 = vld [vmem:[%s1094 + $0x48] sm:$0xf]
        %v1114 = vld [vmem:[%s1094 + $0x4c] sm:$0xf]
        %v1115 = vld [vmem:[%s1094 + $0x50] sm:$0xf]
        %v1116 = vld [vmem:[%s1094 + $0x54] sm:$0xf]
        %v1117 = vld [vmem:[%s1094 + $0x58] sm:$0xf]
        %v1118 = vld [vmem:[%s1094 + $0x5c] sm:$0xf]
        %v1119 = vld [vmem:[%s1094 + $0x60] sm:$0xf]
        %v1120 = vld [vmem:[%s1094 + $0x64] sm:$0xf]
        %v1121 = vld [vmem:[%s1094 + $0x68] sm:$0xf]
        %v1122 = vld [vmem:[%s1094 + $0x6c] sm:$0xf]
        %v1123 = vld [vmem:[%s1094 + $0x70] sm:$0xf]
        %v1124 = vld [vmem:[%s1094 + $0x74] sm:$0xf]
        %v1125 = vld [vmem:[%s1094 + $0x78] sm:$0xf]
        %v1126 = vld [vmem:[%s1094 + $0x7c] sm:$0xf]
        %v1127 = vld [vmem:[%s1094 + $0x80] sm:$0xf]
        %v1128 = vld [vmem:[%s1094 + $0x84] sm:$0xf]
        %v1129 = vld [vmem:[%s1094 + $0x88] sm:$0xf]
        %v1130 = vld [vmem:[%s1094 + $0x8c] sm:$0xf]
        %v1131 = vld [vmem:[%s1094 + $0x90] sm:$0xf]
        %v1132 = vld [vmem:[%s1094 + $0x94] sm:$0xf]
        %v1133 = vld [vmem:[%s1094 + $0x98] sm:$0xf]
        %v1134 = vld [vmem:[%s1094 + $0x9c] sm:$0xf]
        %v1135 = vld [vmem:[%s1094 + $0xa0] sm:$0xf]
        %v1136 = vld [vmem:[%s1094 + $0xa4] sm:$0xf]
        %v1137 = vld [vmem:[%s1094 + $0xa8] sm:$0xf]
        %v1138 = vld [vmem:[%s1094 + $0xac] sm:$0xf]
        %v1139 = vld [vmem:[%s1094 + $0xb0] sm:$0xf]
        %v1140 = vld [vmem:[%s1094 + $0xb4] sm:$0xf]
        %v1141 = vld [vmem:[%s1094 + $0xb8] sm:$0xf]
        %v1142 = vld [vmem:[%s1094 + $0xbc] sm:$0xf]
        %v1143 = vld [vmem:[%s3 + $0x3] sm:$0x1]
        %v1144 = vlaneseq
        %v1145 = vshrl.u32 %v1144, 7
        %v1146 = vsub.s32 0, %v1145
        %v1147 = vrot.slane %v1143, %v1146
        %v1196 = vunpack.c.l.b16 %v1095
        %v1197 = vunpack.c.l.b16 %v1096
        %v1198 = vunpack.c.l.b16 %v1097
        %v1199 = vunpack.c.l.b16 %v1098
        %v1200 = vunpack.c.l.b16 %v1099
        %v1201 = vunpack.c.l.b16 %v1100
        %v1202 = vunpack.c.l.b16 %v1101
        %v1203 = vunpack.c.l.b16 %v1102
        %v1204 = vunpack.c.l.b16 %v1103
        %v1205 = vunpack.c.l.b16 %v1104
        %v1206 = vunpack.c.l.b16 %v1105
        %v1207 = vunpack.c.l.b16 %v1106
        %v1208 = vunpack.c.l.b16 %v1107
        %v1209 = vunpack.c.l.b16 %v1108
        %v1210 = vunpack.c.l.b16 %v1109
        %v1211 = vunpack.c.l.b16 %v1110
        %v1212 = vunpack.c.l.b16 %v1111
        %v1213 = vunpack.c.l.b16 %v1112
        %v1214 = vunpack.c.l.b16 %v1113
        %v1215 = vunpack.c.l.b16 %v1114
        %v1216 = vunpack.c.l.b16 %v1115
        %v1217 = vunpack.c.l.b16 %v1116
        %v1218 = vunpack.c.l.b16 %v1117
        %v1219 = vunpack.c.l.b16 %v1118
        %v1220 = vunpack.c.l.b16 %v1119
        %v1221 = vunpack.c.l.b16 %v1120
        %v1222 = vunpack.c.l.b16 %v1121
        %v1223 = vunpack.c.l.b16 %v1122
        %v1224 = vunpack.c.l.b16 %v1123
        %v1225 = vunpack.c.l.b16 %v1124
        %v1226 = vunpack.c.l.b16 %v1125
        %v1227 = vunpack.c.l.b16 %v1126
        %v1228 = vunpack.c.l.b16 %v1127
        %v1229 = vunpack.c.l.b16 %v1128
        %v1230 = vunpack.c.l.b16 %v1129
        %v1231 = vunpack.c.l.b16 %v1130
        %v1232 = vunpack.c.l.b16 %v1131
        %v1233 = vunpack.c.l.b16 %v1132
        %v1234 = vunpack.c.l.b16 %v1133
        %v1235 = vunpack.c.l.b16 %v1134
        %v1236 = vunpack.c.l.b16 %v1135
        %v1237 = vunpack.c.l.b16 %v1136
        %v1238 = vunpack.c.l.b16 %v1137
        %v1239 = vunpack.c.l.b16 %v1138
        %v1240 = vunpack.c.l.b16 %v1139
        %v1241 = vunpack.c.l.b16 %v1140
        %v1242 = vunpack.c.l.b16 %v1141
        %v1243 = vunpack.c.l.b16 %v1142
        %v1244 = vpack.c.b16 %v1197, %v1196
        %v1245 = vpack.c.b16 %v1199, %v1198
        %v1246 = vpack.c.b16 %v1201, %v1200
        %v1247 = vpack.c.b16 %v1203, %v1202
        %v1248 = vpack.c.b16 %v1205, %v1204
        %v1249 = vpack.c.b16 %v1207, %v1206
        %v1250 = vpack.c.b16 %v1209, %v1208
        %v1251 = vpack.c.b16 %v1211, %v1210
        %v1252 = vpack.c.b16 %v1213, %v1212
        %v1253 = vpack.c.b16 %v1215, %v1214
        %v1254 = vpack.c.b16 %v1217, %v1216
        %v1255 = vpack.c.b16 %v1219, %v1218
        %v1256 = vpack.c.b16 %v1221, %v1220
        %v1257 = vpack.c.b16 %v1223, %v1222
        %v1258 = vpack.c.b16 %v1225, %v1224
        %v1259 = vpack.c.b16 %v1227, %v1226
        %v1260 = vpack.c.b16 %v1229, %v1228
        %v1261 = vpack.c.b16 %v1231, %v1230
        %v1262 = vpack.c.b16 %v1233, %v1232
        %v1263 = vpack.c.b16 %v1235, %v1234
        %v1264 = vpack.c.b16 %v1237, %v1236
        %v1265 = vpack.c.b16 %v1239, %v1238
        %v1266 = vpack.c.b16 %v1241, %v1240
        %v1267 = vpack.c.b16 %v1243, %v1242
        %1292 = vmatprep.subr.bf16.mxu0 0
        %1293 = vmatpush1.bf16.msra.mxu0 %v1244
        %1294 = vmatprep.subr.bf16.mxu0 0
        %1295 = vmatpush1.bf16.msra.mxu0 %v1245
        %1296 = vmatprep.subr.bf16.mxu0 0
        %1297 = vmatpush1.bf16.msra.mxu0 %v1246
        %1298 = vmatprep.subr.bf16.mxu0 0
        %1299 = vmatpush1.bf16.msra.mxu0 %v1247
        %1300 = vmatprep.subr.bf16.mxu0 0
        %1301 = vmatpush1.bf16.msra.mxu0 %v1248
        %1302 = vmatprep.subr.bf16.mxu0 0
        %1303 = vmatpush1.bf16.msra.mxu0 %v1249
        %1304 = vmatprep.subr.bf16.mxu0 0
        %1305 = vmatpush1.bf16.msra.mxu0 %v1250
        %1306 = vmatprep.subr.bf16.mxu0 0
        %1307 = vmatpush1.bf16.msra.mxu0 %v1251
        %1308 = vmatprep.subr.bf16.mxu0 0
        %1309 = vmatpush1.bf16.msra.mxu0 %v1252
        %1310 = vmatprep.subr.bf16.mxu0 0
        %1311 = vmatpush1.bf16.msra.mxu0 %v1253
        %1312 = vmatprep.subr.bf16.mxu0 0
        %1313 = vmatpush1.bf16.msra.mxu0 %v1254
        %1314 = vmatprep.subr.bf16.mxu0 0
        %1315 = vmatpush1.bf16.msra.mxu0 %v1255
        %1316 = vmatprep.subr.bf16.mxu0 0
        %1317 = vmatpush1.bf16.msra.mxu0 %v1256
        %1318 = vmatprep.subr.bf16.mxu0 0
        %1319 = vmatpush1.bf16.msra.mxu0 %v1257
        %1320 = vmatprep.subr.bf16.mxu0 0
        %1321 = vmatpush1.bf16.msra.mxu0 %v1258
        %1322 = vmatprep.subr.bf16.mxu0 0
        %1323 = vmatpush1.bf16.msra.mxu0 %v1259
        %1324 = vmatprep.mubr.bf16.mxu0 %v1092
        %1325 = vmatmul.mubr.bf16.gmra.mrb[0].mxu0 %v963
        %v1326 = vpop.f32.mrb[0].mxu0
        %v1327 = vadd.f32 %v1147, %v1326
        %v1328 = vpop.f32.mrb[0].mxu0
        %v1329 = vpop.f32.mrb[0].mxu0
        %v1330 = vadd.f32 %v1147, %v1329
        %v1331 = vpop.f32.mrb[0].mxu0
        %1332 = vdwg.mxu0
        %1333 = vmatprep.subr.bf16.mxu0 0
        %1334 = vmatpush1.bf16.msra.mxu0 %v1260
        %1335 = vmatprep.subr.bf16.mxu0 0
        %1336 = vmatpush1.bf16.msra.mxu0 %v1261
        %1337 = vmatprep.subr.bf16.mxu0 0
        %1338 = vmatpush1.bf16.msra.mxu0 %v1262
        %1339 = vmatprep.subr.bf16.mxu0 0
        %1340 = vmatpush1.bf16.msra.mxu0 %v1263
        %1341 = vmatprep.subr.bf16.mxu0 0
        %1342 = vmatpush1.bf16.msra.mxu0 %v1264
        %1343 = vmatprep.subr.bf16.mxu0 0
        %1344 = vmatpush1.bf16.msra.mxu0 %v1265
        %1345 = vmatprep.subr.bf16.mxu0 0
        %1346 = vmatpush1.bf16.msra.mxu0 %v1266
        %1347 = vmatprep.subr.bf16.mxu0 0
        %1348 = vmatpush1.bf16.msra.mxu0 %v1267
        %1349 = vmatprep.subr.bf16.mxu0 0
        %1350 = vmatpush1.bf16.msra.mxu0 0
        %1351 = vmatprep.subr.bf16.mxu0 0
        %1352 = vmatpush1.bf16.msra.mxu0 0
        %1353 = vmatprep.subr.bf16.mxu0 0
        %1354 = vmatpush1.bf16.msra.mxu0 0
        %1355 = vmatprep.subr.bf16.mxu0 0
        %1356 = vmatpush1.bf16.msra.mxu0 0
        %1357 = vmatprep.subr.bf16.mxu0 0
        %1358 = vmatpush1.bf16.msra.mxu0 0
        %1359 = vmatprep.subr.bf16.mxu0 0
        %1360 = vmatpush1.bf16.msra.mxu0 0
        %1361 = vmatprep.subr.bf16.mxu0 0
        %1362 = vmatpush1.bf16.msra.mxu0 0
        %1363 = vmatprep.subr.bf16.mxu0 0
        %1364 = vmatpush1.bf16.msra.mxu0 0
        %1365 = vmatprep.mubr.bf16.mxu0 0
        %1366 = vmatmul.mubr.bf16.gmra.mrb[0].mxu0 %v1093
        %v1367 = vpop.f32.mrb[0].mxu0
        %v1368 = vadd.f32 %v1327, %v1367
        %v1369 = vpop.f32.mrb[0].mxu0
        %v1370 = vpop.f32.mrb[0].mxu0
        %v1371 = vadd.f32 %v1330, %v1370
        %v1372 = vpop.f32.mrb[0].mxu0
        %1373 = vdwg.mxu0
        %v1374 = vmax.f32 %v1368, 0.0
        %v1375 = vmax.f32 %v1371, 0.0
        %v1376 = vrot.slane %v1374, 6
        %v1377 = vrot.slane %v1375, 6
        %v1378 = vsel %vm368, %v1376, %v1377
        %v1379 = vsel %vm368, %v1377, %v1376
        %v1380 = vsel %vm373, %v1379, 0.0
        %v1381 = vsel %vm374, %v1378, 0.0
        %v1382 = vrot.slane %v1374, 4
        %v1383 = vrot.slane %v1375, 4
        %v1384 = vsel %vm1083, %v1382, %v1383
        %v1385 = vsel %vm1083, %v1383, %v1382
        %v1386 = vsel %vm1088, %v1385, 0.0
        %v1387 = vsel %vm1089, %v1384, 0.0
        %v1388 = vpack.c.bf16 %v1375, %v1374
        %v1389 = vpack.c.bf16 %v1381, %v1380
        %v1390 = vpack.c.bf16 %v1387, %v1386
        %s1391 = scalar_lea.vmem [#allocation3], 576
        %v1392 = vld [vmem:[%s1391] sm:$0xf]
        %v1393 = vld [vmem:[%s1391 + $0x4] sm:$0xf]
        %v1394 = vld [vmem:[%s1391 + $0x8] sm:$0xf]
        %v1395 = vld [vmem:[%s1391 + $0xc] sm:$0xf]
        %v1396 = vld [vmem:[%s1391 + $0x10] sm:$0xf]
        %v1397 = vld [vmem:[%s1391 + $0x14] sm:$0xf]
        %v1398 = vld [vmem:[%s1391 + $0x18] sm:$0xf]
        %v1399 = vld [vmem:[%s1391 + $0x1c] sm:$0xf]
        %v1400 = vld [vmem:[%s1391 + $0x20] sm:$0xf]
        %v1401 = vld [vmem:[%s1391 + $0x24] sm:$0xf]
        %v1402 = vld [vmem:[%s1391 + $0x28] sm:$0xf]
        %v1403 = vld [vmem:[%s1391 + $0x2c] sm:$0xf]
        %v1404 = vld [vmem:[%s1391 + $0x30] sm:$0xf]
        %v1405 = vld [vmem:[%s1391 + $0x34] sm:$0xf]
        %v1406 = vld [vmem:[%s1391 + $0x38] sm:$0xf]
        %v1407 = vld [vmem:[%s1391 + $0x3c] sm:$0xf]
        %v1408 = vld [vmem:[%s1391 + $0x40] sm:$0xf]
        %v1409 = vld [vmem:[%s1391 + $0x44] sm:$0xf]
        %v1410 = vld [vmem:[%s1391 + $0x48] sm:$0xf]
        %v1411 = vld [vmem:[%s1391 + $0x4c] sm:$0xf]
        %v1412 = vld [vmem:[%s1391 + $0x50] sm:$0xf]
        %v1413 = vld [vmem:[%s1391 + $0x54] sm:$0xf]
        %v1414 = vld [vmem:[%s1391 + $0x58] sm:$0xf]
        %v1415 = vld [vmem:[%s1391 + $0x5c] sm:$0xf]
        %v1416 = vld [vmem:[%s1391 + $0x60] sm:$0xf]
        %v1417 = vld [vmem:[%s1391 + $0x64] sm:$0xf]
        %v1418 = vld [vmem:[%s1391 + $0x68] sm:$0xf]
        %v1419 = vld [vmem:[%s1391 + $0x6c] sm:$0xf]
        %v1420 = vld [vmem:[%s1391 + $0x70] sm:$0xf]
        %v1421 = vld [vmem:[%s1391 + $0x74] sm:$0xf]
        %v1422 = vld [vmem:[%s1391 + $0x78] sm:$0xf]
        %v1423 = vld [vmem:[%s1391 + $0x7c] sm:$0xf]
        %v1424 = vld [vmem:[%s1391 + $0x80] sm:$0xf]
        %v1425 = vld [vmem:[%s1391 + $0x84] sm:$0xf]
        %v1426 = vld [vmem:[%s1391 + $0x88] sm:$0xf]
        %v1427 = vld [vmem:[%s1391 + $0x8c] sm:$0xf]
        %v1428 = vld [vmem:[%s1391 + $0x90] sm:$0xf]
        %v1429 = vld [vmem:[%s1391 + $0x94] sm:$0xf]
        %v1430 = vld [vmem:[%s1391 + $0x98] sm:$0xf]
        %v1431 = vld [vmem:[%s1391 + $0x9c] sm:$0xf]
        %v1432 = vld [vmem:[%s1391 + $0xa0] sm:$0xf]
        %v1433 = vld [vmem:[%s1391 + $0xa4] sm:$0xf]
        %v1434 = vld [vmem:[%s1391 + $0xa8] sm:$0xf]
        %v1435 = vld [vmem:[%s1391 + $0xac] sm:$0xf]
        %v1436 = vld [vmem:[%s1391 + $0xb0] sm:$0xf]
        %v1437 = vld [vmem:[%s1391 + $0xb4] sm:$0xf]
        %v1438 = vld [vmem:[%s1391 + $0xb8] sm:$0xf]
        %v1439 = vld [vmem:[%s1391 + $0xbc] sm:$0xf]
        %v1440 = vld [vmem:[%s3 + $0x4] sm:$0x1]
        %v1441 = vlaneseq
        %v1442 = vshrl.u32 %v1441, 7
        %v1443 = vsub.s32 0, %v1442
        %v1444 = vrot.slane %v1440, %v1443
        %v1493 = vunpack.c.l.b16 %v1392
        %v1494 = vunpack.c.l.b16 %v1393
        %v1495 = vunpack.c.l.b16 %v1394
        %v1496 = vunpack.c.l.b16 %v1395
        %v1497 = vunpack.c.l.b16 %v1396
        %v1498 = vunpack.c.l.b16 %v1397
        %v1499 = vunpack.c.l.b16 %v1398
        %v1500 = vunpack.c.l.b16 %v1399
        %v1501 = vunpack.c.l.b16 %v1400
        %v1502 = vunpack.c.l.b16 %v1401
        %v1503 = vunpack.c.l.b16 %v1402
        %v1504 = vunpack.c.l.b16 %v1403
        %v1505 = vunpack.c.l.b16 %v1404
        %v1506 = vunpack.c.l.b16 %v1405
        %v1507 = vunpack.c.l.b16 %v1406
        %v1508 = vunpack.c.l.b16 %v1407
        %v1509 = vunpack.c.l.b16 %v1408
        %v1510 = vunpack.c.l.b16 %v1409
        %v1511 = vunpack.c.l.b16 %v1410
        %v1512 = vunpack.c.l.b16 %v1411
        %v1513 = vunpack.c.l.b16 %v1412
        %v1514 = vunpack.c.l.b16 %v1413
        %v1515 = vunpack.c.l.b16 %v1414
        %v1516 = vunpack.c.l.b16 %v1415
        %v1517 = vunpack.c.l.b16 %v1416
        %v1518 = vunpack.c.l.b16 %v1417
        %v1519 = vunpack.c.l.b16 %v1418
        %v1520 = vunpack.c.l.b16 %v1419
        %v1521 = vunpack.c.l.b16 %v1420
        %v1522 = vunpack.c.l.b16 %v1421
        %v1523 = vunpack.c.l.b16 %v1422
        %v1524 = vunpack.c.l.b16 %v1423
        %v1525 = vunpack.c.l.b16 %v1424
        %v1526 = vunpack.c.l.b16 %v1425
        %v1527 = vunpack.c.l.b16 %v1426
        %v1528 = vunpack.c.l.b16 %v1427
        %v1529 = vunpack.c.l.b16 %v1428
        %v1530 = vunpack.c.l.b16 %v1429
        %v1531 = vunpack.c.l.b16 %v1430
        %v1532 = vunpack.c.l.b16 %v1431
        %v1533 = vunpack.c.l.b16 %v1432
        %v1534 = vunpack.c.l.b16 %v1433
        %v1535 = vunpack.c.l.b16 %v1434
        %v1536 = vunpack.c.l.b16 %v1435
        %v1537 = vunpack.c.l.b16 %v1436
        %v1538 = vunpack.c.l.b16 %v1437
        %v1539 = vunpack.c.l.b16 %v1438
        %v1540 = vunpack.c.l.b16 %v1439
        %v1541 = vpack.c.b16 %v1494, %v1493
        %v1542 = vpack.c.b16 %v1496, %v1495
        %v1543 = vpack.c.b16 %v1498, %v1497
        %v1544 = vpack.c.b16 %v1500, %v1499
        %v1545 = vpack.c.b16 %v1502, %v1501
        %v1546 = vpack.c.b16 %v1504, %v1503
        %v1547 = vpack.c.b16 %v1506, %v1505
        %v1548 = vpack.c.b16 %v1508, %v1507
        %v1549 = vpack.c.b16 %v1510, %v1509
        %v1550 = vpack.c.b16 %v1512, %v1511
        %v1551 = vpack.c.b16 %v1514, %v1513
        %v1552 = vpack.c.b16 %v1516, %v1515
        %v1553 = vpack.c.b16 %v1518, %v1517
        %v1554 = vpack.c.b16 %v1520, %v1519
        %v1555 = vpack.c.b16 %v1522, %v1521
        %v1556 = vpack.c.b16 %v1524, %v1523
        %v1557 = vpack.c.b16 %v1526, %v1525
        %v1558 = vpack.c.b16 %v1528, %v1527
        %v1559 = vpack.c.b16 %v1530, %v1529
        %v1560 = vpack.c.b16 %v1532, %v1531
        %v1561 = vpack.c.b16 %v1534, %v1533
        %v1562 = vpack.c.b16 %v1536, %v1535
        %v1563 = vpack.c.b16 %v1538, %v1537
        %v1564 = vpack.c.b16 %v1540, %v1539
        %1589 = vmatprep.subr.bf16.mxu0 0
        %1590 = vmatpush1.bf16.msra.mxu0 %v1541
        %1591 = vmatprep.subr.bf16.mxu0 0
        %1592 = vmatpush1.bf16.msra.mxu0 %v1542
        %1593 = vmatprep.subr.bf16.mxu0 0
        %1594 = vmatpush1.bf16.msra.mxu0 %v1543
        %1595 = vmatprep.subr.bf16.mxu0 0
        %1596 = vmatpush1.bf16.msra.mxu0 %v1544
        %1597 = vmatprep.subr.bf16.mxu0 0
        %1598 = vmatpush1.bf16.msra.mxu0 %v1545
        %1599 = vmatprep.subr.bf16.mxu0 0
        %1600 = vmatpush1.bf16.msra.mxu0 %v1546
        %1601 = vmatprep.subr.bf16.mxu0 0
        %1602 = vmatpush1.bf16.msra.mxu0 %v1547
        %1603 = vmatprep.subr.bf16.mxu0 0
        %1604 = vmatpush1.bf16.msra.mxu0 %v1548
        %1605 = vmatprep.subr.bf16.mxu0 0
        %1606 = vmatpush1.bf16.msra.mxu0 %v1549
        %1607 = vmatprep.subr.bf16.mxu0 0
        %1608 = vmatpush1.bf16.msra.mxu0 %v1550
        %1609 = vmatprep.subr.bf16.mxu0 0
        %1610 = vmatpush1.bf16.msra.mxu0 %v1551
        %1611 = vmatprep.subr.bf16.mxu0 0
        %1612 = vmatpush1.bf16.msra.mxu0 %v1552
        %1613 = vmatprep.subr.bf16.mxu0 0
        %1614 = vmatpush1.bf16.msra.mxu0 %v1553
        %1615 = vmatprep.subr.bf16.mxu0 0
        %1616 = vmatpush1.bf16.msra.mxu0 %v1554
        %1617 = vmatprep.subr.bf16.mxu0 0
        %1618 = vmatpush1.bf16.msra.mxu0 %v1555
        %1619 = vmatprep.subr.bf16.mxu0 0
        %1620 = vmatpush1.bf16.msra.mxu0 %v1556
        %1621 = vmatprep.mubr.bf16.mxu0 %v1389
        %1622 = vmatmul.mubr.bf16.gmra.mrb[0].mxu0 %v1388
        %v1623 = vpop.f32.mrb[0].mxu0
        %v1624 = vadd.f32 %v1444, %v1623
        %v1625 = vpop.f32.mrb[0].mxu0
        %v1626 = vpop.f32.mrb[0].mxu0
        %v1627 = vadd.f32 %v1444, %v1626
        %v1628 = vpop.f32.mrb[0].mxu0
        %1629 = vdwg.mxu0
        %1630 = vmatprep.subr.bf16.mxu0 0
        %1631 = vmatpush1.bf16.msra.mxu0 %v1557
        %1632 = vmatprep.subr.bf16.mxu0 0
        %1633 = vmatpush1.bf16.msra.mxu0 %v1558
        %1634 = vmatprep.subr.bf16.mxu0 0
        %1635 = vmatpush1.bf16.msra.mxu0 %v1559
        %1636 = vmatprep.subr.bf16.mxu0 0
        %1637 = vmatpush1.bf16.msra.mxu0 %v1560
        %1638 = vmatprep.subr.bf16.mxu0 0
        %1639 = vmatpush1.bf16.msra.mxu0 %v1561
        %1640 = vmatprep.subr.bf16.mxu0 0
        %1641 = vmatpush1.bf16.msra.mxu0 %v1562
        %1642 = vmatprep.subr.bf16.mxu0 0
        %1643 = vmatpush1.bf16.msra.mxu0 %v1563
        %1644 = vmatprep.subr.bf16.mxu0 0
        %1645 = vmatpush1.bf16.msra.mxu0 %v1564
        %1646 = vmatprep.subr.bf16.mxu0 0
        %1647 = vmatpush1.bf16.msra.mxu0 0
        %1648 = vmatprep.subr.bf16.mxu0 0
        %1649 = vmatpush1.bf16.msra.mxu0 0
        %1650 = vmatprep.subr.bf16.mxu0 0
        %1651 = vmatpush1.bf16.msra.mxu0 0
        %1652 = vmatprep.subr.bf16.mxu0 0
        %1653 = vmatpush1.bf16.msra.mxu0 0
        %1654 = vmatprep.subr.bf16.mxu0 0
        %1655 = vmatpush1.bf16.msra.mxu0 0
        %1656 = vmatprep.subr.bf16.mxu0 0
        %1657 = vmatpush1.bf16.msra.mxu0 0
        %1658 = vmatprep.subr.bf16.mxu0 0
        %1659 = vmatpush1.bf16.msra.mxu0 0
        %1660 = vmatprep.subr.bf16.mxu0 0
        %1661 = vmatpush1.bf16.msra.mxu0 0
        %1662 = vmatprep.mubr.bf16.mxu0 0
        %1663 = vmatmul.mubr.bf16.gmra.mrb[0].mxu0 %v1390
        %v1664 = vpop.f32.mrb[0].mxu0
        %v1665 = vadd.f32 %v1624, %v1664
        %v1666 = vpop.f32.mrb[0].mxu0
        %v1667 = vpop.f32.mrb[0].mxu0
        %v1668 = vadd.f32 %v1627, %v1667
        %v1669 = vpop.f32.mrb[0].mxu0
        %1670 = vdwg.mxu0
        %v1671 = vmax.f32 %v1665, 0.0
        %v1672 = vmax.f32 %v1668, 0.0
        %v1673 = vadd.f32 %v1671, %v1069
        %v1674 = vadd.f32 %v1672, %v1072
        %v1675 = vmax.f32 %v1673, 0.0
        %v1676 = vmax.f32 %v1674, 0.0
        %1677 = vst [vmem:[#allocation2] sm:$0xff] %v1675
        %1678 = vst [vmem:[#allocation2 + $0x8] sm:$0xff] %v1676
        %v1679 = vld [vmem:[#allocation2 + $0xf] sm:$0x1]
        %v1680 = vpack.c.bf16 %v1679, %v1679
        %s1681 = scalar_lea.vmem [#allocation6], 128
        %v1682 = vld [vmem:[%s1681] sm:$0xf]
        %v1683 = vld [vmem:[%s1681 + $0x4] sm:$0xf]
        %v1684 = vld [vmem:[%s1681 + $0x8] sm:$0xf]
        %v1685 = vld [vmem:[%s1681 + $0xc] sm:$0xf]
        %v1686 = vld [vmem:[%s1681 + $0x10] sm:$0xf]
        %v1687 = vld [vmem:[%s1681 + $0x14] sm:$0xf]
        %v1688 = vld [vmem:[%s1681 + $0x18] sm:$0xf]
        %v1689 = vld [vmem:[%s1681 + $0x1c] sm:$0xf]
        %v1690 = vld [vmem:[%s1681 + $0x20] sm:$0xf]
        %v1691 = vld [vmem:[%s1681 + $0x24] sm:$0xf]
        %v1692 = vld [vmem:[%s1681 + $0x28] sm:$0xf]
        %v1693 = vld [vmem:[%s1681 + $0x2c] sm:$0xf]
        %v1694 = vld [vmem:[%s1681 + $0x30] sm:$0xf]
        %v1695 = vld [vmem:[%s1681 + $0x34] sm:$0xf]
        %v1696 = vld [vmem:[%s1681 + $0x38] sm:$0xf]
        %v1697 = vld [vmem:[%s1681 + $0x3c] sm:$0xf]
        %v1698 = vld [vmem:[%s3 + $0x6] sm:$0x1]
        %v1715 = vunpack.c.l.b16 %v1682
        %v1716 = vunpack.c.l.b16 %v1683
        %v1717 = vunpack.c.l.b16 %v1684
        %v1718 = vunpack.c.l.b16 %v1685
        %v1719 = vunpack.c.l.b16 %v1686
        %v1720 = vunpack.c.l.b16 %v1687
        %v1721 = vunpack.c.l.b16 %v1688
        %v1722 = vunpack.c.l.b16 %v1689
        %v1723 = vunpack.c.l.b16 %v1690
        %v1724 = vunpack.c.l.b16 %v1691
        %v1725 = vunpack.c.l.b16 %v1692
        %v1726 = vunpack.c.l.b16 %v1693
        %v1727 = vunpack.c.l.b16 %v1694
        %v1728 = vunpack.c.l.b16 %v1695
        %v1729 = vunpack.c.l.b16 %v1696
        %v1730 = vunpack.c.l.b16 %v1697
        %v1731 = vpack.c.b16 %v1716, %v1715
        %v1732 = vpack.c.b16 %v1718, %v1717
        %v1733 = vpack.c.b16 %v1720, %v1719
        %v1734 = vpack.c.b16 %v1722, %v1721
        %v1735 = vpack.c.b16 %v1724, %v1723
        %v1736 = vpack.c.b16 %v1726, %v1725
        %v1737 = vpack.c.b16 %v1728, %v1727
        %v1738 = vpack.c.b16 %v1730, %v1729
        %1747 = vmatprep.subr.bf16.mxu0 0
        %1748 = vmatpush1.bf16.msra.mxu0 %v1731
        %1749 = vmatprep.subr.bf16.mxu0 0
        %1750 = vmatpush1.bf16.msra.mxu0 %v1732
        %1751 = vmatprep.subr.bf16.mxu0 0
        %1752 = vmatpush1.bf16.msra.mxu0 %v1733
        %1753 = vmatprep.subr.bf16.mxu0 0
        %1754 = vmatpush1.bf16.msra.mxu0 %v1734
        %1755 = vmatprep.subr.bf16.mxu0 0
        %1756 = vmatpush1.bf16.msra.mxu0 %v1735
        %1757 = vmatprep.subr.bf16.mxu0 0
        %1758 = vmatpush1.bf16.msra.mxu0 %v1736
        %1759 = vmatprep.subr.bf16.mxu0 0
        %1760 = vmatpush1.bf16.msra.mxu0 %v1737
        %1761 = vmatprep.subr.bf16.mxu0 0
        %1762 = vmatpush1.bf16.msra.mxu0 %v1738
        %1763 = vmatprep.subr.bf16.mxu0 0
        %1764 = vmatpush1.bf16.msra.mxu0 0
        %1765 = vmatprep.subr.bf16.mxu0 0
        %1766 = vmatpush1.bf16.msra.mxu0 0
        %1767 = vmatprep.subr.bf16.mxu0 0
        %1768 = vmatpush1.bf16.msra.mxu0 0
        %1769 = vmatprep.subr.bf16.mxu0 0
        %1770 = vmatpush1.bf16.msra.mxu0 0
        %1771 = vmatprep.subr.bf16.mxu0 0
        %1772 = vmatpush1.bf16.msra.mxu0 0
        %1773 = vmatprep.subr.bf16.mxu0 0
        %1774 = vmatpush1.bf16.msra.mxu0 0
        %1775 = vmatprep.subr.bf16.mxu0 0
        %1776 = vmatpush1.bf16.msra.mxu0 0
        %1777 = vmatprep.subr.bf16.mxu0 0
        %1778 = vmatpush1.bf16.msra.mxu0 0
        %1779 = vmatprep.mubr.bf16.mxu0 0
        %1780 = vmatmul.mubr.bf16.gmra.mrb[0].mxu0 %v1680
        %v1781 = vpop.f32.mrb[0].mxu0
        %v1782 = vadd.f32 %v1698, %v1781
        %v1783 = vpop.f32.mrb[0].mxu0
        %v1784 = vpop.f32.mrb[0].mxu0
        %v1785 = vpop.f32.mrb[0].mxu0
        %1786 = vdwg.mxu0
        %v1787 = vmax.f32 %v1782, 0.0
        %1788 = vst [vmem:[%s220] sm:$0x1] %v1787
        %s1789 = sand.u32 %s117, 1
        %s1790 = scalar_lea.sflag [#allocation5], %s1789
        %s1791 = sand.u32 %s117, 1
        %s1792 = scalar_lea.vmem [#allocation8], %s1791
        // Predicated region
        $region45: #{tpu_custom_call.1} parent=35 // pred_check
          %p1793 = pneg %p127
        $region46: #{tpu_custom_call.1} parent=35 // pred_check_branch
          %1795 = sbr.rel (%p1793) target = $region48
        $region47: #{tpu_custom_call.1} parent=35 // pred_region
          %s1797 = ssub.s32 16, 16
          %1798 = vsyncadd %s1790, %s1797
          %s1799 = smul.addr %s20, 16
          %s1800 = scalar_lea.hbm %s4, %s1799
          %s1802 = sshll.u32 %s1792, 4
          %s1803 = int_to_ptr.vmem [resolvable:$true] %s1802
          %1805 = dma.vmem_to_hbm [thread:$0]  %s1803, 16, %s1800, %s1790
        $region48: #{tpu_custom_call.1} parent=35 // pred_fallthru
          _
      $region36: #{tpu_custom_call.1} parent=5 // pred_fallthru
        _
      %p1806 = scmp.le.s32.totalorder 2, %s15
      // Predicated region
      $region49: #{tpu_custom_call.1} parent=5 // pred_check
        %p1807 = pneg %p1806
      $region50: #{tpu_custom_call.1} parent=5 // pred_check_branch
        %1809 = sbr.rel (%p1807) target = $region52
      $region51: #{tpu_custom_call.1} parent=5 // pred_region
        %s1810 = ssub.s32 %s15, 2
        // Predicated region
        $region53: #{tpu_custom_call.1} parent=51 // pred_check
          %p1811 = pneg %p133
        $region54: #{tpu_custom_call.1} parent=51 // pred_check_branch
          %1813 = sbr.rel (%p1811) target = $region56
        $region55: #{tpu_custom_call.1} parent=51 // pred_region
          %s1814 = sand.u32 %s118, 1
          %s1815 = scalar_lea.sflag [#allocation5], %s1814
          %s1816 = sand.u32 %s118, 1
          %s1817 = scalar_lea.vmem [#allocation8], %s1816
          %1818 = dma.done %s1815, 16
        $region56: #{tpu_custom_call.1} parent=51 // pred_fallthru
          _
      $region52: #{tpu_custom_call.1} parent=5 // pred_fallthru
        _
    $region6: #{tpu_custom_call.1} parent=1 // loop_footer
      %s19 = sadd.s32 1, %s15
    $region7: #{tpu_custom_call.1} parent=1 // loop_footer_branch
      %14 = sbr.rel target = $region3
    $region8: #{tpu_custom_call.1} parent=1 // loop_exit
      _
    %1819 = vsyncpa [#allocation4], 1
    %s1820 = scalar_lea.sflag [#allocation4], 1
    %1821 = vsyncpa %s1820, 1
    %1822 = vsyncpa [#allocation7], 1
    %1823 = vsyncpa [#allocation5], 1
    %s1824 = scalar_lea.sflag [#allocation5], 1
    %1825 = vsyncpa %s1824, 1

</llo_original>
